<compile_context>
chip_gen: v7x
topology: tpu7x:2x2x1
jax: 0.10.0
libtpu: 0.0.40
codegen_flags: <defaults>
</compile_context>

<pallas_src>
import functools

import jax
import jax.numpy as jnp
import numpy as np
from jax.experimental import pallas as pl
from jax.experimental.pallas import tpu as pltpu


def gru_recurrence_kernel(gi_ref, whh_ref, bhn_ref, hid_ref, h_scr):
    """One grid step == Tt GRU timesteps for one batch chunk.

    gi_ref : (Tt, Bb, 3H) bf16  precomputed x_t @ W_ih + b_ih + [b_hh_r, b_hh_z, 0]
    whh_ref: (H, 3H)      f32   recurrent weight (pre-transposed)
    bhn_ref: (1, H)       f32   n-slice of the recurrent bias (b_hh_n)
    hid_ref: (Bb, H)      f32   final hidden state (written at last time block)
    h_scr  : (Bb, H)      f32   hidden state carried across time grid steps
    """
    t = pl.program_id(1)

    @pl.when(t == 0)
    def _():
        h_scr[...] = jnp.zeros_like(h_scr)

    H = h_scr.shape[-1]
    Tt = gi_ref.shape[0]

    def step(i, h):
        gi = gi_ref[i].astype(jnp.float32)                    # (Bb, 3H) f32
        # Recurrent gate preactivations: f32 MXU matmul, f32 accumulate.
        # (Read whh_ref directly -- no value hoist across the unrolled loop.)
        gh = jnp.dot(h, whh_ref[...], preferred_element_type=jnp.float32)
        # PyTorch GRU gate order: r, z, n.  r/z biases already folded into gi.
        r = jax.nn.sigmoid(gi[:, :H] + gh[:, :H])
        z = jax.nn.sigmoid(gi[:, H:2 * H] + gh[:, H:2 * H])
        n = jnp.tanh(gi[:, 2 * H:] + r * (gh[:, 2 * H:] + bhn_ref[...]))
        return (1.0 - z) * n + z * h

    h_new = jax.lax.fori_loop(0, Tt, step, h_scr[...], unroll=True)
    h_scr[...] = h_new

    @pl.when(t == pl.num_programs(1) - 1)
    def _():
        # torch: hidden = mean(h_n.transpose(0,1), dim=1) over size-1 layer axis == h_n
        hid_ref[...] = h_new


@functools.partial(jax.jit, static_argnames=("time_block", "batch_block"))
def stacked_gru_forward(x_tokens, embedding, w_ih, w_hh, b_ih, b_hh, fc_w, fc_b,
                        *, time_block=16, batch_block=None):
    """Forward pass of StackedGRU.

    x_tokens: (B, T) int32, weights pre-transposed for right-matmul:
      w_ih, w_hh: (H, 3H); b_ih, b_hh: (1, 3H); fc_w: (H, n_tags); fc_b: (1, n_tags)
    """
    B, T = x_tokens.shape
    H = embedding.shape[1]

    # 1) Embedding lookup, TIME-MAJOR (pure gather -> plain JAX glue).  Doing the
    #    gather time-major means the gi einsum below writes (T, B, 3H) directly
    #    with no full-tensor relayout; transposing the int32 token matrix is free.
    x_emb_tm = embedding[x_tokens.T]                              # (T, B, H) f32

    # 2) Hoisted input-side gate matmul for ALL timesteps (one big MXU matmul,
    #    M = T*B), with b_ih and the r/z slices of b_hh folded in.  Streamed to
    #    the kernel in bf16 (halves HBM + VMEM traffic); no dot touches it again.
    gate_bias = b_ih + jnp.pad(b_hh[:, :2 * H], ((0, 0), (0, H)))  # (1, 3H) f32
    gi_all = (jnp.einsum("tbh,hg->tbg", x_emb_tm, w_ih,
                         preferred_element_type=jnp.float32)
              + gate_bias).astype(jnp.bfloat16)                   # (T, B, 3H) bf16

    Bb = B if batch_block is None else min(batch_block, B)
    Tt = min(time_block, T)
    assert T % Tt == 0, "time_block must divide T"
    # bf16 gi tile (Bb, 3H) needs Bb % 16 == 0 (bf16 (16,128) tiling) or Bb == B.
    assert B % Bb == 0 and (Bb % 16 == 0 or Bb == B), \
        "batch_block must divide B and be a multiple of 16 (or equal B)"

    b_hh_n = b_hh[:, 2 * H:]                                      # (1, H) f32

    # NOTE(vmem): double-buffered bf16 gi tile = 2*Tt*Bb*3H*2 bytes; at H=512,
    # Bb=128, Tt=32 that is ~25 MiB and fits v7x's 64 MiB VMEM.  Raise
    # vmem_limit_bytes in CompilerParams if you push Tt/Bb further.  W_hh/b_hh
    # blocks are grid-invariant; their double buffers (~1.5 MiB at H=512, f32)
    # could be reclaimed with pipeline_mode=pl.Buffered(1) if VMEM gets tight.
    grid_spec = pltpu.PrefetchScalarGridSpec(
        num_scalar_prefetch=0,
        grid=(B // Bb, T // Tt),
        in_specs=[
            pl.BlockSpec((Tt, Bb, 3 * H), lambda b, t: (t, b, 0)),  # gi tile (bf16)
            pl.BlockSpec((H, 3 * H), lambda b, t: (0, 0)),          # W_hh^T (f32)
            pl.BlockSpec((1, H), lambda b, t: (0, 0)),              # b_hh_n
        ],
        out_specs=pl.BlockSpec((Bb, H), lambda b, t: (b, 0)),       # hidden
        scratch_shapes=[pltpu.VMEM((Bb, H), jnp.float32)],
    )

    hidden = pl.pallas_call(
        gru_recurrence_kernel,
        out_shape=jax.ShapeDtypeStruct((B, H), jnp.float32),
        grid_spec=grid_spec,
        compiler_params=pltpu.CompilerParams(
            # batch chunks are independent (set batch_block=B//2 on v7x to use
            # both TensorCores); time is the serial reduction axis.
            dimension_semantics=("parallel", "arbitrary")),
    )(gi_all, w_hh, b_hh_n)

    # 3) Tiny (B, n_tags) projection: lane-sparse output, leave to XLA.
    out = hidden @ fc_w + fc_b
    return hidden, out


def reference_forward(x_emb_bth, w_ih, w_hh, b_ih, b_hh, fc_w, fc_b):
    """Pure-JAX f32 reference matching torch.nn.GRU (batch_first) semantics."""
    B, T, H = x_emb_bth.shape
    h = jnp.zeros((B, H), jnp.float32)
    for t in range(T):
        x_t = x_emb_bth[:, t, :]
        gi = x_t @ w_ih + b_ih
        gh = h @ w_hh + b_hh
        i_r, i_z, i_n = gi[:, :H], gi[:, H:2 * H], gi[:, 2 * H:]
        h_r, h_z, h_n = gh[:, :H], gh[:, H:2 * H], gh[:, 2 * H:]
        r = jax.nn.sigmoid(i_r + h_r)
        z = jax.nn.sigmoid(i_z + h_z)
        n = jnp.tanh(i_n + r * h_n)
        h = (1.0 - z) * n + z * h
    return h, h @ fc_w + fc_b


if __name__ == "__main__":
    # Small, TPU-friendly shapes consistent with the module's forward.
    B, T = 16, 32          # batch, sequence length (exercises both grid axes)
    H = 128                # hidden_dim (512 in the original module; shrunk for demo)
    n_tags = 16
    len_word = 100

    key = jax.random.PRNGKey(0)
    k_emb, k_wih, k_whh, k_bih, k_bhh, k_fcw, k_fcb, k_x = jax.random.split(key, 8)
    s = 1.0 / np.sqrt(H)

    # Parameters (deterministic init, PyTorch-style uniform(-1/sqrt(H), 1/sqrt(H)))
    embedding = jax.random.normal(k_emb, (len_word, H), jnp.float32)
    w_ih = jax.random.uniform(k_wih, (H, 3 * H), jnp.float32, -s, s)   # weight_ih_l0.T
    w_hh = jax.random.uniform(k_whh, (H, 3 * H), jnp.float32, -s, s)   # weight_hh_l0.T
    b_ih = jax.random.uniform(k_bih, (1, 3 * H), jnp.float32, -s, s)
    b_hh = jax.random.uniform(k_bhh, (1, 3 * H), jnp.float32, -s, s)
    fc_w = jax.random.uniform(k_fcw, (H, n_tags), jnp.float32, -s, s)  # fc.weight.T
    fc_b = jax.random.uniform(k_fcb, (1, n_tags), jnp.float32, -s, s)

    # Input token ids: (B, T) int32
    x_tokens = jax.random.randint(k_x, (B, T), 0, len_word, jnp.int32)

    hidden, out = stacked_gru_forward(x_tokens, embedding, w_ih, w_hh, b_ih, b_hh,
                                      fc_w, fc_b, time_block=16, batch_block=None)
    hidden, out = jax.block_until_ready((hidden, out))

    hidden_ref, out_ref = reference_forward(embedding[x_tokens], w_ih, w_hh,
                                            b_ih, b_hh, fc_w, fc_b)
    # gi is streamed in bf16 (matmuls are f32), so compare against the pure-f32
    # reference with a bf16-appropriate tolerance.
    np.testing.assert_allclose(np.asarray(hidden), np.asarray(hidden_ref),
                               rtol=2e-2, atol=2e-2)
    np.testing.assert_allclose(np.asarray(out), np.asarray(out_ref),
                               rtol=2e-2, atol=2e-2)

    assert hidden.shape == (B, H) and out.shape == (B, n_tags)
    print("KERNEL_OK")
</pallas_src>

<mosaic_0001>
module attributes {stable_mosaic.version = 11 : i64} {
  func.func @gru_recurrence_kernel(%arg0: i32, %arg1: i32, %arg2: memref<16x16x384xbf16, #tpu.memory_space<vmem>>, %arg3: memref<128x384xf32, #tpu.memory_space<vmem>>, %arg4: memref<1x128xf32, #tpu.memory_space<vmem>>, %arg5: memref<16x128xf32, #tpu.memory_space<vmem>>, %arg6: memref<16x128xf32, #tpu.memory_space<vmem>>) attributes {dimension_semantics = [#tpu.dimension_semantics<parallel>, #tpu.dimension_semantics<arbitrary>], iteration_bounds = array<i64: 1, 2>, scalar_prefetch = 0 : i64, scratch_operands = 1 : i64, tpu.core_type = #tpu.core_type<tc>, window_params = [{transform_indices = @transform_0, window_bounds = array<i64: 16, 16, 384>}, {pipeline_mode = #tpu.pipeline_mode<synchronous>, transform_indices = @transform_1, window_bounds = array<i64: 128, 384>}, {pipeline_mode = #tpu.pipeline_mode<synchronous>, transform_indices = @transform_2, window_bounds = array<i64: 1, 128>}, {transform_indices = @transform_3, window_bounds = array<i64: 16, 128>}]} {
    %c0_i32 = arith.constant 0 : i32
    %0 = arith.cmpi eq, %arg1, %c0_i32 : i32
    %1 = arith.extui %0 : i1 to i32
    %c0_i32_0 = arith.constant 0 : i32
    %2 = arith.cmpi ne, %1, %c0_i32_0 : i32
    scf.if %2 {
      %cst_166 = arith.constant 0.000000e+00 : f32
      %568 = vector.broadcast %cst_166 : f32 to vector<16x128xf32>
      %c0_167 = arith.constant 0 : index
      %c0_168 = arith.constant 0 : index
      %569 = vector.load %arg6[%c0_167, %c0_168] : memref<16x128xf32, #tpu.memory_space<vmem>>, vector<16x128xf32>
      tpu.vector_store %arg6[%c0_167, %c0_168], %568 {strides = array<i32>} : memref<16x128xf32, #tpu.memory_space<vmem>>, vector<16x128xf32>,
    } else {
    }
    %c0 = arith.constant 0 : index
    %c0_1 = arith.constant 0 : index
    %3 = vector.load %arg6[%c0, %c0_1] : memref<16x128xf32, #tpu.memory_space<vmem>>, vector<16x128xf32>
    %c0_i32_2 = arith.constant 0 : i32
    %4 = arith.index_cast %c0_i32_2 : i32 to index
    %c0_3 = arith.constant 0 : index
    %c0_4 = arith.constant 0 : index
    %5 = vector.load %arg2[%4, %c0_3, %c0_4] : memref<16x16x384xbf16, #tpu.memory_space<vmem>>, vector<1x16x384xbf16>
    %6 = vector.shape_cast %5 : vector<1x16x384xbf16> to vector<16x384xbf16>
    %7 = arith.extf %6 : vector<16x384xbf16> to vector<16x384xf32>
    %c0_5 = arith.constant 0 : index
    %c0_6 = arith.constant 0 : index
    %8 = vector.load %arg3[%c0_5, %c0_6] : memref<128x384xf32, #tpu.memory_space<vmem>>, vector<128x384xf32>
    %cst = arith.constant dense<0.000000e+00> : vector<16x384xf32>
    %9 = tpu.matmul %3, %8, %cst {dimension_numbers = #tpu.dot_dimension_numbers<[1], [0], [0], [1], [0, 0, 1, 1], [], []>} : vector<16x128xf32>, vector<128x384xf32>, vector<16x384xf32> -> vector<16x384xf32>
    %10 = vector.extract_strided_slice %7 {offsets = [0, 0], sizes = [16, 128], strides = [1, 1]} : vector<16x384xf32> to vector<16x128xf32>
    %11 = vector.extract_strided_slice %9 {offsets = [0, 0], sizes = [16, 128], strides = [1, 1]} : vector<16x384xf32> to vector<16x128xf32>
    %12 = arith.addf %10, %11 : vector<16x128xf32>
    %13 = arith.negf %12 : vector<16x128xf32>
    %14 = math.exp %13 : vector<16x128xf32>
    %cst_7 = arith.constant 1.000000e+00 : f32
    %15 = vector.broadcast %cst_7 : f32 to vector<16x128xf32>
    %16 = arith.addf %15, %14 : vector<16x128xf32>
    %17 = arith.divf %15, %16 : vector<16x128xf32>
    %18 = vector.extract_strided_slice %7 {offsets = [0, 128], sizes = [16, 128], strides = [1, 1]} : vector<16x384xf32> to vector<16x128xf32>
    %19 = vector.extract_strided_slice %9 {offsets = [0, 128], sizes = [16, 128], strides = [1, 1]} : vector<16x384xf32> to vector<16x128xf32>
    %20 = arith.addf %18, %19 : vector<16x128xf32>
    %21 = arith.negf %20 : vector<16x128xf32>
    %22 = math.exp %21 : vector<16x128xf32>
    %cst_8 = arith.constant 1.000000e+00 : f32
    %23 = vector.broadcast %cst_8 : f32 to vector<16x128xf32>
    %24 = arith.addf %23, %22 : vector<16x128xf32>
    %25 = arith.divf %23, %24 : vector<16x128xf32>
    %26 = vector.extract_strided_slice %7 {offsets = [0, 256], sizes = [16, 128], strides = [1, 1]} : vector<16x384xf32> to vector<16x128xf32>
    %27 = vector.extract_strided_slice %9 {offsets = [0, 256], sizes = [16, 128], strides = [1, 1]} : vector<16x384xf32> to vector<16x128xf32>
    %c0_9 = arith.constant 0 : index
    %c0_10 = arith.constant 0 : index
    %28 = vector.load %arg4[%c0_9, %c0_10] : memref<1x128xf32, #tpu.memory_space<vmem>>, vector<1x128xf32>
    %29 = vector.broadcast %28 : vector<1x128xf32> to vector<16x128xf32>
    %30 = arith.addf %27, %29 : vector<16x128xf32>
    %31 = arith.mulf %17, %30 : vector<16x128xf32>
    %32 = arith.addf %26, %31 : vector<16x128xf32>
    %33 = math.tanh %32 : vector<16x128xf32>
    %cst_11 = arith.constant 1.000000e+00 : f32
    %34 = vector.broadcast %cst_11 : f32 to vector<16x128xf32>
    %35 = arith.subf %34, %25 : vector<16x128xf32>
    %36 = arith.mulf %35, %33 : vector<16x128xf32>
    %37 = arith.mulf %25, %3 : vector<16x128xf32>
    %38 = arith.addf %36, %37 : vector<16x128xf32>
    %c1_i32 = arith.constant 1 : i32
    %39 = arith.index_cast %c1_i32 : i32 to index
    %c0_12 = arith.constant 0 : index
    %c0_13 = arith.constant 0 : index
    %40 = vector.load %arg2[%39, %c0_12, %c0_13] : memref<16x16x384xbf16, #tpu.memory_space<vmem>>, vector<1x16x384xbf16>
    %41 = vector.shape_cast %40 : vector<1x16x384xbf16> to vector<16x384xbf16>
    %42 = arith.extf %41 : vector<16x384xbf16> to vector<16x384xf32>
    %c0_14 = arith.constant 0 : index
    %c0_15 = arith.constant 0 : index
    %43 = vector.load %arg3[%c0_14, %c0_15] : memref<128x384xf32, #tpu.memory_space<vmem>>, vector<128x384xf32>
    %cst_16 = arith.constant dense<0.000000e+00> : vector<16x384xf32>
    %44 = tpu.matmul %38, %43, %cst_16 {dimension_numbers = #tpu.dot_dimension_numbers<[1], [0], [0], [1], [0, 0, 1, 1], [], []>} : vector<16x128xf32>, vector<128x384xf32>, vector<16x384xf32> -> vector<16x384xf32>
    %45 = vector.extract_strided_slice %42 {offsets = [0, 0], sizes = [16, 128], strides = [1, 1]} : vector<16x384xf32> to vector<16x128xf32>
    %46 = vector.extract_strided_slice %44 {offsets = [0, 0], sizes = [16, 128], strides = [1, 1]} : vector<16x384xf32> to vector<16x128xf32>
    %47 = arith.addf %45, %46 : vector<16x128xf32>
    %48 = arith.negf %47 : vector<16x128xf32>
    %49 = math.exp %48 : vector<16x128xf32>
    %cst_17 = arith.constant 1.000000e+00 : f32
    %50 = vector.broadcast %cst_17 : f32 to vector<16x128xf32>
    %51 = arith.addf %50, %49 : vector<16x128xf32>
    %52 = arith.divf %50, %51 : vector<16x128xf32>
    %53 = vector.extract_strided_slice %42 {offsets = [0, 128], sizes = [16, 128], strides = [1, 1]} : vector<16x384xf32> to vector<16x128xf32>
    %54 = vector.extract_strided_slice %44 {offsets = [0, 128], sizes = [16, 128], strides = [1, 1]} : vector<16x384xf32> to vector<16x128xf32>
    %55 = arith.addf %53, %54 : vector<16x128xf32>
    %56 = arith.negf %55 : vector<16x128xf32>
    %57 = math.exp %56 : vector<16x128xf32>
    %cst_18 = arith.constant 1.000000e+00 : f32
    %58 = vector.broadcast %cst_18 : f32 to vector<16x128xf32>
    %59 = arith.addf %58, %57 : vector<16x128xf32>
    %60 = arith.divf %58, %59 : vector<16x128xf32>
    %61 = vector.extract_strided_slice %42 {offsets = [0, 256], sizes = [16, 128], strides = [1, 1]} : vector<16x384xf32> to vector<16x128xf32>
    %62 = vector.extract_strided_slice %44 {offsets = [0, 256], sizes = [16, 128], strides = [1, 1]} : vector<16x384xf32> to vector<16x128xf32>
    %c0_19 = arith.constant 0 : index
    %c0_20 = arith.constant 0 : index
    %63 = vector.load %arg4[%c0_19, %c0_20] : memref<1x128xf32, #tpu.memory_space<vmem>>, vector<1x128xf32>
    %64 = vector.broadcast %63 : vector<1x128xf32> to vector<16x128xf32>
    %65 = arith.addf %62, %64 : vector<16x128xf32>
    %66 = arith.mulf %52, %65 : vector<16x128xf32>
    %67 = arith.addf %61, %66 : vector<16x128xf32>
    %68 = math.tanh %67 : vector<16x128xf32>
    %cst_21 = arith.constant 1.000000e+00 : f32
    %69 = vector.broadcast %cst_21 : f32 to vector<16x128xf32>
    %70 = arith.subf %69, %60 : vector<16x128xf32>
    %71 = arith.mulf %70, %68 : vector<16x128xf32>
    %72 = arith.mulf %60, %38 : vector<16x128xf32>
    %73 = arith.addf %71, %72 : vector<16x128xf32>
    %c2_i32 = arith.constant 2 : i32
    %74 = arith.index_cast %c2_i32 : i32 to index
    %c0_22 = arith.constant 0 : index
    %c0_23 = arith.constant 0 : index
    %75 = vector.load %arg2[%74, %c0_22, %c0_23] : memref<16x16x384xbf16, #tpu.memory_space<vmem>>, vector<1x16x384xbf16>
    %76 = vector.shape_cast %75 : vector<1x16x384xbf16> to vector<16x384xbf16>
    %77 = arith.extf %76 : vector<16x384xbf16> to vector<16x384xf32>
    %c0_24 = arith.constant 0 : index
    %c0_25 = arith.constant 0 : index
    %78 = vector.load %arg3[%c0_24, %c0_25] : memref<128x384xf32, #tpu.memory_space<vmem>>, vector<128x384xf32>
    %cst_26 = arith.constant dense<0.000000e+00> : vector<16x384xf32>
    %79 = tpu.matmul %73, %78, %cst_26 {dimension_numbers = #tpu.dot_dimension_numbers<[1], [0], [0], [1], [0, 0, 1, 1], [], []>} : vector<16x128xf32>, vector<128x384xf32>, vector<16x384xf32> -> vector<16x384xf32>
    %80 = vector.extract_strided_slice %77 {offsets = [0, 0], sizes = [16, 128], strides = [1, 1]} : vector<16x384xf32> to vector<16x128xf32>
    %81 = vector.extract_strided_slice %79 {offsets = [0, 0], sizes = [16, 128], strides = [1, 1]} : vector<16x384xf32> to vector<16x128xf32>
    %82 = arith.addf %80, %81 : vector<16x128xf32>
    %83 = arith.negf %82 : vector<16x128xf32>
    %84 = math.exp %83 : vector<16x128xf32>
    %cst_27 = arith.constant 1.000000e+00 : f32
    %85 = vector.broadcast %cst_27 : f32 to vector<16x128xf32>
    %86 = arith.addf %85, %84 : vector<16x128xf32>
    %87 = arith.divf %85, %86 : vector<16x128xf32>
    %88 = vector.extract_strided_slice %77 {offsets = [0, 128], sizes = [16, 128], strides = [1, 1]} : vector<16x384xf32> to vector<16x128xf32>
    %89 = vector.extract_strided_slice %79 {offsets = [0, 128], sizes = [16, 128], strides = [1, 1]} : vector<16x384xf32> to vector<16x128xf32>
    %90 = arith.addf %88, %89 : vector<16x128xf32>
    %91 = arith.negf %90 : vector<16x128xf32>
    %92 = math.exp %91 : vector<16x128xf32>
    %cst_28 = arith.constant 1.000000e+00 : f32
    %93 = vector.broadcast %cst_28 : f32 to vector<16x128xf32>
    %94 = arith.addf %93, %92 : vector<16x128xf32>
    %95 = arith.divf %93, %94 : vector<16x128xf32>
    %96 = vector.extract_strided_slice %77 {offsets = [0, 256], sizes = [16, 128], strides = [1, 1]} : vector<16x384xf32> to vector<16x128xf32>
    %97 = vector.extract_strided_slice %79 {offsets = [0, 256], sizes = [16, 128], strides = [1, 1]} : vector<16x384xf32> to vector<16x128xf32>
    %c0_29 = arith.constant 0 : index
    %c0_30 = arith.constant 0 : index
    %98 = vector.load %arg4[%c0_29, %c0_30] : memref<1x128xf32, #tpu.memory_space<vmem>>, vector<1x128xf32>
    %99 = vector.broadcast %98 : vector<1x128xf32> to vector<16x128xf32>
    %100 = arith.addf %97, %99 : vector<16x128xf32>
    %101 = arith.mulf %87, %100 : vector<16x128xf32>
    %102 = arith.addf %96, %101 : vector<16x128xf32>
    %103 = math.tanh %102 : vector<16x128xf32>
    %cst_31 = arith.constant 1.000000e+00 : f32
    %104 = vector.broadcast %cst_31 : f32 to vector<16x128xf32>
    %105 = arith.subf %104, %95 : vector<16x128xf32>
    %106 = arith.mulf %105, %103 : vector<16x128xf32>
    %107 = arith.mulf %95, %73 : vector<16x128xf32>
    %108 = arith.addf %106, %107 : vector<16x128xf32>
    %c3_i32 = arith.constant 3 : i32
    %109 = arith.index_cast %c3_i32 : i32 to index
    %c0_32 = arith.constant 0 : index
    %c0_33 = arith.constant 0 : index
    %110 = vector.load %arg2[%109, %c0_32, %c0_33] : memref<16x16x384xbf16, #tpu.memory_space<vmem>>, vector<1x16x384xbf16>
    %111 = vector.shape_cast %110 : vector<1x16x384xbf16> to vector<16x384xbf16>
    %112 = arith.extf %111 : vector<16x384xbf16> to vector<16x384xf32>
    %c0_34 = arith.constant 0 : index
    %c0_35 = arith.constant 0 : index
    %113 = vector.load %arg3[%c0_34, %c0_35] : memref<128x384xf32, #tpu.memory_space<vmem>>, vector<128x384xf32>
    %cst_36 = arith.constant dense<0.000000e+00> : vector<16x384xf32>
    %114 = tpu.matmul %108, %113, %cst_36 {dimension_numbers = #tpu.dot_dimension_numbers<[1], [0], [0], [1], [0, 0, 1, 1], [], []>} : vector<16x128xf32>, vector<128x384xf32>, vector<16x384xf32> -> vector<16x384xf32>
    %115 = vector.extract_strided_slice %112 {offsets = [0, 0], sizes = [16, 128], strides = [1, 1]} : vector<16x384xf32> to vector<16x128xf32>
    %116 = vector.extract_strided_slice %114 {offsets = [0, 0], sizes = [16, 128], strides = [1, 1]} : vector<16x384xf32> to vector<16x128xf32>
    %117 = arith.addf %115, %116 : vector<16x128xf32>
    %118 = arith.negf %117 : vector<16x128xf32>
    %119 = math.exp %118 : vector<16x128xf32>
    %cst_37 = arith.constant 1.000000e+00 : f32
    %120 = vector.broadcast %cst_37 : f32 to vector<16x128xf32>
    %121 = arith.addf %120, %119 : vector<16x128xf32>
    %122 = arith.divf %120, %121 : vector<16x128xf32>
    %123 = vector.extract_strided_slice %112 {offsets = [0, 128], sizes = [16, 128], strides = [1, 1]} : vector<16x384xf32> to vector<16x128xf32>
    %124 = vector.extract_strided_slice %114 {offsets = [0, 128], sizes = [16, 128], strides = [1, 1]} : vector<16x384xf32> to vector<16x128xf32>
    %125 = arith.addf %123, %124 : vector<16x128xf32>
    %126 = arith.negf %125 : vector<16x128xf32>
    %127 = math.exp %126 : vector<16x128xf32>
    %cst_38 = arith.constant 1.000000e+00 : f32
    %128 = vector.broadcast %cst_38 : f32 to vector<16x128xf32>
    %129 = arith.addf %128, %127 : vector<16x128xf32>
    %130 = arith.divf %128, %129 : vector<16x128xf32>
    %131 = vector.extract_strided_slice %112 {offsets = [0, 256], sizes = [16, 128], strides = [1, 1]} : vector<16x384xf32> to vector<16x128xf32>
    %132 = vector.extract_strided_slice %114 {offsets = [0, 256], sizes = [16, 128], strides = [1, 1]} : vector<16x384xf32> to vector<16x128xf32>
    %c0_39 = arith.constant 0 : index
    %c0_40 = arith.constant 0 : index
    %133 = vector.load %arg4[%c0_39, %c0_40] : memref<1x128xf32, #tpu.memory_space<vmem>>, vector<1x128xf32>
    %134 = vector.broadcast %133 : vector<1x128xf32> to vector<16x128xf32>
    %135 = arith.addf %132, %134 : vector<16x128xf32>
    %136 = arith.mulf %122, %135 : vector<16x128xf32>
    %137 = arith.addf %131, %136 : vector<16x128xf32>
    %138 = math.tanh %137 : vector<16x128xf32>
    %cst_41 = arith.constant 1.000000e+00 : f32
    %139 = vector.broadcast %cst_41 : f32 to vector<16x128xf32>
    %140 = arith.subf %139, %130 : vector<16x128xf32>
    %141 = arith.mulf %140, %138 : vector<16x128xf32>
    %142 = arith.mulf %130, %108 : vector<16x128xf32>
    %143 = arith.addf %141, %142 : vector<16x128xf32>
    %c4_i32 = arith.constant 4 : i32
    %144 = arith.index_cast %c4_i32 : i32 to index
    %c0_42 = arith.constant 0 : index
    %c0_43 = arith.constant 0 : index
    %145 = vector.load %arg2[%144, %c0_42, %c0_43] : memref<16x16x384xbf16, #tpu.memory_space<vmem>>, vector<1x16x384xbf16>
    %146 = vector.shape_cast %145 : vector<1x16x384xbf16> to vector<16x384xbf16>
    %147 = arith.extf %146 : vector<16x384xbf16> to vector<16x384xf32>
    %c0_44 = arith.constant 0 : index
    %c0_45 = arith.constant 0 : index
    %148 = vector.load %arg3[%c0_44, %c0_45] : memref<128x384xf32, #tpu.memory_space<vmem>>, vector<128x384xf32>
    %cst_46 = arith.constant dense<0.000000e+00> : vector<16x384xf32>
    %149 = tpu.matmul %143, %148, %cst_46 {dimension_numbers = #tpu.dot_dimension_numbers<[1], [0], [0], [1], [0, 0, 1, 1], [], []>} : vector<16x128xf32>, vector<128x384xf32>, vector<16x384xf32> -> vector<16x384xf32>
    %150 = vector.extract_strided_slice %147 {offsets = [0, 0], sizes = [16, 128], strides = [1, 1]} : vector<16x384xf32> to vector<16x128xf32>
    %151 = vector.extract_strided_slice %149 {offsets = [0, 0], sizes = [16, 128], strides = [1, 1]} : vector<16x384xf32> to vector<16x128xf32>
    %152 = arith.addf %150, %151 : vector<16x128xf32>
    %153 = arith.negf %152 : vector<16x128xf32>
    %154 = math.exp %153 : vector<16x128xf32>
    %cst_47 = arith.constant 1.000000e+00 : f32
    %155 = vector.broadcast %cst_47 : f32 to vector<16x128xf32>
    %156 = arith.addf %155, %154 : vector<16x128xf32>
    %157 = arith.divf %155, %156 : vector<16x128xf32>
    %158 = vector.extract_strided_slice %147 {offsets = [0, 128], sizes = [16, 128], strides = [1, 1]} : vector<16x384xf32> to vector<16x128xf32>
    %159 = vector.extract_strided_slice %149 {offsets = [0, 128], sizes = [16, 128], strides = [1, 1]} : vector<16x384xf32> to vector<16x128xf32>
    %160 = arith.addf %158, %159 : vector<16x128xf32>
    %161 = arith.negf %160 : vector<16x128xf32>
    %162 = math.exp %161 : vector<16x128xf32>
    %cst_48 = arith.constant 1.000000e+00 : f32
    %163 = vector.broadcast %cst_48 : f32 to vector<16x128xf32>
    %164 = arith.addf %163, %162 : vector<16x128xf32>
    %165 = arith.divf %163, %164 : vector<16x128xf32>
    %166 = vector.extract_strided_slice %147 {offsets = [0, 256], sizes = [16, 128], strides = [1, 1]} : vector<16x384xf32> to vector<16x128xf32>
    %167 = vector.extract_strided_slice %149 {offsets = [0, 256], sizes = [16, 128], strides = [1, 1]} : vector<16x384xf32> to vector<16x128xf32>
    %c0_49 = arith.constant 0 : index
    %c0_50 = arith.constant 0 : index
    %168 = vector.load %arg4[%c0_49, %c0_50] : memref<1x128xf32, #tpu.memory_space<vmem>>, vector<1x128xf32>
    %169 = vector.broadcast %168 : vector<1x128xf32> to vector<16x128xf32>
    %170 = arith.addf %167, %169 : vector<16x128xf32>
    %171 = arith.mulf %157, %170 : vector<16x128xf32>
    %172 = arith.addf %166, %171 : vector<16x128xf32>
    %173 = math.tanh %172 : vector<16x128xf32>
    %cst_51 = arith.constant 1.000000e+00 : f32
    %174 = vector.broadcast %cst_51 : f32 to vector<16x128xf32>
    %175 = arith.subf %174, %165 : vector<16x128xf32>
    %176 = arith.mulf %175, %173 : vector<16x128xf32>
    %177 = arith.mulf %165, %143 : vector<16x128xf32>
    %178 = arith.addf %176, %177 : vector<16x128xf32>
    %c5_i32 = arith.constant 5 : i32
    %179 = arith.index_cast %c5_i32 : i32 to index
    %c0_52 = arith.constant 0 : index
    %c0_53 = arith.constant 0 : index
    %180 = vector.load %arg2[%179, %c0_52, %c0_53] : memref<16x16x384xbf16, #tpu.memory_space<vmem>>, vector<1x16x384xbf16>
    %181 = vector.shape_cast %180 : vector<1x16x384xbf16> to vector<16x384xbf16>
    %182 = arith.extf %181 : vector<16x384xbf16> to vector<16x384xf32>
    %c0_54 = arith.constant 0 : index
    %c0_55 = arith.constant 0 : index
    %183 = vector.load %arg3[%c0_54, %c0_55] : memref<128x384xf32, #tpu.memory_space<vmem>>, vector<128x384xf32>
    %cst_56 = arith.constant dense<0.000000e+00> : vector<16x384xf32>
    %184 = tpu.matmul %178, %183, %cst_56 {dimension_numbers = #tpu.dot_dimension_numbers<[1], [0], [0], [1], [0, 0, 1, 1], [], []>} : vector<16x128xf32>, vector<128x384xf32>, vector<16x384xf32> -> vector<16x384xf32>
    %185 = vector.extract_strided_slice %182 {offsets = [0, 0], sizes = [16, 128], strides = [1, 1]} : vector<16x384xf32> to vector<16x128xf32>
    %186 = vector.extract_strided_slice %184 {offsets = [0, 0], sizes = [16, 128], strides = [1, 1]} : vector<16x384xf32> to vector<16x128xf32>
    %187 = arith.addf %185, %186 : vector<16x128xf32>
    %188 = arith.negf %187 : vector<16x128xf32>
    %189 = math.exp %188 : vector<16x128xf32>
    %cst_57 = arith.constant 1.000000e+00 : f32
    %190 = vector.broadcast %cst_57 : f32 to vector<16x128xf32>
    %191 = arith.addf %190, %189 : vector<16x128xf32>
    %192 = arith.divf %190, %191 : vector<16x128xf32>
    %193 = vector.extract_strided_slice %182 {offsets = [0, 128], sizes = [16, 128], strides = [1, 1]} : vector<16x384xf32> to vector<16x128xf32>
    %194 = vector.extract_strided_slice %184 {offsets = [0, 128], sizes = [16, 128], strides = [1, 1]} : vector<16x384xf32> to vector<16x128xf32>
    %195 = arith.addf %193, %194 : vector<16x128xf32>
    %196 = arith.negf %195 : vector<16x128xf32>
    %197 = math.exp %196 : vector<16x128xf32>
    %cst_58 = arith.constant 1.000000e+00 : f32
    %198 = vector.broadcast %cst_58 : f32 to vector<16x128xf32>
    %199 = arith.addf %198, %197 : vector<16x128xf32>
    %200 = arith.divf %198, %199 : vector<16x128xf32>
    %201 = vector.extract_strided_slice %182 {offsets = [0, 256], sizes = [16, 128], strides = [1, 1]} : vector<16x384xf32> to vector<16x128xf32>
    %202 = vector.extract_strided_slice %184 {offsets = [0, 256], sizes = [16, 128], strides = [1, 1]} : vector<16x384xf32> to vector<16x128xf32>
    %c0_59 = arith.constant 0 : index
    %c0_60 = arith.constant 0 : index
    %203 = vector.load %arg4[%c0_59, %c0_60] : memref<1x128xf32, #tpu.memory_space<vmem>>, vector<1x128xf32>
    %204 = vector.broadcast %203 : vector<1x128xf32> to vector<16x128xf32>
    %205 = arith.addf %202, %204 : vector<16x128xf32>
    %206 = arith.mulf %192, %205 : vector<16x128xf32>
    %207 = arith.addf %201, %206 : vector<16x128xf32>
    %208 = math.tanh %207 : vector<16x128xf32>
    %cst_61 = arith.constant 1.000000e+00 : f32
    %209 = vector.broadcast %cst_61 : f32 to vector<16x128xf32>
    %210 = arith.subf %209, %200 : vector<16x128xf32>
    %211 = arith.mulf %210, %208 : vector<16x128xf32>
    %212 = arith.mulf %200, %178 : vector<16x128xf32>
    %213 = arith.addf %211, %212 : vector<16x128xf32>
    %c6_i32 = arith.constant 6 : i32
    %214 = arith.index_cast %c6_i32 : i32 to index
    %c0_62 = arith.constant 0 : index
    %c0_63 = arith.constant 0 : index
    %215 = vector.load %arg2[%214, %c0_62, %c0_63] : memref<16x16x384xbf16, #tpu.memory_space<vmem>>, vector<1x16x384xbf16>
    %216 = vector.shape_cast %215 : vector<1x16x384xbf16> to vector<16x384xbf16>
    %217 = arith.extf %216 : vector<16x384xbf16> to vector<16x384xf32>
    %c0_64 = arith.constant 0 : index
    %c0_65 = arith.constant 0 : index
    %218 = vector.load %arg3[%c0_64, %c0_65] : memref<128x384xf32, #tpu.memory_space<vmem>>, vector<128x384xf32>
    %cst_66 = arith.constant dense<0.000000e+00> : vector<16x384xf32>
    %219 = tpu.matmul %213, %218, %cst_66 {dimension_numbers = #tpu.dot_dimension_numbers<[1], [0], [0], [1], [0, 0, 1, 1], [], []>} : vector<16x128xf32>, vector<128x384xf32>, vector<16x384xf32> -> vector<16x384xf32>
    %220 = vector.extract_strided_slice %217 {offsets = [0, 0], sizes = [16, 128], strides = [1, 1]} : vector<16x384xf32> to vector<16x128xf32>
    %221 = vector.extract_strided_slice %219 {offsets = [0, 0], sizes = [16, 128], strides = [1, 1]} : vector<16x384xf32> to vector<16x128xf32>
    %222 = arith.addf %220, %221 : vector<16x128xf32>
    %223 = arith.negf %222 : vector<16x128xf32>
    %224 = math.exp %223 : vector<16x128xf32>
    %cst_67 = arith.constant 1.000000e+00 : f32
    %225 = vector.broadcast %cst_67 : f32 to vector<16x128xf32>
    %226 = arith.addf %225, %224 : vector<16x128xf32>
    %227 = arith.divf %225, %226 : vector<16x128xf32>
    %228 = vector.extract_strided_slice %217 {offsets = [0, 128], sizes = [16, 128], strides = [1, 1]} : vector<16x384xf32> to vector<16x128xf32>
    %229 = vector.extract_strided_slice %219 {offsets = [0, 128], sizes = [16, 128], strides = [1, 1]} : vector<16x384xf32> to vector<16x128xf32>
    %230 = arith.addf %228, %229 : vector<16x128xf32>
    %231 = arith.negf %230 : vector<16x128xf32>
    %232 = math.exp %231 : vector<16x128xf32>
    %cst_68 = arith.constant 1.000000e+00 : f32
    %233 = vector.broadcast %cst_68 : f32 to vector<16x128xf32>
    %234 = arith.addf %233, %232 : vector<16x128xf32>
    %235 = arith.divf %233, %234 : vector<16x128xf32>
    %236 = vector.extract_strided_slice %217 {offsets = [0, 256], sizes = [16, 128], strides = [1, 1]} : vector<16x384xf32> to vector<16x128xf32>
    %237 = vector.extract_strided_slice %219 {offsets = [0, 256], sizes = [16, 128], strides = [1, 1]} : vector<16x384xf32> to vector<16x128xf32>
    %c0_69 = arith.constant 0 : index
    %c0_70 = arith.constant 0 : index
    %238 = vector.load %arg4[%c0_69, %c0_70] : memref<1x128xf32, #tpu.memory_space<vmem>>, vector<1x128xf32>
    %239 = vector.broadcast %238 : vector<1x128xf32> to vector<16x128xf32>
    %240 = arith.addf %237, %239 : vector<16x128xf32>
    %241 = arith.mulf %227, %240 : vector<16x128xf32>
    %242 = arith.addf %236, %241 : vector<16x128xf32>
    %243 = math.tanh %242 : vector<16x128xf32>
    %cst_71 = arith.constant 1.000000e+00 : f32
    %244 = vector.broadcast %cst_71 : f32 to vector<16x128xf32>
    %245 = arith.subf %244, %235 : vector<16x128xf32>
    %246 = arith.mulf %245, %243 : vector<16x128xf32>
    %247 = arith.mulf %235, %213 : vector<16x128xf32>
    %248 = arith.addf %246, %247 : vector<16x128xf32>
    %c7_i32 = arith.constant 7 : i32
    %249 = arith.index_cast %c7_i32 : i32 to index
    %c0_72 = arith.constant 0 : index
    %c0_73 = arith.constant 0 : index
    %250 = vector.load %arg2[%249, %c0_72, %c0_73] : memref<16x16x384xbf16, #tpu.memory_space<vmem>>, vector<1x16x384xbf16>
    %251 = vector.shape_cast %250 : vector<1x16x384xbf16> to vector<16x384xbf16>
    %252 = arith.extf %251 : vector<16x384xbf16> to vector<16x384xf32>
    %c0_74 = arith.constant 0 : index
    %c0_75 = arith.constant 0 : index
    %253 = vector.load %arg3[%c0_74, %c0_75] : memref<128x384xf32, #tpu.memory_space<vmem>>, vector<128x384xf32>
    %cst_76 = arith.constant dense<0.000000e+00> : vector<16x384xf32>
    %254 = tpu.matmul %248, %253, %cst_76 {dimension_numbers = #tpu.dot_dimension_numbers<[1], [0], [0], [1], [0, 0, 1, 1], [], []>} : vector<16x128xf32>, vector<128x384xf32>, vector<16x384xf32> -> vector<16x384xf32>
    %255 = vector.extract_strided_slice %252 {offsets = [0, 0], sizes = [16, 128], strides = [1, 1]} : vector<16x384xf32> to vector<16x128xf32>
    %256 = vector.extract_strided_slice %254 {offsets = [0, 0], sizes = [16, 128], strides = [1, 1]} : vector<16x384xf32> to vector<16x128xf32>
    %257 = arith.addf %255, %256 : vector<16x128xf32>
    %258 = arith.negf %257 : vector<16x128xf32>
    %259 = math.exp %258 : vector<16x128xf32>
    %cst_77 = arith.constant 1.000000e+00 : f32
    %260 = vector.broadcast %cst_77 : f32 to vector<16x128xf32>
    %261 = arith.addf %260, %259 : vector<16x128xf32>
    %262 = arith.divf %260, %261 : vector<16x128xf32>
    %263 = vector.extract_strided_slice %252 {offsets = [0, 128], sizes = [16, 128], strides = [1, 1]} : vector<16x384xf32> to vector<16x128xf32>
    %264 = vector.extract_strided_slice %254 {offsets = [0, 128], sizes = [16, 128], strides = [1, 1]} : vector<16x384xf32> to vector<16x128xf32>
    %265 = arith.addf %263, %264 : vector<16x128xf32>
    %266 = arith.negf %265 : vector<16x128xf32>
    %267 = math.exp %266 : vector<16x128xf32>
    %cst_78 = arith.constant 1.000000e+00 : f32
    %268 = vector.broadcast %cst_78 : f32 to vector<16x128xf32>
    %269 = arith.addf %268, %267 : vector<16x128xf32>
    %270 = arith.divf %268, %269 : vector<16x128xf32>
    %271 = vector.extract_strided_slice %252 {offsets = [0, 256], sizes = [16, 128], strides = [1, 1]} : vector<16x384xf32> to vector<16x128xf32>
    %272 = vector.extract_strided_slice %254 {offsets = [0, 256], sizes = [16, 128], strides = [1, 1]} : vector<16x384xf32> to vector<16x128xf32>
    %c0_79 = arith.constant 0 : index
    %c0_80 = arith.constant 0 : index
    %273 = vector.load %arg4[%c0_79, %c0_80] : memref<1x128xf32, #tpu.memory_space<vmem>>, vector<1x128xf32>
    %274 = vector.broadcast %273 : vector<1x128xf32> to vector<16x128xf32>
    %275 = arith.addf %272, %274 : vector<16x128xf32>
    %276 = arith.mulf %262, %275 : vector<16x128xf32>
    %277 = arith.addf %271, %276 : vector<16x128xf32>
    %278 = math.tanh %277 : vector<16x128xf32>
    %cst_81 = arith.constant 1.000000e+00 : f32
    %279 = vector.broadcast %cst_81 : f32 to vector<16x128xf32>
    %280 = arith.subf %279, %270 : vector<16x128xf32>
    %281 = arith.mulf %280, %278 : vector<16x128xf32>
    %282 = arith.mulf %270, %248 : vector<16x128xf32>
    %283 = arith.addf %281, %282 : vector<16x128xf32>
    %c8_i32 = arith.constant 8 : i32
    %284 = arith.index_cast %c8_i32 : i32 to index
    %c0_82 = arith.constant 0 : index
    %c0_83 = arith.constant 0 : index
    %285 = vector.load %arg2[%284, %c0_82, %c0_83] : memref<16x16x384xbf16, #tpu.memory_space<vmem>>, vector<1x16x384xbf16>
    %286 = vector.shape_cast %285 : vector<1x16x384xbf16> to vector<16x384xbf16>
    %287 = arith.extf %286 : vector<16x384xbf16> to vector<16x384xf32>
    %c0_84 = arith.constant 0 : index
    %c0_85 = arith.constant 0 : index
    %288 = vector.load %arg3[%c0_84, %c0_85] : memref<128x384xf32, #tpu.memory_space<vmem>>, vector<128x384xf32>
    %cst_86 = arith.constant dense<0.000000e+00> : vector<16x384xf32>
    %289 = tpu.matmul %283, %288, %cst_86 {dimension_numbers = #tpu.dot_dimension_numbers<[1], [0], [0], [1], [0, 0, 1, 1], [], []>} : vector<16x128xf32>, vector<128x384xf32>, vector<16x384xf32> -> vector<16x384xf32>
    %290 = vector.extract_strided_slice %287 {offsets = [0, 0], sizes = [16, 128], strides = [1, 1]} : vector<16x384xf32> to vector<16x128xf32>
    %291 = vector.extract_strided_slice %289 {offsets = [0, 0], sizes = [16, 128], strides = [1, 1]} : vector<16x384xf32> to vector<16x128xf32>
    %292 = arith.addf %290, %291 : vector<16x128xf32>
    %293 = arith.negf %292 : vector<16x128xf32>
    %294 = math.exp %293 : vector<16x128xf32>
    %cst_87 = arith.constant 1.000000e+00 : f32
    %295 = vector.broadcast %cst_87 : f32 to vector<16x128xf32>
    %296 = arith.addf %295, %294 : vector<16x128xf32>
    %297 = arith.divf %295, %296 : vector<16x128xf32>
    %298 = vector.extract_strided_slice %287 {offsets = [0, 128], sizes = [16, 128], strides = [1, 1]} : vector<16x384xf32> to vector<16x128xf32>
    %299 = vector.extract_strided_slice %289 {offsets = [0, 128], sizes = [16, 128], strides = [1, 1]} : vector<16x384xf32> to vector<16x128xf32>
    %300 = arith.addf %298, %299 : vector<16x128xf32>
    %301 = arith.negf %300 : vector<16x128xf32>
    %302 = math.exp %301 : vector<16x128xf32>
    %cst_88 = arith.constant 1.000000e+00 : f32
    %303 = vector.broadcast %cst_88 : f32 to vector<16x128xf32>
    %304 = arith.addf %303, %302 : vector<16x128xf32>
    %305 = arith.divf %303, %304 : vector<16x128xf32>
    %306 = vector.extract_strided_slice %287 {offsets = [0, 256], sizes = [16, 128], strides = [1, 1]} : vector<16x384xf32> to vector<16x128xf32>
    %307 = vector.extract_strided_slice %289 {offsets = [0, 256], sizes = [16, 128], strides = [1, 1]} : vector<16x384xf32> to vector<16x128xf32>
    %c0_89 = arith.constant 0 : index
    %c0_90 = arith.constant 0 : index
    %308 = vector.load %arg4[%c0_89, %c0_90] : memref<1x128xf32, #tpu.memory_space<vmem>>, vector<1x128xf32>
    %309 = vector.broadcast %308 : vector<1x128xf32> to vector<16x128xf32>
    %310 = arith.addf %307, %309 : vector<16x128xf32>
    %311 = arith.mulf %297, %310 : vector<16x128xf32>
    %312 = arith.addf %306, %311 : vector<16x128xf32>
    %313 = math.tanh %312 : vector<16x128xf32>
    %cst_91 = arith.constant 1.000000e+00 : f32
    %314 = vector.broadcast %cst_91 : f32 to vector<16x128xf32>
    %315 = arith.subf %314, %305 : vector<16x128xf32>
    %316 = arith.mulf %315, %313 : vector<16x128xf32>
    %317 = arith.mulf %305, %283 : vector<16x128xf32>
    %318 = arith.addf %316, %317 : vector<16x128xf32>
    %c9_i32 = arith.constant 9 : i32
    %319 = arith.index_cast %c9_i32 : i32 to index
    %c0_92 = arith.constant 0 : index
    %c0_93 = arith.constant 0 : index
    %320 = vector.load %arg2[%319, %c0_92, %c0_93] : memref<16x16x384xbf16, #tpu.memory_space<vmem>>, vector<1x16x384xbf16>
    %321 = vector.shape_cast %320 : vector<1x16x384xbf16> to vector<16x384xbf16>
    %322 = arith.extf %321 : vector<16x384xbf16> to vector<16x384xf32>
    %c0_94 = arith.constant 0 : index
    %c0_95 = arith.constant 0 : index
    %323 = vector.load %arg3[%c0_94, %c0_95] : memref<128x384xf32, #tpu.memory_space<vmem>>, vector<128x384xf32>
    %cst_96 = arith.constant dense<0.000000e+00> : vector<16x384xf32>
    %324 = tpu.matmul %318, %323, %cst_96 {dimension_numbers = #tpu.dot_dimension_numbers<[1], [0], [0], [1], [0, 0, 1, 1], [], []>} : vector<16x128xf32>, vector<128x384xf32>, vector<16x384xf32> -> vector<16x384xf32>
    %325 = vector.extract_strided_slice %322 {offsets = [0, 0], sizes = [16, 128], strides = [1, 1]} : vector<16x384xf32> to vector<16x128xf32>
    %326 = vector.extract_strided_slice %324 {offsets = [0, 0], sizes = [16, 128], strides = [1, 1]} : vector<16x384xf32> to vector<16x128xf32>
    %327 = arith.addf %325, %326 : vector<16x128xf32>
    %328 = arith.negf %327 : vector<16x128xf32>
    %329 = math.exp %328 : vector<16x128xf32>
    %cst_97 = arith.constant 1.000000e+00 : f32
    %330 = vector.broadcast %cst_97 : f32 to vector<16x128xf32>
    %331 = arith.addf %330, %329 : vector<16x128xf32>
    %332 = arith.divf %330, %331 : vector<16x128xf32>
    %333 = vector.extract_strided_slice %322 {offsets = [0, 128], sizes = [16, 128], strides = [1, 1]} : vector<16x384xf32> to vector<16x128xf32>
    %334 = vector.extract_strided_slice %324 {offsets = [0, 128], sizes = [16, 128], strides = [1, 1]} : vector<16x384xf32> to vector<16x128xf32>
    %335 = arith.addf %333, %334 : vector<16x128xf32>
    %336 = arith.negf %335 : vector<16x128xf32>
    %337 = math.exp %336 : vector<16x128xf32>
    %cst_98 = arith.constant 1.000000e+00 : f32
    %338 = vector.broadcast %cst_98 : f32 to vector<16x128xf32>
    %339 = arith.addf %338, %337 : vector<16x128xf32>
    %340 = arith.divf %338, %339 : vector<16x128xf32>
    %341 = vector.extract_strided_slice %322 {offsets = [0, 256], sizes = [16, 128], strides = [1, 1]} : vector<16x384xf32> to vector<16x128xf32>
    %342 = vector.extract_strided_slice %324 {offsets = [0, 256], sizes = [16, 128], strides = [1, 1]} : vector<16x384xf32> to vector<16x128xf32>
    %c0_99 = arith.constant 0 : index
    %c0_100 = arith.constant 0 : index
    %343 = vector.load %arg4[%c0_99, %c0_100] : memref<1x128xf32, #tpu.memory_space<vmem>>, vector<1x128xf32>
    %344 = vector.broadcast %343 : vector<1x128xf32> to vector<16x128xf32>
    %345 = arith.addf %342, %344 : vector<16x128xf32>
    %346 = arith.mulf %332, %345 : vector<16x128xf32>
    %347 = arith.addf %341, %346 : vector<16x128xf32>
    %348 = math.tanh %347 : vector<16x128xf32>
    %cst_101 = arith.constant 1.000000e+00 : f32
    %349 = vector.broadcast %cst_101 : f32 to vector<16x128xf32>
    %350 = arith.subf %349, %340 : vector<16x128xf32>
    %351 = arith.mulf %350, %348 : vector<16x128xf32>
    %352 = arith.mulf %340, %318 : vector<16x128xf32>
    %353 = arith.addf %351, %352 : vector<16x128xf32>
    %c10_i32 = arith.constant 10 : i32
    %354 = arith.index_cast %c10_i32 : i32 to index
    %c0_102 = arith.constant 0 : index
    %c0_103 = arith.constant 0 : index
    %355 = vector.load %arg2[%354, %c0_102, %c0_103] : memref<16x16x384xbf16, #tpu.memory_space<vmem>>, vector<1x16x384xbf16>
    %356 = vector.shape_cast %355 : vector<1x16x384xbf16> to vector<16x384xbf16>
    %357 = arith.extf %356 : vector<16x384xbf16> to vector<16x384xf32>
    %c0_104 = arith.constant 0 : index
    %c0_105 = arith.constant 0 : index
    %358 = vector.load %arg3[%c0_104, %c0_105] : memref<128x384xf32, #tpu.memory_space<vmem>>, vector<128x384xf32>
    %cst_106 = arith.constant dense<0.000000e+00> : vector<16x384xf32>
    %359 = tpu.matmul %353, %358, %cst_106 {dimension_numbers = #tpu.dot_dimension_numbers<[1], [0], [0], [1], [0, 0, 1, 1], [], []>} : vector<16x128xf32>, vector<128x384xf32>, vector<16x384xf32> -> vector<16x384xf32>
    %360 = vector.extract_strided_slice %357 {offsets = [0, 0], sizes = [16, 128], strides = [1, 1]} : vector<16x384xf32> to vector<16x128xf32>
    %361 = vector.extract_strided_slice %359 {offsets = [0, 0], sizes = [16, 128], strides = [1, 1]} : vector<16x384xf32> to vector<16x128xf32>
    %362 = arith.addf %360, %361 : vector<16x128xf32>
    %363 = arith.negf %362 : vector<16x128xf32>
    %364 = math.exp %363 : vector<16x128xf32>
    %cst_107 = arith.constant 1.000000e+00 : f32
    %365 = vector.broadcast %cst_107 : f32 to vector<16x128xf32>
    %366 = arith.addf %365, %364 : vector<16x128xf32>
    %367 = arith.divf %365, %366 : vector<16x128xf32>
    %368 = vector.extract_strided_slice %357 {offsets = [0, 128], sizes = [16, 128], strides = [1, 1]} : vector<16x384xf32> to vector<16x128xf32>
    %369 = vector.extract_strided_slice %359 {offsets = [0, 128], sizes = [16, 128], strides = [1, 1]} : vector<16x384xf32> to vector<16x128xf32>
    %370 = arith.addf %368, %369 : vector<16x128xf32>
    %371 = arith.negf %370 : vector<16x128xf32>
    %372 = math.exp %371 : vector<16x128xf32>
    %cst_108 = arith.constant 1.000000e+00 : f32
    %373 = vector.broadcast %cst_108 : f32 to vector<16x128xf32>
    %374 = arith.addf %373, %372 : vector<16x128xf32>
    %375 = arith.divf %373, %374 : vector<16x128xf32>
    %376 = vector.extract_strided_slice %357 {offsets = [0, 256], sizes = [16, 128], strides = [1, 1]} : vector<16x384xf32> to vector<16x128xf32>
    %377 = vector.extract_strided_slice %359 {offsets = [0, 256], sizes = [16, 128], strides = [1, 1]} : vector<16x384xf32> to vector<16x128xf32>
    %c0_109 = arith.constant 0 : index
    %c0_110 = arith.constant 0 : index
    %378 = vector.load %arg4[%c0_109, %c0_110] : memref<1x128xf32, #tpu.memory_space<vmem>>, vector<1x128xf32>
    %379 = vector.broadcast %378 : vector<1x128xf32> to vector<16x128xf32>
    %380 = arith.addf %377, %379 : vector<16x128xf32>
    %381 = arith.mulf %367, %380 : vector<16x128xf32>
    %382 = arith.addf %376, %381 : vector<16x128xf32>
    %383 = math.tanh %382 : vector<16x128xf32>
    %cst_111 = arith.constant 1.000000e+00 : f32
    %384 = vector.broadcast %cst_111 : f32 to vector<16x128xf32>
    %385 = arith.subf %384, %375 : vector<16x128xf32>
    %386 = arith.mulf %385, %383 : vector<16x128xf32>
    %387 = arith.mulf %375, %353 : vector<16x128xf32>
    %388 = arith.addf %386, %387 : vector<16x128xf32>
    %c11_i32 = arith.constant 11 : i32
    %389 = arith.index_cast %c11_i32 : i32 to index
    %c0_112 = arith.constant 0 : index
    %c0_113 = arith.constant 0 : index
    %390 = vector.load %arg2[%389, %c0_112, %c0_113] : memref<16x16x384xbf16, #tpu.memory_space<vmem>>, vector<1x16x384xbf16>
    %391 = vector.shape_cast %390 : vector<1x16x384xbf16> to vector<16x384xbf16>
    %392 = arith.extf %391 : vector<16x384xbf16> to vector<16x384xf32>
    %c0_114 = arith.constant 0 : index
    %c0_115 = arith.constant 0 : index
    %393 = vector.load %arg3[%c0_114, %c0_115] : memref<128x384xf32, #tpu.memory_space<vmem>>, vector<128x384xf32>
    %cst_116 = arith.constant dense<0.000000e+00> : vector<16x384xf32>
    %394 = tpu.matmul %388, %393, %cst_116 {dimension_numbers = #tpu.dot_dimension_numbers<[1], [0], [0], [1], [0, 0, 1, 1], [], []>} : vector<16x128xf32>, vector<128x384xf32>, vector<16x384xf32> -> vector<16x384xf32>
    %395 = vector.extract_strided_slice %392 {offsets = [0, 0], sizes = [16, 128], strides = [1, 1]} : vector<16x384xf32> to vector<16x128xf32>
    %396 = vector.extract_strided_slice %394 {offsets = [0, 0], sizes = [16, 128], strides = [1, 1]} : vector<16x384xf32> to vector<16x128xf32>
    %397 = arith.addf %395, %396 : vector<16x128xf32>
    %398 = arith.negf %397 : vector<16x128xf32>
    %399 = math.exp %398 : vector<16x128xf32>
    %cst_117 = arith.constant 1.000000e+00 : f32
    %400 = vector.broadcast %cst_117 : f32 to vector<16x128xf32>
    %401 = arith.addf %400, %399 : vector<16x128xf32>
    %402 = arith.divf %400, %401 : vector<16x128xf32>
    %403 = vector.extract_strided_slice %392 {offsets = [0, 128], sizes = [16, 128], strides = [1, 1]} : vector<16x384xf32> to vector<16x128xf32>
    %404 = vector.extract_strided_slice %394 {offsets = [0, 128], sizes = [16, 128], strides = [1, 1]} : vector<16x384xf32> to vector<16x128xf32>
    %405 = arith.addf %403, %404 : vector<16x128xf32>
    %406 = arith.negf %405 : vector<16x128xf32>
    %407 = math.exp %406 : vector<16x128xf32>
    %cst_118 = arith.constant 1.000000e+00 : f32
    %408 = vector.broadcast %cst_118 : f32 to vector<16x128xf32>
    %409 = arith.addf %408, %407 : vector<16x128xf32>
    %410 = arith.divf %408, %409 : vector<16x128xf32>
    %411 = vector.extract_strided_slice %392 {offsets = [0, 256], sizes = [16, 128], strides = [1, 1]} : vector<16x384xf32> to vector<16x128xf32>
    %412 = vector.extract_strided_slice %394 {offsets = [0, 256], sizes = [16, 128], strides = [1, 1]} : vector<16x384xf32> to vector<16x128xf32>
    %c0_119 = arith.constant 0 : index
    %c0_120 = arith.constant 0 : index
    %413 = vector.load %arg4[%c0_119, %c0_120] : memref<1x128xf32, #tpu.memory_space<vmem>>, vector<1x128xf32>
    %414 = vector.broadcast %413 : vector<1x128xf32> to vector<16x128xf32>
    %415 = arith.addf %412, %414 : vector<16x128xf32>
    %416 = arith.mulf %402, %415 : vector<16x128xf32>
    %417 = arith.addf %411, %416 : vector<16x128xf32>
    %418 = math.tanh %417 : vector<16x128xf32>
    %cst_121 = arith.constant 1.000000e+00 : f32
    %419 = vector.broadcast %cst_121 : f32 to vector<16x128xf32>
    %420 = arith.subf %419, %410 : vector<16x128xf32>
    %421 = arith.mulf %420, %418 : vector<16x128xf32>
    %422 = arith.mulf %410, %388 : vector<16x128xf32>
    %423 = arith.addf %421, %422 : vector<16x128xf32>
    %c12_i32 = arith.constant 12 : i32
    %424 = arith.index_cast %c12_i32 : i32 to index
    %c0_122 = arith.constant 0 : index
    %c0_123 = arith.constant 0 : index
    %425 = vector.load %arg2[%424, %c0_122, %c0_123] : memref<16x16x384xbf16, #tpu.memory_space<vmem>>, vector<1x16x384xbf16>
    %426 = vector.shape_cast %425 : vector<1x16x384xbf16> to vector<16x384xbf16>
    %427 = arith.extf %426 : vector<16x384xbf16> to vector<16x384xf32>
    %c0_124 = arith.constant 0 : index
    %c0_125 = arith.constant 0 : index
    %428 = vector.load %arg3[%c0_124, %c0_125] : memref<128x384xf32, #tpu.memory_space<vmem>>, vector<128x384xf32>
    %cst_126 = arith.constant dense<0.000000e+00> : vector<16x384xf32>
    %429 = tpu.matmul %423, %428, %cst_126 {dimension_numbers = #tpu.dot_dimension_numbers<[1], [0], [0], [1], [0, 0, 1, 1], [], []>} : vector<16x128xf32>, vector<128x384xf32>, vector<16x384xf32> -> vector<16x384xf32>
    %430 = vector.extract_strided_slice %427 {offsets = [0, 0], sizes = [16, 128], strides = [1, 1]} : vector<16x384xf32> to vector<16x128xf32>
    %431 = vector.extract_strided_slice %429 {offsets = [0, 0], sizes = [16, 128], strides = [1, 1]} : vector<16x384xf32> to vector<16x128xf32>
    %432 = arith.addf %430, %431 : vector<16x128xf32>
    %433 = arith.negf %432 : vector<16x128xf32>
    %434 = math.exp %433 : vector<16x128xf32>
    %cst_127 = arith.constant 1.000000e+00 : f32
    %435 = vector.broadcast %cst_127 : f32 to vector<16x128xf32>
    %436 = arith.addf %435, %434 : vector<16x128xf32>
    %437 = arith.divf %435, %436 : vector<16x128xf32>
    %438 = vector.extract_strided_slice %427 {offsets = [0, 128], sizes = [16, 128], strides = [1, 1]} : vector<16x384xf32> to vector<16x128xf32>
    %439 = vector.extract_strided_slice %429 {offsets = [0, 128], sizes = [16, 128], strides = [1, 1]} : vector<16x384xf32> to vector<16x128xf32>
    %440 = arith.addf %438, %439 : vector<16x128xf32>
    %441 = arith.negf %440 : vector<16x128xf32>
    %442 = math.exp %441 : vector<16x128xf32>
    %cst_128 = arith.constant 1.000000e+00 : f32
    %443 = vector.broadcast %cst_128 : f32 to vector<16x128xf32>
    %444 = arith.addf %443, %442 : vector<16x128xf32>
    %445 = arith.divf %443, %444 : vector<16x128xf32>
    %446 = vector.extract_strided_slice %427 {offsets = [0, 256], sizes = [16, 128], strides = [1, 1]} : vector<16x384xf32> to vector<16x128xf32>
    %447 = vector.extract_strided_slice %429 {offsets = [0, 256], sizes = [16, 128], strides = [1, 1]} : vector<16x384xf32> to vector<16x128xf32>
    %c0_129 = arith.constant 0 : index
    %c0_130 = arith.constant 0 : index
    %448 = vector.load %arg4[%c0_129, %c0_130] : memref<1x128xf32, #tpu.memory_space<vmem>>, vector<1x128xf32>
    %449 = vector.broadcast %448 : vector<1x128xf32> to vector<16x128xf32>
    %450 = arith.addf %447, %449 : vector<16x128xf32>
    %451 = arith.mulf %437, %450 : vector<16x128xf32>
    %452 = arith.addf %446, %451 : vector<16x128xf32>
    %453 = math.tanh %452 : vector<16x128xf32>
    %cst_131 = arith.constant 1.000000e+00 : f32
    %454 = vector.broadcast %cst_131 : f32 to vector<16x128xf32>
    %455 = arith.subf %454, %445 : vector<16x128xf32>
    %456 = arith.mulf %455, %453 : vector<16x128xf32>
    %457 = arith.mulf %445, %423 : vector<16x128xf32>
    %458 = arith.addf %456, %457 : vector<16x128xf32>
    %c13_i32 = arith.constant 13 : i32
    %459 = arith.index_cast %c13_i32 : i32 to index
    %c0_132 = arith.constant 0 : index
    %c0_133 = arith.constant 0 : index
    %460 = vector.load %arg2[%459, %c0_132, %c0_133] : memref<16x16x384xbf16, #tpu.memory_space<vmem>>, vector<1x16x384xbf16>
    %461 = vector.shape_cast %460 : vector<1x16x384xbf16> to vector<16x384xbf16>
    %462 = arith.extf %461 : vector<16x384xbf16> to vector<16x384xf32>
    %c0_134 = arith.constant 0 : index
    %c0_135 = arith.constant 0 : index
    %463 = vector.load %arg3[%c0_134, %c0_135] : memref<128x384xf32, #tpu.memory_space<vmem>>, vector<128x384xf32>
    %cst_136 = arith.constant dense<0.000000e+00> : vector<16x384xf32>
    %464 = tpu.matmul %458, %463, %cst_136 {dimension_numbers = #tpu.dot_dimension_numbers<[1], [0], [0], [1], [0, 0, 1, 1], [], []>} : vector<16x128xf32>, vector<128x384xf32>, vector<16x384xf32> -> vector<16x384xf32>
    %465 = vector.extract_strided_slice %462 {offsets = [0, 0], sizes = [16, 128], strides = [1, 1]} : vector<16x384xf32> to vector<16x128xf32>
    %466 = vector.extract_strided_slice %464 {offsets = [0, 0], sizes = [16, 128], strides = [1, 1]} : vector<16x384xf32> to vector<16x128xf32>
    %467 = arith.addf %465, %466 : vector<16x128xf32>
    %468 = arith.negf %467 : vector<16x128xf32>
    %469 = math.exp %468 : vector<16x128xf32>
    %cst_137 = arith.constant 1.000000e+00 : f32
    %470 = vector.broadcast %cst_137 : f32 to vector<16x128xf32>
    %471 = arith.addf %470, %469 : vector<16x128xf32>
    %472 = arith.divf %470, %471 : vector<16x128xf32>
    %473 = vector.extract_strided_slice %462 {offsets = [0, 128], sizes = [16, 128], strides = [1, 1]} : vector<16x384xf32> to vector<16x128xf32>
    %474 = vector.extract_strided_slice %464 {offsets = [0, 128], sizes = [16, 128], strides = [1, 1]} : vector<16x384xf32> to vector<16x128xf32>
    %475 = arith.addf %473, %474 : vector<16x128xf32>
    %476 = arith.negf %475 : vector<16x128xf32>
    %477 = math.exp %476 : vector<16x128xf32>
    %cst_138 = arith.constant 1.000000e+00 : f32
    %478 = vector.broadcast %cst_138 : f32 to vector<16x128xf32>
    %479 = arith.addf %478, %477 : vector<16x128xf32>
    %480 = arith.divf %478, %479 : vector<16x128xf32>
    %481 = vector.extract_strided_slice %462 {offsets = [0, 256], sizes = [16, 128], strides = [1, 1]} : vector<16x384xf32> to vector<16x128xf32>
    %482 = vector.extract_strided_slice %464 {offsets = [0, 256], sizes = [16, 128], strides = [1, 1]} : vector<16x384xf32> to vector<16x128xf32>
    %c0_139 = arith.constant 0 : index
    %c0_140 = arith.constant 0 : index
    %483 = vector.load %arg4[%c0_139, %c0_140] : memref<1x128xf32, #tpu.memory_space<vmem>>, vector<1x128xf32>
    %484 = vector.broadcast %483 : vector<1x128xf32> to vector<16x128xf32>
    %485 = arith.addf %482, %484 : vector<16x128xf32>
    %486 = arith.mulf %472, %485 : vector<16x128xf32>
    %487 = arith.addf %481, %486 : vector<16x128xf32>
    %488 = math.tanh %487 : vector<16x128xf32>
    %cst_141 = arith.constant 1.000000e+00 : f32
    %489 = vector.broadcast %cst_141 : f32 to vector<16x128xf32>
    %490 = arith.subf %489, %480 : vector<16x128xf32>
    %491 = arith.mulf %490, %488 : vector<16x128xf32>
    %492 = arith.mulf %480, %458 : vector<16x128xf32>
    %493 = arith.addf %491, %492 : vector<16x128xf32>
    %c14_i32 = arith.constant 14 : i32
    %494 = arith.index_cast %c14_i32 : i32 to index
    %c0_142 = arith.constant 0 : index
    %c0_143 = arith.constant 0 : index
    %495 = vector.load %arg2[%494, %c0_142, %c0_143] : memref<16x16x384xbf16, #tpu.memory_space<vmem>>, vector<1x16x384xbf16>
    %496 = vector.shape_cast %495 : vector<1x16x384xbf16> to vector<16x384xbf16>
    %497 = arith.extf %496 : vector<16x384xbf16> to vector<16x384xf32>
    %c0_144 = arith.constant 0 : index
    %c0_145 = arith.constant 0 : index
    %498 = vector.load %arg3[%c0_144, %c0_145] : memref<128x384xf32, #tpu.memory_space<vmem>>, vector<128x384xf32>
    %cst_146 = arith.constant dense<0.000000e+00> : vector<16x384xf32>
    %499 = tpu.matmul %493, %498, %cst_146 {dimension_numbers = #tpu.dot_dimension_numbers<[1], [0], [0], [1], [0, 0, 1, 1], [], []>} : vector<16x128xf32>, vector<128x384xf32>, vector<16x384xf32> -> vector<16x384xf32>
    %500 = vector.extract_strided_slice %497 {offsets = [0, 0], sizes = [16, 128], strides = [1, 1]} : vector<16x384xf32> to vector<16x128xf32>
    %501 = vector.extract_strided_slice %499 {offsets = [0, 0], sizes = [16, 128], strides = [1, 1]} : vector<16x384xf32> to vector<16x128xf32>
    %502 = arith.addf %500, %501 : vector<16x128xf32>
    %503 = arith.negf %502 : vector<16x128xf32>
    %504 = math.exp %503 : vector<16x128xf32>
    %cst_147 = arith.constant 1.000000e+00 : f32
    %505 = vector.broadcast %cst_147 : f32 to vector<16x128xf32>
    %506 = arith.addf %505, %504 : vector<16x128xf32>
    %507 = arith.divf %505, %506 : vector<16x128xf32>
    %508 = vector.extract_strided_slice %497 {offsets = [0, 128], sizes = [16, 128], strides = [1, 1]} : vector<16x384xf32> to vector<16x128xf32>
    %509 = vector.extract_strided_slice %499 {offsets = [0, 128], sizes = [16, 128], strides = [1, 1]} : vector<16x384xf32> to vector<16x128xf32>
    %510 = arith.addf %508, %509 : vector<16x128xf32>
    %511 = arith.negf %510 : vector<16x128xf32>
    %512 = math.exp %511 : vector<16x128xf32>
    %cst_148 = arith.constant 1.000000e+00 : f32
    %513 = vector.broadcast %cst_148 : f32 to vector<16x128xf32>
    %514 = arith.addf %513, %512 : vector<16x128xf32>
    %515 = arith.divf %513, %514 : vector<16x128xf32>
    %516 = vector.extract_strided_slice %497 {offsets = [0, 256], sizes = [16, 128], strides = [1, 1]} : vector<16x384xf32> to vector<16x128xf32>
    %517 = vector.extract_strided_slice %499 {offsets = [0, 256], sizes = [16, 128], strides = [1, 1]} : vector<16x384xf32> to vector<16x128xf32>
    %c0_149 = arith.constant 0 : index
    %c0_150 = arith.constant 0 : index
    %518 = vector.load %arg4[%c0_149, %c0_150] : memref<1x128xf32, #tpu.memory_space<vmem>>, vector<1x128xf32>
    %519 = vector.broadcast %518 : vector<1x128xf32> to vector<16x128xf32>
    %520 = arith.addf %517, %519 : vector<16x128xf32>
    %521 = arith.mulf %507, %520 : vector<16x128xf32>
    %522 = arith.addf %516, %521 : vector<16x128xf32>
    %523 = math.tanh %522 : vector<16x128xf32>
    %cst_151 = arith.constant 1.000000e+00 : f32
    %524 = vector.broadcast %cst_151 : f32 to vector<16x128xf32>
    %525 = arith.subf %524, %515 : vector<16x128xf32>
    %526 = arith.mulf %525, %523 : vector<16x128xf32>
    %527 = arith.mulf %515, %493 : vector<16x128xf32>
    %528 = arith.addf %526, %527 : vector<16x128xf32>
    %c15_i32 = arith.constant 15 : i32
    %529 = arith.index_cast %c15_i32 : i32 to index
    %c0_152 = arith.constant 0 : index
    %c0_153 = arith.constant 0 : index
    %530 = vector.load %arg2[%529, %c0_152, %c0_153] : memref<16x16x384xbf16, #tpu.memory_space<vmem>>, vector<1x16x384xbf16>
    %531 = vector.shape_cast %530 : vector<1x16x384xbf16> to vector<16x384xbf16>
    %532 = arith.extf %531 : vector<16x384xbf16> to vector<16x384xf32>
    %c0_154 = arith.constant 0 : index
    %c0_155 = arith.constant 0 : index
    %533 = vector.load %arg3[%c0_154, %c0_155] : memref<128x384xf32, #tpu.memory_space<vmem>>, vector<128x384xf32>
    %cst_156 = arith.constant dense<0.000000e+00> : vector<16x384xf32>
    %534 = tpu.matmul %528, %533, %cst_156 {dimension_numbers = #tpu.dot_dimension_numbers<[1], [0], [0], [1], [0, 0, 1, 1], [], []>} : vector<16x128xf32>, vector<128x384xf32>, vector<16x384xf32> -> vector<16x384xf32>
    %535 = vector.extract_strided_slice %532 {offsets = [0, 0], sizes = [16, 128], strides = [1, 1]} : vector<16x384xf32> to vector<16x128xf32>
    %536 = vector.extract_strided_slice %534 {offsets = [0, 0], sizes = [16, 128], strides = [1, 1]} : vector<16x384xf32> to vector<16x128xf32>
    %537 = arith.addf %535, %536 : vector<16x128xf32>
    %538 = arith.negf %537 : vector<16x128xf32>
    %539 = math.exp %538 : vector<16x128xf32>
    %cst_157 = arith.constant 1.000000e+00 : f32
    %540 = vector.broadcast %cst_157 : f32 to vector<16x128xf32>
    %541 = arith.addf %540, %539 : vector<16x128xf32>
    %542 = arith.divf %540, %541 : vector<16x128xf32>
    %543 = vector.extract_strided_slice %532 {offsets = [0, 128], sizes = [16, 128], strides = [1, 1]} : vector<16x384xf32> to vector<16x128xf32>
    %544 = vector.extract_strided_slice %534 {offsets = [0, 128], sizes = [16, 128], strides = [1, 1]} : vector<16x384xf32> to vector<16x128xf32>
    %545 = arith.addf %543, %544 : vector<16x128xf32>
    %546 = arith.negf %545 : vector<16x128xf32>
    %547 = math.exp %546 : vector<16x128xf32>
    %cst_158 = arith.constant 1.000000e+00 : f32
    %548 = vector.broadcast %cst_158 : f32 to vector<16x128xf32>
    %549 = arith.addf %548, %547 : vector<16x128xf32>
    %550 = arith.divf %548, %549 : vector<16x128xf32>
    %551 = vector.extract_strided_slice %532 {offsets = [0, 256], sizes = [16, 128], strides = [1, 1]} : vector<16x384xf32> to vector<16x128xf32>
    %552 = vector.extract_strided_slice %534 {offsets = [0, 256], sizes = [16, 128], strides = [1, 1]} : vector<16x384xf32> to vector<16x128xf32>
    %c0_159 = arith.constant 0 : index
    %c0_160 = arith.constant 0 : index
    %553 = vector.load %arg4[%c0_159, %c0_160] : memref<1x128xf32, #tpu.memory_space<vmem>>, vector<1x128xf32>
    %554 = vector.broadcast %553 : vector<1x128xf32> to vector<16x128xf32>
    %555 = arith.addf %552, %554 : vector<16x128xf32>
    %556 = arith.mulf %542, %555 : vector<16x128xf32>
    %557 = arith.addf %551, %556 : vector<16x128xf32>
    %558 = math.tanh %557 : vector<16x128xf32>
    %cst_161 = arith.constant 1.000000e+00 : f32
    %559 = vector.broadcast %cst_161 : f32 to vector<16x128xf32>
    %560 = arith.subf %559, %550 : vector<16x128xf32>
    %561 = arith.mulf %560, %558 : vector<16x128xf32>
    %562 = arith.mulf %550, %528 : vector<16x128xf32>
    %563 = arith.addf %561, %562 : vector<16x128xf32>
    %c16_i32 = arith.constant 16 : i32
    %c0_162 = arith.constant 0 : index
    %c0_163 = arith.constant 0 : index
    %564 = vector.load %arg6[%c0_162, %c0_163] : memref<16x128xf32, #tpu.memory_space<vmem>>, vector<16x128xf32>
    tpu.vector_store %arg6[%c0_162, %c0_163], %563 {strides = array<i32>} : memref<16x128xf32, #tpu.memory_space<vmem>>, vector<16x128xf32>,
    %c1_i32_164 = arith.constant 1 : i32
    %565 = arith.cmpi eq, %arg1, %c1_i32_164 : i32
    %566 = arith.extui %565 : i1 to i32
    %c0_i32_165 = arith.constant 0 : i32
    %567 = arith.cmpi ne, %566, %c0_i32_165 : i32
    scf.if %567 {
      %c0_166 = arith.constant 0 : index
      %c0_167 = arith.constant 0 : index
      %568 = vector.load %arg5[%c0_166, %c0_167] : memref<16x128xf32, #tpu.memory_space<vmem>>, vector<16x128xf32>
      tpu.vector_store %arg5[%c0_166, %c0_167], %563 {strides = array<i32>} : memref<16x128xf32, #tpu.memory_space<vmem>>, vector<16x128xf32>,
    } else {
    }
    return
  }
  func.func @transform_0(%arg0: i32, %arg1: i32) -> (i32, i32, i32) {
    %c0_i32 = arith.constant 0 : i32
    %c0_i32_0 = arith.constant 0 : i32
    return %arg1, %arg0, %c0_i32 : i32, i32, i32
  }
  func.func @transform_1(%arg0: i32, %arg1: i32) -> (i32, i32) {
    %c0_i32 = arith.constant 0 : i32
    %c0_i32_0 = arith.constant 0 : i32
    %c0_i32_1 = arith.constant 0 : i32
    return %c0_i32, %c0_i32_0 : i32, i32
  }
  func.func @transform_2(%arg0: i32, %arg1: i32) -> (i32, i32) {
    %c0_i32 = arith.constant 0 : i32
    %c0_i32_0 = arith.constant 0 : i32
    %c0_i32_1 = arith.constant 0 : i32
    return %c0_i32, %c0_i32_0 : i32, i32
  }
  func.func @transform_3(%arg0: i32, %arg1: i32) -> (i32, i32) {
    %c0_i32 = arith.constant 0 : i32
    %c0_i32_0 = arith.constant 0 : i32
    return %arg0, %c0_i32 : i32, i32
  }
}

</mosaic_0001>

<llo_original>
// kernel: stacked_gru_forward.1
$region0: #{stacked_gru_forward.1}
  #allocation0 [shape = 'u32[]', space=smem, size = 0x4, offset = 0x4, fixed_abs, tag = 'smem constant byte address 0x4 - core index']
  #allocation1 [shape = 'u32[144,128]{1,0:T(1,128)}', space=vmem, size = 0x12000, scoped, tag = 'internal scratch']
  #allocation2 [shape = 'f32[16,128]{1,0:T(8,128)}', space=vmem, size = 0x2000, scoped, tag = 'scratch operand']
  %s0 = inlined_call_operand.vmem [shape: bf16[32,16,384], index: 0, kind: input, shape index: {}]
  %s1 = inlined_call_operand.vmem [shape: f32[128,384], index: 1, kind: input, shape index: {}]
  %s2 = inlined_call_operand.vmem [shape: f32[1,128], index: 2, kind: input, shape index: {}]
  %s3 = inlined_call_operand.vmem [shape: f32[16,128], index: 3, kind: output, shape index: {}]
  %s4 = sld [smem:[#allocation0]]
  $region53: #{stacked_gru_forward.1} parent=0
    _
  %s6 = ssub.s32 1, %s4
  %s7 = scalar_select 0, %s6, %s4
  loop: start=0, step=1, limit=4
  $region2: #{stacked_gru_forward.1} parent=0 // loop_pre_header
    _
  $region3: #{stacked_gru_forward.1} parent=0 // loop_header
    %s9 = sphi 0, %s13
    %p10 = scmp.ge.s32.totalorder %s9, 4
    %s16 = sphi 0, %s28
    %s17 = sphi 0, %s24
    %s18 = sphi 0, %s16
    %s19 = sphi 0, %s17
    %s20 = sphi 0, %s18
    %s21 = sphi 0, %s19
    %s33 = sphi 0, %s35
    %s36 = sphi 0, %s33
    %s37 = sphi 0, %s36
    %s53 = sphi 0, %s37
    %s57 = sphi 0, %s57
    %s59 = sphi 0, %s57
    %s60 = sphi 0, %s59
    %s74 = sphi 0, %s60
    %s78 = sphi 0, %s78
    %s80 = sphi 0, %s78
    %s81 = sphi 0, %s80
    %s95 = sphi 0, %s81
    %s101 = sphi 0, %s103
    %s104 = sphi 0, %s101
    %s105 = sphi 0, %s104
    %s121 = sphi 0, %s105
  $region4: #{stacked_gru_forward.1} parent=0 // loop_header_branch
    %12 = sbr.rel (%p10) target = $region8
  $region5: #{stacked_gru_forward.1} parent=0 // loop_body
    %s14 = ssub.s32 %s9, 1
    %s15 = ssub.s32 %s9, 2
    %s22 = sadd.s32 1, %s17
    %p23 = scmp.ge.s32.totalorder %s22, 2
    %s24 = scalar_select %p23, 0, %s22
    %s25 = sadd.s32 1, %s16
    %s26 = scalar_select %p23, %s25, %s16
    %p27 = scmp.ge.s32.totalorder %s26, 1
    %s28 = scalar_select %p27, 0, %s26
    %s29 = ssub.s32 %s17, %s24
    %s30 = ssub.s32 %s16, %s28
    %s31 = sor.u32 %s29, %s30
    %p32 = scmp.eq.s32.totalorder %s31, 0
    %s34 = sadd.s32 %s33, 1
    %s35 = scalar_select %p32, %s33, %s34
    %p38 = pneg %p32
    %p39 = scmp.eq.s32.totalorder %s9, 1
    %p40 = por %p38, %p39
    %p41 = scmp.ne.s32.totalorder %s33, %s36
    %p42 = scmp.eq.s32.totalorder %s9, 0
    %p43 = por %p41, %p42
    %p44 = scmp.ne.s32.totalorder %s33, %s36
    %p45 = scmp.eq.s32.totalorder %s14, 1
    %p46 = por %p44, %p45
    %p47 = scmp.ne.s32.totalorder %s36, %s37
    %p48 = scmp.eq.s32.totalorder %s14, 0
    %p49 = por %p47, %p48
    %p50 = scmp.ne.s32.totalorder %s36, %s37
    %p51 = scmp.eq.s32.totalorder %s15, 1
    %p52 = por %p50, %p51
    %p54 = scmp.ne.s32.totalorder %s37, %s53
    %p55 = scmp.eq.s32.totalorder %s15, 0
    %p56 = por %p54, %p55
    %s58 = sadd.s32 %s57, 1
    %p61 = scmp.eq.s32.totalorder %s9, 1
    %p62 = scmp.ne.s32.totalorder %s57, %s59
    %p63 = scmp.eq.s32.totalorder %s9, 0
    %p64 = por %p62, %p63
    %p65 = scmp.ne.s32.totalorder %s57, %s59
    %p66 = scmp.eq.s32.totalorder %s14, 1
    %p67 = por %p65, %p66
    %p68 = scmp.ne.s32.totalorder %s59, %s60
    %p69 = scmp.eq.s32.totalorder %s14, 0
    %p70 = por %p68, %p69
    %p71 = scmp.ne.s32.totalorder %s59, %s60
    %p72 = scmp.eq.s32.totalorder %s15, 1
    %p73 = por %p71, %p72
    %p75 = scmp.ne.s32.totalorder %s60, %s74
    %p76 = scmp.eq.s32.totalorder %s15, 0
    %p77 = por %p75, %p76
    %s79 = sadd.s32 %s78, 1
    %p82 = scmp.eq.s32.totalorder %s9, 1
    %p83 = scmp.ne.s32.totalorder %s78, %s80
    %p84 = scmp.eq.s32.totalorder %s9, 0
    %p85 = por %p83, %p84
    %p86 = scmp.ne.s32.totalorder %s78, %s80
    %p87 = scmp.eq.s32.totalorder %s14, 1
    %p88 = por %p86, %p87
    %p89 = scmp.ne.s32.totalorder %s80, %s81
    %p90 = scmp.eq.s32.totalorder %s14, 0
    %p91 = por %p89, %p90
    %p92 = scmp.ne.s32.totalorder %s80, %s81
    %p93 = scmp.eq.s32.totalorder %s15, 1
    %p94 = por %p92, %p93
    %p96 = scmp.ne.s32.totalorder %s81, %s95
    %p97 = scmp.eq.s32.totalorder %s15, 0
    %p98 = por %p96, %p97
    %s99 = ssub.s32 %s16, %s28
    %p100 = scmp.eq.s32.totalorder %s99, 0
    %s102 = sadd.s32 %s101, 1
    %s103 = scalar_select %p100, %s101, %s102
    %p106 = pneg %p100
    %p107 = scmp.eq.s32.totalorder %s9, 1
    %p108 = por %p106, %p107
    %p109 = scmp.ne.s32.totalorder %s101, %s104
    %p110 = scmp.eq.s32.totalorder %s9, 0
    %p111 = por %p109, %p110
    %p112 = scmp.ne.s32.totalorder %s101, %s104
    %p113 = scmp.eq.s32.totalorder %s14, 1
    %p114 = por %p112, %p113
    %p115 = scmp.ne.s32.totalorder %s104, %s105
    %p116 = scmp.eq.s32.totalorder %s14, 0
    %p117 = por %p115, %p116
    %p118 = scmp.ne.s32.totalorder %s104, %s105
    %p119 = scmp.eq.s32.totalorder %s15, 1
    %p120 = por %p118, %p119
    %p122 = scmp.ne.s32.totalorder %s105, %s121
    %p123 = scmp.eq.s32.totalorder %s15, 0
    %p124 = por %p122, %p123
    %p125 = scmp.le.s32.totalorder 1, %s9
    %p126 = scmp.lt.s32.totalorder %s9, 3
    %p127 = pnand %p125, %p126
    %p128 = pneg %p127
    // Predicated region
    $region9: #{stacked_gru_forward.1} parent=5 // pred_check
      _
    $region10: #{stacked_gru_forward.1} parent=5 // pred_check_branch
      %130 = sbr.rel (%p127) target = $region12
    $region11: #{stacked_gru_forward.1} parent=5 // pred_region
      %s131 = ssub.s32 %s9, 1
      // Predicated region
      $region13: #{stacked_gru_forward.1} parent=11 // pred_check
        %p132 = pneg %p70
      $region14: #{stacked_gru_forward.1} parent=11 // pred_check_branch
        %134 = sbr.rel (%p132) target = $region16
      $region15: #{stacked_gru_forward.1} parent=11 // pred_region
        _
      $region16: #{stacked_gru_forward.1} parent=11 // pred_fallthru
        _
      // Predicated region
      $region17: #{stacked_gru_forward.1} parent=11 // pred_check
        %p135 = pneg %p91
      $region18: #{stacked_gru_forward.1} parent=11 // pred_check_branch
        %137 = sbr.rel (%p135) target = $region20
      $region19: #{stacked_gru_forward.1} parent=11 // pred_region
        _
      $region20: #{stacked_gru_forward.1} parent=11 // pred_fallthru
        _
    $region12: #{stacked_gru_forward.1} parent=5 // pred_fallthru
      _
    %p138 = scmp.lt.s32.totalorder %s9, 2
    // Predicated region
    $region21: #{stacked_gru_forward.1} parent=5 // pred_check
      %p139 = pneg %p138
    $region22: #{stacked_gru_forward.1} parent=5 // pred_check_branch
      %141 = sbr.rel (%p139) target = $region24
    $region23: #{stacked_gru_forward.1} parent=5 // pred_region
      // Predicated region
      $region25: #{stacked_gru_forward.1} parent=23 // pred_check
        %p142 = pneg %p43
      $region26: #{stacked_gru_forward.1} parent=23 // pred_check_branch
        %144 = sbr.rel (%p142) target = $region28
      $region27: #{stacked_gru_forward.1} parent=23 // pred_region
        %s145 = smul.u32 16, %s17
        %s146 = smul.u32 2, %s16
        %p147 = scmp.lt.s32.totalorder %s145, 31
        %s148 = scalar_select %p147, %s145, 31
        %p149 = scmp.lt.s32.totalorder %s146, 1
        %s150 = scalar_select %p149, %s146, 1
        %s151 = smul.addr %s150, 3
        %s152 = smul.addr %s148, 6
        %s153 = sadd.s32 %s151, %s152
        %s154 = smul.addr %s153, 4
        %s155 = scalar_lea.vmem %s0, %s154
        %s156 = smul.u32 16, %s17
        %s157 = smul.u32 2, %s16
      $region28: #{stacked_gru_forward.1} parent=23 // pred_fallthru
        _
    $region24: #{stacked_gru_forward.1} parent=5 // pred_fallthru
      _
    %p158 = scmp.le.s32.totalorder 1, %s9
    %p159 = scmp.lt.s32.totalorder %s9, 3
    %p160 = pnand %p158, %p159
    %p161 = pneg %p160
    // Predicated region
    $region29: #{stacked_gru_forward.1} parent=5 // pred_check
      _
    $region30: #{stacked_gru_forward.1} parent=5 // pred_check_branch
      %163 = sbr.rel (%p160) target = $region32
    $region31: #{stacked_gru_forward.1} parent=5 // pred_region
      %s164 = ssub.s32 %s9, 1
      %s165 = smul.u32 16, %s19
      %s166 = smul.u32 2, %s18
      %p167 = scmp.lt.s32.totalorder %s165, 31
      %s168 = scalar_select %p167, %s165, 31
      %p169 = scmp.lt.s32.totalorder %s166, 1
      %s170 = scalar_select %p169, %s166, 1
      %s171 = smul.addr %s170, 3
      %s172 = smul.addr %s168, 6
      %s173 = sadd.s32 %s171, %s172
      %s174 = smul.addr %s173, 4
      %s175 = scalar_lea.vmem %s0, %s174
      %p176 = pneg %p49
      %p177 = pneg %p46
      %p178 = pneg %p70
      %p179 = pneg %p67
      %p180 = pneg %p91
      %p181 = pneg %p88
      %p182 = pneg %p117
      %p183 = pneg %p114
      %s184 = smul.u32 2, %s18
      %p185 = scmp.lt.s32.totalorder %s184, 1
      %s186 = scalar_select %p185, %s184, 1
      %s187 = smul.addr %s186, 8
      %s188 = scalar_lea.vmem %s3, %s187
      %s189 = smul.u32 16, %s19
      %s190 = smul.u32 2, %s18
      %p191 = scmp.lt.s32.totalorder %s189, 31
      %s192 = scalar_select %p191, %s189, 31
      %p193 = scmp.lt.s32.totalorder %s190, 1
      %s194 = scalar_select %p193, %s190, 1
      %s195 = smul.addr %s194, 3
      %s196 = smul.addr %s192, 6
      %s197 = sadd.s32 %s195, %s196
      %s198 = smul.addr %s197, 4
      %s199 = scalar_lea.vmem %s0, %s198
      %s200 = smul.u32 16, %s19
      %s201 = smul.u32 2, %s18
      %s202 = smul.u32 2, %s18
      %p203 = scmp.lt.s32.totalorder %s202, 1
      %s204 = scalar_select %p203, %s202, 1
      %s205 = smul.addr %s204, 8
      %s206 = scalar_lea.vmem %s3, %s205
      %s207 = smul.u32 2, %s18
      %p208 = scmp.eq.s32.totalorder %s19, 0
      // Predicated region
      $region33: #{stacked_gru_forward.1} parent=31 // pred_check
        %p209 = pneg %p208
      $region34: #{stacked_gru_forward.1} parent=31 // pred_check_branch
        %211 = sbr.rel (%p209) target = $region36
      $region35: #{stacked_gru_forward.1} parent=31 // pred_region
        %212 = vst [vmem:[#allocation2] sm:$0xff] 0.0
        %213 = vst [vmem:[#allocation2 + $0x8] sm:$0xff] 0.0
      $region36: #{stacked_gru_forward.1} parent=31 // pred_fallthru
        _
      %v214 = vld [vmem:[#allocation2] sm:$0xff]
      %v215 = vld [vmem:[#allocation2 + $0x8] sm:$0xff]
      %v216 = vld [vmem:[%s199] sm:$0xff]
      %v217 = vld [vmem:[%s199 + $0x8] sm:$0xf]
      %v218 = vld [vmem:[%s199 + $0xc] sm:$0xff]
      %v219 = vld [vmem:[%s199 + $0x14] sm:$0xf]
      %v220 = vunpack.c.l.bf16 %v216
      %v221 = vunpack.c.h.bf16 %v216
      %v222 = vunpack.c.l.bf16 %v217
      %v223 = vunpack.c.l.bf16 %v218
      %v224 = vunpack.c.h.bf16 %v218
      %v225 = vunpack.c.l.bf16 %v219
      %v226 = vld [vmem:[%s1] sm:$0xff]
      %v227 = vld [vmem:[%s1 + $0x8] sm:$0xff]
      %v228 = vld [vmem:[%s1 + $0x10] sm:$0xff]
      %v229 = vld [vmem:[%s1 + $0x18] sm:$0xff]
      %v230 = vld [vmem:[%s1 + $0x20] sm:$0xff]
      %v231 = vld [vmem:[%s1 + $0x28] sm:$0xff]
      %v232 = vld [vmem:[%s1 + $0x30] sm:$0xff]
      %v233 = vld [vmem:[%s1 + $0x38] sm:$0xff]
      %v234 = vld [vmem:[%s1 + $0x40] sm:$0xff]
      %v235 = vld [vmem:[%s1 + $0x48] sm:$0xff]
      %v236 = vld [vmem:[%s1 + $0x50] sm:$0xff]
      %v237 = vld [vmem:[%s1 + $0x58] sm:$0xff]
      %v238 = vld [vmem:[%s1 + $0x60] sm:$0xff]
      %v239 = vld [vmem:[%s1 + $0x68] sm:$0xff]
      %v240 = vld [vmem:[%s1 + $0x70] sm:$0xff]
      %v241 = vld [vmem:[%s1 + $0x78] sm:$0xff]
      %v242 = vld [vmem:[%s1 + $0x80] sm:$0xff]
      %v243 = vld [vmem:[%s1 + $0x88] sm:$0xff]
      %v244 = vld [vmem:[%s1 + $0x90] sm:$0xff]
      %v245 = vld [vmem:[%s1 + $0x98] sm:$0xff]
      %v246 = vld [vmem:[%s1 + $0xa0] sm:$0xff]
      %v247 = vld [vmem:[%s1 + $0xa8] sm:$0xff]
      %v248 = vld [vmem:[%s1 + $0xb0] sm:$0xff]
      %v249 = vld [vmem:[%s1 + $0xb8] sm:$0xff]
      %v250 = vld [vmem:[%s1 + $0xc0] sm:$0xff]
      %v251 = vld [vmem:[%s1 + $0xc8] sm:$0xff]
      %v252 = vld [vmem:[%s1 + $0xd0] sm:$0xff]
      %v253 = vld [vmem:[%s1 + $0xd8] sm:$0xff]
      %v254 = vld [vmem:[%s1 + $0xe0] sm:$0xff]
      %v255 = vld [vmem:[%s1 + $0xe8] sm:$0xff]
      %v256 = vld [vmem:[%s1 + $0xf0] sm:$0xff]
      %v257 = vld [vmem:[%s1 + $0xf8] sm:$0xff]
      %v258 = vld [vmem:[%s1 + $0x100] sm:$0xff]
      %v259 = vld [vmem:[%s1 + $0x108] sm:$0xff]
      %v260 = vld [vmem:[%s1 + $0x110] sm:$0xff]
      %v261 = vld [vmem:[%s1 + $0x118] sm:$0xff]
      %v262 = vld [vmem:[%s1 + $0x120] sm:$0xff]
      %v263 = vld [vmem:[%s1 + $0x128] sm:$0xff]
      %v264 = vld [vmem:[%s1 + $0x130] sm:$0xff]
      %v265 = vld [vmem:[%s1 + $0x138] sm:$0xff]
      %v266 = vld [vmem:[%s1 + $0x140] sm:$0xff]
      %v267 = vld [vmem:[%s1 + $0x148] sm:$0xff]
      %v268 = vld [vmem:[%s1 + $0x150] sm:$0xff]
      %v269 = vld [vmem:[%s1 + $0x158] sm:$0xff]
      %v270 = vld [vmem:[%s1 + $0x160] sm:$0xff]
      %v271 = vld [vmem:[%s1 + $0x168] sm:$0xff]
      %v272 = vld [vmem:[%s1 + $0x170] sm:$0xff]
      %v273 = vld [vmem:[%s1 + $0x178] sm:$0xff]
      %274 = vmatprep.subr.mxu0 %v227
      %275 = vmatpush1.msra.mxu0 %v226
      %276 = vmatprep.subr.mxu0 %v230
      %277 = vmatpush1.msra.mxu0 %v229
      %278 = vmatprep.subr.mxu0 %v233
      %279 = vmatpush1.msra.mxu0 %v232
      %280 = vmatprep.subr.mxu0 %v236
      %281 = vmatpush1.msra.mxu0 %v235
      %282 = vmatprep.subr.mxu0 %v239
      %283 = vmatpush1.msra.mxu0 %v238
      %284 = vmatprep.subr.mxu0 %v242
      %285 = vmatpush1.msra.mxu0 %v241
      %286 = vmatprep.subr.mxu0 %v245
      %287 = vmatpush1.msra.mxu0 %v244
      %288 = vmatprep.subr.mxu0 %v248
      %289 = vmatpush1.msra.mxu0 %v247
      %290 = vmatprep.subr.mxu0 %v251
      %291 = vmatpush1.msra.mxu0 %v250
      %292 = vmatprep.subr.mxu0 %v254
      %293 = vmatpush1.msra.mxu0 %v253
      %294 = vmatprep.subr.mxu0 %v257
      %295 = vmatpush1.msra.mxu0 %v256
      %296 = vmatprep.subr.mxu0 %v260
      %297 = vmatpush1.msra.mxu0 %v259
      %298 = vmatprep.subr.mxu0 %v263
      %299 = vmatpush1.msra.mxu0 %v262
      %300 = vmatprep.subr.mxu0 %v266
      %301 = vmatpush1.msra.mxu0 %v265
      %302 = vmatprep.subr.mxu0 %v269
      %303 = vmatpush1.msra.mxu0 %v268
      %304 = vmatprep.subr.mxu0 %v272
      %305 = vmatpush1.msra.mxu0 %v271
      %306 = vmatprep.subr.mxu0 0.0
      %307 = vmatpush1.msra.mxu0 0.0
      %308 = vmatprep.subr.mxu0 0.0
      %309 = vmatpush1.msra.mxu0 0.0
      %310 = vmatprep.subr.mxu0 0.0
      %311 = vmatpush1.msra.mxu0 0.0
      %312 = vmatprep.subr.mxu0 0.0
      %313 = vmatpush1.msra.mxu0 0.0
      %314 = vmatprep.subr.mxu0 0.0
      %315 = vmatpush1.msra.mxu0 0.0
      %316 = vmatprep.subr.mxu0 0.0
      %317 = vmatpush1.msra.mxu0 0.0
      %318 = vmatprep.subr.mxu0 0.0
      %319 = vmatpush1.msra.mxu0 0.0
      %320 = vmatprep.subr.mxu0 0.0
      %321 = vmatpush1.msra.mxu0 0.0
      %322 = vmatprep.subr.mxu0 0.0
      %323 = vmatpush1.msra.mxu0 0.0
      %324 = vmatprep.subr.mxu0 0.0
      %325 = vmatpush1.msra.mxu0 0.0
      %326 = vmatprep.subr.mxu0 0.0
      %327 = vmatpush1.msra.mxu0 0.0
      %328 = vmatprep.subr.mxu0 0.0
      %329 = vmatpush1.msra.mxu0 0.0
      %330 = vmatprep.subr.mxu0 0.0
      %331 = vmatpush1.msra.mxu0 0.0
      %332 = vmatprep.subr.mxu0 0.0
      %333 = vmatpush1.msra.mxu0 0.0
      %334 = vmatprep.subr.mxu0 0.0
      %335 = vmatpush1.msra.mxu0 0.0
      %336 = vmatprep.subr.mxu0 0.0
      %337 = vmatpush1.msra.mxu0 0.0
      %338 = vmatprep.mubr.f32.mxu0 0.0
      %339 = vmatmul.mubr.f32.gmra.mrb[0].mxu0 %v214
      %v340 = vpop.f32.mrb[0].mxu0
      %v341 = vadd.f32 0.0, %v340
      %v342 = vpop.f32.mrb[0].mxu0
      %v343 = vadd.f32 0.0, %v342
      %344 = vmatprep.mubr.f32.mxu0 0.0
      %345 = vmatmul.mubr.f32.gmra.mrb[0].mxu0 %v215
      %v346 = vpop.f32.mrb[0].mxu0
      %v347 = vadd.f32 0.0, %v346
      %v348 = vpop.f32.mrb[0].mxu0
      %v349 = vadd.f32 0.0, %v348
      %350 = vdwg.mxu0
      %351 = vmatprep.subr.mxu0 0.0
      %352 = vmatpush1.msra.mxu0 %v228
      %353 = vmatprep.subr.mxu0 0.0
      %354 = vmatpush1.msra.mxu0 %v231
      %355 = vmatprep.subr.mxu0 0.0
      %356 = vmatpush1.msra.mxu0 %v234
      %357 = vmatprep.subr.mxu0 0.0
      %358 = vmatpush1.msra.mxu0 %v237
      %359 = vmatprep.subr.mxu0 0.0
      %360 = vmatpush1.msra.mxu0 %v240
      %361 = vmatprep.subr.mxu0 0.0
      %362 = vmatpush1.msra.mxu0 %v243
      %363 = vmatprep.subr.mxu0 0.0
      %364 = vmatpush1.msra.mxu0 %v246
      %365 = vmatprep.subr.mxu0 0.0
      %366 = vmatpush1.msra.mxu0 %v249
      %367 = vmatprep.subr.mxu0 0.0
      %368 = vmatpush1.msra.mxu0 %v252
      %369 = vmatprep.subr.mxu0 0.0
      %370 = vmatpush1.msra.mxu0 %v255
      %371 = vmatprep.subr.mxu0 0.0
      %372 = vmatpush1.msra.mxu0 %v258
      %373 = vmatprep.subr.mxu0 0.0
      %374 = vmatpush1.msra.mxu0 %v261
      %375 = vmatprep.subr.mxu0 0.0
      %376 = vmatpush1.msra.mxu0 %v264
      %377 = vmatprep.subr.mxu0 0.0
      %378 = vmatpush1.msra.mxu0 %v267
      %379 = vmatprep.subr.mxu0 0.0
      %380 = vmatpush1.msra.mxu0 %v270
      %381 = vmatprep.subr.mxu0 0.0
      %382 = vmatpush1.msra.mxu0 %v273
      %383 = vmatprep.subr.mxu0 0.0
      %384 = vmatpush1.msra.mxu0 0.0
      %385 = vmatprep.subr.mxu0 0.0
      %386 = vmatpush1.msra.mxu0 0.0
      %387 = vmatprep.subr.mxu0 0.0
      %388 = vmatpush1.msra.mxu0 0.0
      %389 = vmatprep.subr.mxu0 0.0
      %390 = vmatpush1.msra.mxu0 0.0
      %391 = vmatprep.subr.mxu0 0.0
      %392 = vmatpush1.msra.mxu0 0.0
      %393 = vmatprep.subr.mxu0 0.0
      %394 = vmatpush1.msra.mxu0 0.0
      %395 = vmatprep.subr.mxu0 0.0
      %396 = vmatpush1.msra.mxu0 0.0
      %397 = vmatprep.subr.mxu0 0.0
      %398 = vmatpush1.msra.mxu0 0.0
      %399 = vmatprep.subr.mxu0 0.0
      %400 = vmatpush1.msra.mxu0 0.0
      %401 = vmatprep.subr.mxu0 0.0
      %402 = vmatpush1.msra.mxu0 0.0
      %403 = vmatprep.subr.mxu0 0.0
      %404 = vmatpush1.msra.mxu0 0.0
      %405 = vmatprep.subr.mxu0 0.0
      %406 = vmatpush1.msra.mxu0 0.0
      %407 = vmatprep.subr.mxu0 0.0
      %408 = vmatpush1.msra.mxu0 0.0
      %409 = vmatprep.subr.mxu0 0.0
      %410 = vmatpush1.msra.mxu0 0.0
      %411 = vmatprep.subr.mxu0 0.0
      %412 = vmatpush1.msra.mxu0 0.0
      %413 = vmatprep.subr.mxu0 0.0
      %414 = vmatpush1.msra.mxu0 0.0
      %415 = vmatprep.mubr.f32.mxu0 0.0
      %416 = vmatmul.mubr.f32.gmra.mrb[0].mxu0 %v214
      %v417 = vpop.f32.mrb[0].mxu0
      %v418 = vadd.f32 0.0, %v417
      %v419 = vpop.f32.mrb[0].mxu0
      %420 = vmatprep.mubr.f32.mxu0 0.0
      %421 = vmatmul.mubr.f32.gmra.mrb[0].mxu0 %v215
      %v422 = vpop.f32.mrb[0].mxu0
      %v423 = vadd.f32 0.0, %v422
      %v424 = vpop.f32.mrb[0].mxu0
      %425 = vdwg.mxu0
      %v426 = vadd.f32 %v220, %v341
      %v427 = vadd.f32 %v223, %v347
      %v428 = vxor.u32 %v426, 2147483648
      %v429 = vxor.u32 %v427, 2147483648
      %v430 = vmul.f32 %v428, 1.442695
      %v431 = vpow.pop %v430
      %v432 = vmul.f32 %v429, 1.442695
      %v433 = vpow.pop %v432
      %v434 = vadd.f32 %v431, 1.0
      %v435 = vadd.f32 %v433, 1.0
      %v436 = vrcp.pop %v434
      %v437 = vmul.f32 1.0, %v436
      %v438 = vrcp.pop %v435
      %v439 = vmul.f32 1.0, %v438
      %v440 = vadd.f32 %v221, %v343
      %v441 = vadd.f32 %v224, %v349
      %v442 = vxor.u32 %v440, 2147483648
      %v443 = vxor.u32 %v441, 2147483648
      %v444 = vmul.f32 %v442, 1.442695
      %v445 = vpow.pop %v444
      %v446 = vmul.f32 %v443, 1.442695
      %v447 = vpow.pop %v446
      %v448 = vadd.f32 %v445, 1.0
      %v449 = vadd.f32 %v447, 1.0
      %v450 = vrcp.pop %v448
      %v451 = vmul.f32 1.0, %v450
      %v452 = vrcp.pop %v449
      %v453 = vmul.f32 1.0, %v452
      %v454 = vld [vmem:[%s2] sm:$0x1]
      %v456 = vlaneseq
      %v457 = vshrl.u32 %v456, 7
      %v458 = vsub.s32 0, %v457
      %v459 = vrot.slane %v454, %v458
      %v461 = vadd.f32 %v418, %v459
      %v462 = vadd.f32 %v423, %v459
      %v463 = vmul.f32 %v437, %v461
      %v464 = vmul.f32 %v439, %v462
      %v465 = vadd.f32 %v222, %v463
      %v466 = vadd.f32 %v225, %v464
      %v467 = vtanh.pop %v465
      %v468 = vtanh.pop %v466
      %v469 = vsub.f32 1.0, %v451
      %v470 = vsub.f32 1.0, %v453
      %v471 = vmul.f32 %v469, %v467
      %v472 = vmul.f32 %v470, %v468
      %v473 = vmul.f32 %v451, %v214
      %v474 = vmul.f32 %v453, %v215
      %v475 = vadd.f32 %v471, %v473
      %v476 = vadd.f32 %v472, %v474
      %s477 = scalar_lea.vmem %s199, 24
      %v478 = vld [vmem:[%s477] sm:$0xff]
      %v479 = vld [vmem:[%s477 + $0x8] sm:$0xf]
      %v480 = vld [vmem:[%s477 + $0xc] sm:$0xff]
      %v481 = vld [vmem:[%s477 + $0x14] sm:$0xf]
      %v482 = vunpack.c.l.bf16 %v478
      %v483 = vunpack.c.h.bf16 %v478
      %v484 = vunpack.c.l.bf16 %v479
      %v485 = vunpack.c.l.bf16 %v480
      %v486 = vunpack.c.h.bf16 %v480
      %v487 = vunpack.c.l.bf16 %v481
      %488 = vmatprep.subr.mxu0 %v227
      %489 = vmatpush1.msra.mxu0 %v226
      %490 = vmatprep.subr.mxu0 %v230
      %491 = vmatpush1.msra.mxu0 %v229
      %492 = vmatprep.subr.mxu0 %v233
      %493 = vmatpush1.msra.mxu0 %v232
      %494 = vmatprep.subr.mxu0 %v236
      %495 = vmatpush1.msra.mxu0 %v235
      %496 = vmatprep.subr.mxu0 %v239
      %497 = vmatpush1.msra.mxu0 %v238
      %498 = vmatprep.subr.mxu0 %v242
      %499 = vmatpush1.msra.mxu0 %v241
      %500 = vmatprep.subr.mxu0 %v245
      %501 = vmatpush1.msra.mxu0 %v244
      %502 = vmatprep.subr.mxu0 %v248
      %503 = vmatpush1.msra.mxu0 %v247
      %504 = vmatprep.subr.mxu0 %v251
      %505 = vmatpush1.msra.mxu0 %v250
      %506 = vmatprep.subr.mxu0 %v254
      %507 = vmatpush1.msra.mxu0 %v253
      %508 = vmatprep.subr.mxu0 %v257
      %509 = vmatpush1.msra.mxu0 %v256
      %510 = vmatprep.subr.mxu0 %v260
      %511 = vmatpush1.msra.mxu0 %v259
      %512 = vmatprep.subr.mxu0 %v263
      %513 = vmatpush1.msra.mxu0 %v262
      %514 = vmatprep.subr.mxu0 %v266
      %515 = vmatpush1.msra.mxu0 %v265
      %516 = vmatprep.subr.mxu0 %v269
      %517 = vmatpush1.msra.mxu0 %v268
      %518 = vmatprep.subr.mxu0 %v272
      %519 = vmatpush1.msra.mxu0 %v271
      %520 = vmatprep.subr.mxu0 0.0
      %521 = vmatpush1.msra.mxu0 0.0
      %522 = vmatprep.subr.mxu0 0.0
      %523 = vmatpush1.msra.mxu0 0.0
      %524 = vmatprep.subr.mxu0 0.0
      %525 = vmatpush1.msra.mxu0 0.0
      %526 = vmatprep.subr.mxu0 0.0
      %527 = vmatpush1.msra.mxu0 0.0
      %528 = vmatprep.subr.mxu0 0.0
      %529 = vmatpush1.msra.mxu0 0.0
      %530 = vmatprep.subr.mxu0 0.0
      %531 = vmatpush1.msra.mxu0 0.0
      %532 = vmatprep.subr.mxu0 0.0
      %533 = vmatpush1.msra.mxu0 0.0
      %534 = vmatprep.subr.mxu0 0.0
      %535 = vmatpush1.msra.mxu0 0.0
      %536 = vmatprep.subr.mxu0 0.0
      %537 = vmatpush1.msra.mxu0 0.0
      %538 = vmatprep.subr.mxu0 0.0
      %539 = vmatpush1.msra.mxu0 0.0
      %540 = vmatprep.subr.mxu0 0.0
      %541 = vmatpush1.msra.mxu0 0.0
      %542 = vmatprep.subr.mxu0 0.0
      %543 = vmatpush1.msra.mxu0 0.0
      %544 = vmatprep.subr.mxu0 0.0
      %545 = vmatpush1.msra.mxu0 0.0
      %546 = vmatprep.subr.mxu0 0.0
      %547 = vmatpush1.msra.mxu0 0.0
      %548 = vmatprep.subr.mxu0 0.0
      %549 = vmatpush1.msra.mxu0 0.0
      %550 = vmatprep.subr.mxu0 0.0
      %551 = vmatpush1.msra.mxu0 0.0
      %552 = vmatprep.mubr.f32.mxu0 0.0
      %553 = vmatmul.mubr.f32.gmra.mrb[0].mxu0 %v475
      %v554 = vpop.f32.mrb[0].mxu0
      %v555 = vadd.f32 0.0, %v554
      %v556 = vpop.f32.mrb[0].mxu0
      %v557 = vadd.f32 0.0, %v556
      %558 = vmatprep.mubr.f32.mxu0 0.0
      %559 = vmatmul.mubr.f32.gmra.mrb[0].mxu0 %v476
      %v560 = vpop.f32.mrb[0].mxu0
      %v561 = vadd.f32 0.0, %v560
      %v562 = vpop.f32.mrb[0].mxu0
      %v563 = vadd.f32 0.0, %v562
      %564 = vdwg.mxu0
      %565 = vmatprep.subr.mxu0 0.0
      %566 = vmatpush1.msra.mxu0 %v228
      %567 = vmatprep.subr.mxu0 0.0
      %568 = vmatpush1.msra.mxu0 %v231
      %569 = vmatprep.subr.mxu0 0.0
      %570 = vmatpush1.msra.mxu0 %v234
      %571 = vmatprep.subr.mxu0 0.0
      %572 = vmatpush1.msra.mxu0 %v237
      %573 = vmatprep.subr.mxu0 0.0
      %574 = vmatpush1.msra.mxu0 %v240
      %575 = vmatprep.subr.mxu0 0.0
      %576 = vmatpush1.msra.mxu0 %v243
      %577 = vmatprep.subr.mxu0 0.0
      %578 = vmatpush1.msra.mxu0 %v246
      %579 = vmatprep.subr.mxu0 0.0
      %580 = vmatpush1.msra.mxu0 %v249
      %581 = vmatprep.subr.mxu0 0.0
      %582 = vmatpush1.msra.mxu0 %v252
      %583 = vmatprep.subr.mxu0 0.0
      %584 = vmatpush1.msra.mxu0 %v255
      %585 = vmatprep.subr.mxu0 0.0
      %586 = vmatpush1.msra.mxu0 %v258
      %587 = vmatprep.subr.mxu0 0.0
      %588 = vmatpush1.msra.mxu0 %v261
      %589 = vmatprep.subr.mxu0 0.0
      %590 = vmatpush1.msra.mxu0 %v264
      %591 = vmatprep.subr.mxu0 0.0
      %592 = vmatpush1.msra.mxu0 %v267
      %593 = vmatprep.subr.mxu0 0.0
      %594 = vmatpush1.msra.mxu0 %v270
      %595 = vmatprep.subr.mxu0 0.0
      %596 = vmatpush1.msra.mxu0 %v273
      %597 = vmatprep.subr.mxu0 0.0
      %598 = vmatpush1.msra.mxu0 0.0
      %599 = vmatprep.subr.mxu0 0.0
      %600 = vmatpush1.msra.mxu0 0.0
      %601 = vmatprep.subr.mxu0 0.0
      %602 = vmatpush1.msra.mxu0 0.0
      %603 = vmatprep.subr.mxu0 0.0
      %604 = vmatpush1.msra.mxu0 0.0
      %605 = vmatprep.subr.mxu0 0.0
      %606 = vmatpush1.msra.mxu0 0.0
      %607 = vmatprep.subr.mxu0 0.0
      %608 = vmatpush1.msra.mxu0 0.0
      %609 = vmatprep.subr.mxu0 0.0
      %610 = vmatpush1.msra.mxu0 0.0
      %611 = vmatprep.subr.mxu0 0.0
      %612 = vmatpush1.msra.mxu0 0.0
      %613 = vmatprep.subr.mxu0 0.0
      %614 = vmatpush1.msra.mxu0 0.0
      %615 = vmatprep.subr.mxu0 0.0
      %616 = vmatpush1.msra.mxu0 0.0
      %617 = vmatprep.subr.mxu0 0.0
      %618 = vmatpush1.msra.mxu0 0.0
      %619 = vmatprep.subr.mxu0 0.0
      %620 = vmatpush1.msra.mxu0 0.0
      %621 = vmatprep.subr.mxu0 0.0
      %622 = vmatpush1.msra.mxu0 0.0
      %623 = vmatprep.subr.mxu0 0.0
      %624 = vmatpush1.msra.mxu0 0.0
      %625 = vmatprep.subr.mxu0 0.0
      %626 = vmatpush1.msra.mxu0 0.0
      %627 = vmatprep.subr.mxu0 0.0
      %628 = vmatpush1.msra.mxu0 0.0
      %629 = vmatprep.mubr.f32.mxu0 0.0
      %630 = vmatmul.mubr.f32.gmra.mrb[0].mxu0 %v475
      %v631 = vpop.f32.mrb[0].mxu0
      %v632 = vadd.f32 0.0, %v631
      %v633 = vpop.f32.mrb[0].mxu0
      %634 = vmatprep.mubr.f32.mxu0 0.0
      %635 = vmatmul.mubr.f32.gmra.mrb[0].mxu0 %v476
      %v636 = vpop.f32.mrb[0].mxu0
      %v637 = vadd.f32 0.0, %v636
      %v638 = vpop.f32.mrb[0].mxu0
      %639 = vdwg.mxu0
      %v640 = vadd.f32 %v482, %v555
      %v641 = vadd.f32 %v485, %v561
      %v642 = vxor.u32 %v640, 2147483648
      %v643 = vxor.u32 %v641, 2147483648
      %v644 = vmul.f32 %v642, 1.442695
      %v645 = vpow.pop %v644
      %v646 = vmul.f32 %v643, 1.442695
      %v647 = vpow.pop %v646
      %v648 = vadd.f32 %v645, 1.0
      %v649 = vadd.f32 %v647, 1.0
      %v650 = vrcp.pop %v648
      %v651 = vmul.f32 1.0, %v650
      %v652 = vrcp.pop %v649
      %v653 = vmul.f32 1.0, %v652
      %v654 = vadd.f32 %v483, %v557
      %v655 = vadd.f32 %v486, %v563
      %v656 = vxor.u32 %v654, 2147483648
      %v657 = vxor.u32 %v655, 2147483648
      %v658 = vmul.f32 %v656, 1.442695
      %v659 = vpow.pop %v658
      %v660 = vmul.f32 %v657, 1.442695
      %v661 = vpow.pop %v660
      %v662 = vadd.f32 %v659, 1.0
      %v663 = vadd.f32 %v661, 1.0
      %v664 = vrcp.pop %v662
      %v665 = vmul.f32 1.0, %v664
      %v666 = vrcp.pop %v663
      %v667 = vmul.f32 1.0, %v666
      %v668 = vadd.f32 %v632, %v459
      %v669 = vadd.f32 %v637, %v459
      %v670 = vmul.f32 %v651, %v668
      %v671 = vmul.f32 %v653, %v669
      %v672 = vadd.f32 %v484, %v670
      %v673 = vadd.f32 %v487, %v671
      %v674 = vtanh.pop %v672
      %v675 = vtanh.pop %v673
      %v676 = vsub.f32 1.0, %v665
      %v677 = vsub.f32 1.0, %v667
      %v678 = vmul.f32 %v676, %v674
      %v679 = vmul.f32 %v677, %v675
      %v680 = vmul.f32 %v665, %v475
      %v681 = vmul.f32 %v667, %v476
      %v682 = vadd.f32 %v678, %v680
      %v683 = vadd.f32 %v679, %v681
      %s684 = scalar_lea.vmem %s199, 48
      %v685 = vld [vmem:[%s684] sm:$0xff]
      %v686 = vld [vmem:[%s684 + $0x8] sm:$0xf]
      %v687 = vld [vmem:[%s684 + $0xc] sm:$0xff]
      %v688 = vld [vmem:[%s684 + $0x14] sm:$0xf]
      %v689 = vunpack.c.l.bf16 %v685
      %v690 = vunpack.c.h.bf16 %v685
      %v691 = vunpack.c.l.bf16 %v686
      %v692 = vunpack.c.l.bf16 %v687
      %v693 = vunpack.c.h.bf16 %v687
      %v694 = vunpack.c.l.bf16 %v688
      %695 = vmatprep.subr.mxu0 %v227
      %696 = vmatpush1.msra.mxu0 %v226
      %697 = vmatprep.subr.mxu0 %v230
      %698 = vmatpush1.msra.mxu0 %v229
      %699 = vmatprep.subr.mxu0 %v233
      %700 = vmatpush1.msra.mxu0 %v232
      %701 = vmatprep.subr.mxu0 %v236
      %702 = vmatpush1.msra.mxu0 %v235
      %703 = vmatprep.subr.mxu0 %v239
      %704 = vmatpush1.msra.mxu0 %v238
      %705 = vmatprep.subr.mxu0 %v242
      %706 = vmatpush1.msra.mxu0 %v241
      %707 = vmatprep.subr.mxu0 %v245
      %708 = vmatpush1.msra.mxu0 %v244
      %709 = vmatprep.subr.mxu0 %v248
      %710 = vmatpush1.msra.mxu0 %v247
      %711 = vmatprep.subr.mxu0 %v251
      %712 = vmatpush1.msra.mxu0 %v250
      %713 = vmatprep.subr.mxu0 %v254
      %714 = vmatpush1.msra.mxu0 %v253
      %715 = vmatprep.subr.mxu0 %v257
      %716 = vmatpush1.msra.mxu0 %v256
      %717 = vmatprep.subr.mxu0 %v260
      %718 = vmatpush1.msra.mxu0 %v259
      %719 = vmatprep.subr.mxu0 %v263
      %720 = vmatpush1.msra.mxu0 %v262
      %721 = vmatprep.subr.mxu0 %v266
      %722 = vmatpush1.msra.mxu0 %v265
      %723 = vmatprep.subr.mxu0 %v269
      %724 = vmatpush1.msra.mxu0 %v268
      %725 = vmatprep.subr.mxu0 %v272
      %726 = vmatpush1.msra.mxu0 %v271
      %727 = vmatprep.subr.mxu0 0.0
      %728 = vmatpush1.msra.mxu0 0.0
      %729 = vmatprep.subr.mxu0 0.0
      %730 = vmatpush1.msra.mxu0 0.0
      %731 = vmatprep.subr.mxu0 0.0
      %732 = vmatpush1.msra.mxu0 0.0
      %733 = vmatprep.subr.mxu0 0.0
      %734 = vmatpush1.msra.mxu0 0.0
      %735 = vmatprep.subr.mxu0 0.0
      %736 = vmatpush1.msra.mxu0 0.0
      %737 = vmatprep.subr.mxu0 0.0
      %738 = vmatpush1.msra.mxu0 0.0
      %739 = vmatprep.subr.mxu0 0.0
      %740 = vmatpush1.msra.mxu0 0.0
      %741 = vmatprep.subr.mxu0 0.0
      %742 = vmatpush1.msra.mxu0 0.0
      %743 = vmatprep.subr.mxu0 0.0
      %744 = vmatpush1.msra.mxu0 0.0
      %745 = vmatprep.subr.mxu0 0.0
      %746 = vmatpush1.msra.mxu0 0.0
      %747 = vmatprep.subr.mxu0 0.0
      %748 = vmatpush1.msra.mxu0 0.0
      %749 = vmatprep.subr.mxu0 0.0
      %750 = vmatpush1.msra.mxu0 0.0
      %751 = vmatprep.subr.mxu0 0.0
      %752 = vmatpush1.msra.mxu0 0.0
      %753 = vmatprep.subr.mxu0 0.0
      %754 = vmatpush1.msra.mxu0 0.0
      %755 = vmatprep.subr.mxu0 0.0
      %756 = vmatpush1.msra.mxu0 0.0
      %757 = vmatprep.subr.mxu0 0.0
      %758 = vmatpush1.msra.mxu0 0.0
      %759 = vmatprep.mubr.f32.mxu0 0.0
      %760 = vmatmul.mubr.f32.gmra.mrb[0].mxu0 %v682
      %v761 = vpop.f32.mrb[0].mxu0
      %v762 = vadd.f32 0.0, %v761
      %v763 = vpop.f32.mrb[0].mxu0
      %v764 = vadd.f32 0.0, %v763
      %765 = vmatprep.mubr.f32.mxu0 0.0
      %766 = vmatmul.mubr.f32.gmra.mrb[0].mxu0 %v683
      %v767 = vpop.f32.mrb[0].mxu0
      %v768 = vadd.f32 0.0, %v767
      %v769 = vpop.f32.mrb[0].mxu0
      %v770 = vadd.f32 0.0, %v769
      %771 = vdwg.mxu0
      %772 = vmatprep.subr.mxu0 0.0
      %773 = vmatpush1.msra.mxu0 %v228
      %774 = vmatprep.subr.mxu0 0.0
      %775 = vmatpush1.msra.mxu0 %v231
      %776 = vmatprep.subr.mxu0 0.0
      %777 = vmatpush1.msra.mxu0 %v234
      %778 = vmatprep.subr.mxu0 0.0
      %779 = vmatpush1.msra.mxu0 %v237
      %780 = vmatprep.subr.mxu0 0.0
      %781 = vmatpush1.msra.mxu0 %v240
      %782 = vmatprep.subr.mxu0 0.0
      %783 = vmatpush1.msra.mxu0 %v243
      %784 = vmatprep.subr.mxu0 0.0
      %785 = vmatpush1.msra.mxu0 %v246
      %786 = vmatprep.subr.mxu0 0.0
      %787 = vmatpush1.msra.mxu0 %v249
      %788 = vmatprep.subr.mxu0 0.0
      %789 = vmatpush1.msra.mxu0 %v252
      %790 = vmatprep.subr.mxu0 0.0
      %791 = vmatpush1.msra.mxu0 %v255
      %792 = vmatprep.subr.mxu0 0.0
      %793 = vmatpush1.msra.mxu0 %v258
      %794 = vmatprep.subr.mxu0 0.0
      %795 = vmatpush1.msra.mxu0 %v261
      %796 = vmatprep.subr.mxu0 0.0
      %797 = vmatpush1.msra.mxu0 %v264
      %798 = vmatprep.subr.mxu0 0.0
      %799 = vmatpush1.msra.mxu0 %v267
      %800 = vmatprep.subr.mxu0 0.0
      %801 = vmatpush1.msra.mxu0 %v270
      %802 = vmatprep.subr.mxu0 0.0
      %803 = vmatpush1.msra.mxu0 %v273
      %804 = vmatprep.subr.mxu0 0.0
      %805 = vmatpush1.msra.mxu0 0.0
      %806 = vmatprep.subr.mxu0 0.0
      %807 = vmatpush1.msra.mxu0 0.0
      %808 = vmatprep.subr.mxu0 0.0
      %809 = vmatpush1.msra.mxu0 0.0
      %810 = vmatprep.subr.mxu0 0.0
      %811 = vmatpush1.msra.mxu0 0.0
      %812 = vmatprep.subr.mxu0 0.0
      %813 = vmatpush1.msra.mxu0 0.0
      %814 = vmatprep.subr.mxu0 0.0
      %815 = vmatpush1.msra.mxu0 0.0
      %816 = vmatprep.subr.mxu0 0.0
      %817 = vmatpush1.msra.mxu0 0.0
      %818 = vmatprep.subr.mxu0 0.0
      %819 = vmatpush1.msra.mxu0 0.0
      %820 = vmatprep.subr.mxu0 0.0
      %821 = vmatpush1.msra.mxu0 0.0
      %822 = vmatprep.subr.mxu0 0.0
      %823 = vmatpush1.msra.mxu0 0.0
      %824 = vmatprep.subr.mxu0 0.0
      %825 = vmatpush1.msra.mxu0 0.0
      %826 = vmatprep.subr.mxu0 0.0
      %827 = vmatpush1.msra.mxu0 0.0
      %828 = vmatprep.subr.mxu0 0.0
      %829 = vmatpush1.msra.mxu0 0.0
      %830 = vmatprep.subr.mxu0 0.0
      %831 = vmatpush1.msra.mxu0 0.0
      %832 = vmatprep.subr.mxu0 0.0
      %833 = vmatpush1.msra.mxu0 0.0
      %834 = vmatprep.subr.mxu0 0.0
      %835 = vmatpush1.msra.mxu0 0.0
      %836 = vmatprep.mubr.f32.mxu0 0.0
      %837 = vmatmul.mubr.f32.gmra.mrb[0].mxu0 %v682
      %v838 = vpop.f32.mrb[0].mxu0
      %v839 = vadd.f32 0.0, %v838
      %v840 = vpop.f32.mrb[0].mxu0
      %841 = vmatprep.mubr.f32.mxu0 0.0
      %842 = vmatmul.mubr.f32.gmra.mrb[0].mxu0 %v683
      %v843 = vpop.f32.mrb[0].mxu0
      %v844 = vadd.f32 0.0, %v843
      %v845 = vpop.f32.mrb[0].mxu0
      %846 = vdwg.mxu0
      %v847 = vadd.f32 %v689, %v762
      %v848 = vadd.f32 %v692, %v768
      %v849 = vxor.u32 %v847, 2147483648
      %v850 = vxor.u32 %v848, 2147483648
      %v851 = vmul.f32 %v849, 1.442695
      %v852 = vpow.pop %v851
      %v853 = vmul.f32 %v850, 1.442695
      %v854 = vpow.pop %v853
      %v855 = vadd.f32 %v852, 1.0
      %v856 = vadd.f32 %v854, 1.0
      %v857 = vrcp.pop %v855
      %v858 = vmul.f32 1.0, %v857
      %v859 = vrcp.pop %v856
      %v860 = vmul.f32 1.0, %v859
      %v861 = vadd.f32 %v690, %v764
      %v862 = vadd.f32 %v693, %v770
      %v863 = vxor.u32 %v861, 2147483648
      %v864 = vxor.u32 %v862, 2147483648
      %v865 = vmul.f32 %v863, 1.442695
      %v866 = vpow.pop %v865
      %v867 = vmul.f32 %v864, 1.442695
      %v868 = vpow.pop %v867
      %v869 = vadd.f32 %v866, 1.0
      %v870 = vadd.f32 %v868, 1.0
      %v871 = vrcp.pop %v869
      %v872 = vmul.f32 1.0, %v871
      %v873 = vrcp.pop %v870
      %v874 = vmul.f32 1.0, %v873
      %v875 = vadd.f32 %v839, %v459
      %v876 = vadd.f32 %v844, %v459
      %v877 = vmul.f32 %v858, %v875
      %v878 = vmul.f32 %v860, %v876
      %v879 = vadd.f32 %v691, %v877
      %v880 = vadd.f32 %v694, %v878
      %v881 = vtanh.pop %v879
      %v882 = vtanh.pop %v880
      %v883 = vsub.f32 1.0, %v872
      %v884 = vsub.f32 1.0, %v874
      %v885 = vmul.f32 %v883, %v881
      %v886 = vmul.f32 %v884, %v882
      %v887 = vmul.f32 %v872, %v682
      %v888 = vmul.f32 %v874, %v683
      %v889 = vadd.f32 %v885, %v887
      %v890 = vadd.f32 %v886, %v888
      %s891 = scalar_lea.vmem %s199, 72
      %v892 = vld [vmem:[%s891] sm:$0xff]
      %v893 = vld [vmem:[%s891 + $0x8] sm:$0xf]
      %v894 = vld [vmem:[%s891 + $0xc] sm:$0xff]
      %v895 = vld [vmem:[%s891 + $0x14] sm:$0xf]
      %v896 = vunpack.c.l.bf16 %v892
      %v897 = vunpack.c.h.bf16 %v892
      %v898 = vunpack.c.l.bf16 %v893
      %v899 = vunpack.c.l.bf16 %v894
      %v900 = vunpack.c.h.bf16 %v894
      %v901 = vunpack.c.l.bf16 %v895
      %902 = vmatprep.subr.mxu0 %v227
      %903 = vmatpush1.msra.mxu0 %v226
      %904 = vmatprep.subr.mxu0 %v230
      %905 = vmatpush1.msra.mxu0 %v229
      %906 = vmatprep.subr.mxu0 %v233
      %907 = vmatpush1.msra.mxu0 %v232
      %908 = vmatprep.subr.mxu0 %v236
      %909 = vmatpush1.msra.mxu0 %v235
      %910 = vmatprep.subr.mxu0 %v239
      %911 = vmatpush1.msra.mxu0 %v238
      %912 = vmatprep.subr.mxu0 %v242
      %913 = vmatpush1.msra.mxu0 %v241
      %914 = vmatprep.subr.mxu0 %v245
      %915 = vmatpush1.msra.mxu0 %v244
      %916 = vmatprep.subr.mxu0 %v248
      %917 = vmatpush1.msra.mxu0 %v247
      %918 = vmatprep.subr.mxu0 %v251
      %919 = vmatpush1.msra.mxu0 %v250
      %920 = vmatprep.subr.mxu0 %v254
      %921 = vmatpush1.msra.mxu0 %v253
      %922 = vmatprep.subr.mxu0 %v257
      %923 = vmatpush1.msra.mxu0 %v256
      %924 = vmatprep.subr.mxu0 %v260
      %925 = vmatpush1.msra.mxu0 %v259
      %926 = vmatprep.subr.mxu0 %v263
      %927 = vmatpush1.msra.mxu0 %v262
      %928 = vmatprep.subr.mxu0 %v266
      %929 = vmatpush1.msra.mxu0 %v265
      %930 = vmatprep.subr.mxu0 %v269
      %931 = vmatpush1.msra.mxu0 %v268
      %932 = vmatprep.subr.mxu0 %v272
      %933 = vmatpush1.msra.mxu0 %v271
      %934 = vmatprep.subr.mxu0 0.0
      %935 = vmatpush1.msra.mxu0 0.0
      %936 = vmatprep.subr.mxu0 0.0
      %937 = vmatpush1.msra.mxu0 0.0
      %938 = vmatprep.subr.mxu0 0.0
      %939 = vmatpush1.msra.mxu0 0.0
      %940 = vmatprep.subr.mxu0 0.0
      %941 = vmatpush1.msra.mxu0 0.0
      %942 = vmatprep.subr.mxu0 0.0
      %943 = vmatpush1.msra.mxu0 0.0
      %944 = vmatprep.subr.mxu0 0.0
      %945 = vmatpush1.msra.mxu0 0.0
      %946 = vmatprep.subr.mxu0 0.0
      %947 = vmatpush1.msra.mxu0 0.0
      %948 = vmatprep.subr.mxu0 0.0
      %949 = vmatpush1.msra.mxu0 0.0
      %950 = vmatprep.subr.mxu0 0.0
      %951 = vmatpush1.msra.mxu0 0.0
      %952 = vmatprep.subr.mxu0 0.0
      %953 = vmatpush1.msra.mxu0 0.0
      %954 = vmatprep.subr.mxu0 0.0
      %955 = vmatpush1.msra.mxu0 0.0
      %956 = vmatprep.subr.mxu0 0.0
      %957 = vmatpush1.msra.mxu0 0.0
      %958 = vmatprep.subr.mxu0 0.0
      %959 = vmatpush1.msra.mxu0 0.0
      %960 = vmatprep.subr.mxu0 0.0
      %961 = vmatpush1.msra.mxu0 0.0
      %962 = vmatprep.subr.mxu0 0.0
      %963 = vmatpush1.msra.mxu0 0.0
      %964 = vmatprep.subr.mxu0 0.0
      %965 = vmatpush1.msra.mxu0 0.0
      %966 = vmatprep.mubr.f32.mxu0 0.0
      %967 = vmatmul.mubr.f32.gmra.mrb[0].mxu0 %v889
      %v968 = vpop.f32.mrb[0].mxu0
      %v969 = vadd.f32 0.0, %v968
      %v970 = vpop.f32.mrb[0].mxu0
      %v971 = vadd.f32 0.0, %v970
      %972 = vmatprep.mubr.f32.mxu0 0.0
      %973 = vmatmul.mubr.f32.gmra.mrb[0].mxu0 %v890
      %v974 = vpop.f32.mrb[0].mxu0
      %v975 = vadd.f32 0.0, %v974
      %v976 = vpop.f32.mrb[0].mxu0
      %v977 = vadd.f32 0.0, %v976
      %978 = vdwg.mxu0
      %979 = vmatprep.subr.mxu0 0.0
      %980 = vmatpush1.msra.mxu0 %v228
      %981 = vmatprep.subr.mxu0 0.0
      %982 = vmatpush1.msra.mxu0 %v231
      %983 = vmatprep.subr.mxu0 0.0
      %984 = vmatpush1.msra.mxu0 %v234
      %985 = vmatprep.subr.mxu0 0.0
      %986 = vmatpush1.msra.mxu0 %v237
      %987 = vmatprep.subr.mxu0 0.0
      %988 = vmatpush1.msra.mxu0 %v240
      %989 = vmatprep.subr.mxu0 0.0
      %990 = vmatpush1.msra.mxu0 %v243
      %991 = vmatprep.subr.mxu0 0.0
      %992 = vmatpush1.msra.mxu0 %v246
      %993 = vmatprep.subr.mxu0 0.0
      %994 = vmatpush1.msra.mxu0 %v249
      %995 = vmatprep.subr.mxu0 0.0
      %996 = vmatpush1.msra.mxu0 %v252
      %997 = vmatprep.subr.mxu0 0.0
      %998 = vmatpush1.msra.mxu0 %v255
      %999 = vmatprep.subr.mxu0 0.0
      %1000 = vmatpush1.msra.mxu0 %v258
      %1001 = vmatprep.subr.mxu0 0.0
      %1002 = vmatpush1.msra.mxu0 %v261
      %1003 = vmatprep.subr.mxu0 0.0
      %1004 = vmatpush1.msra.mxu0 %v264
      %1005 = vmatprep.subr.mxu0 0.0
      %1006 = vmatpush1.msra.mxu0 %v267
      %1007 = vmatprep.subr.mxu0 0.0
      %1008 = vmatpush1.msra.mxu0 %v270
      %1009 = vmatprep.subr.mxu0 0.0
      %1010 = vmatpush1.msra.mxu0 %v273
      %1011 = vmatprep.subr.mxu0 0.0
      %1012 = vmatpush1.msra.mxu0 0.0
      %1013 = vmatprep.subr.mxu0 0.0
      %1014 = vmatpush1.msra.mxu0 0.0
      %1015 = vmatprep.subr.mxu0 0.0
      %1016 = vmatpush1.msra.mxu0 0.0
      %1017 = vmatprep.subr.mxu0 0.0
      %1018 = vmatpush1.msra.mxu0 0.0
      %1019 = vmatprep.subr.mxu0 0.0
      %1020 = vmatpush1.msra.mxu0 0.0
      %1021 = vmatprep.subr.mxu0 0.0
      %1022 = vmatpush1.msra.mxu0 0.0
      %1023 = vmatprep.subr.mxu0 0.0
      %1024 = vmatpush1.msra.mxu0 0.0
      %1025 = vmatprep.subr.mxu0 0.0
      %1026 = vmatpush1.msra.mxu0 0.0
      %1027 = vmatprep.subr.mxu0 0.0
      %1028 = vmatpush1.msra.mxu0 0.0
      %1029 = vmatprep.subr.mxu0 0.0
      %1030 = vmatpush1.msra.mxu0 0.0
      %1031 = vmatprep.subr.mxu0 0.0
      %1032 = vmatpush1.msra.mxu0 0.0
      %1033 = vmatprep.subr.mxu0 0.0
      %1034 = vmatpush1.msra.mxu0 0.0
      %1035 = vmatprep.subr.mxu0 0.0
      %1036 = vmatpush1.msra.mxu0 0.0
      %1037 = vmatprep.subr.mxu0 0.0
      %1038 = vmatpush1.msra.mxu0 0.0
      %1039 = vmatprep.subr.mxu0 0.0
      %1040 = vmatpush1.msra.mxu0 0.0
      %1041 = vmatprep.subr.mxu0 0.0
      %1042 = vmatpush1.msra.mxu0 0.0
      %1043 = vmatprep.mubr.f32.mxu0 0.0
      %1044 = vmatmul.mubr.f32.gmra.mrb[0].mxu0 %v889
      %v1045 = vpop.f32.mrb[0].mxu0
      %v1046 = vadd.f32 0.0, %v1045
      %v1047 = vpop.f32.mrb[0].mxu0
      %1048 = vmatprep.mubr.f32.mxu0 0.0
      %1049 = vmatmul.mubr.f32.gmra.mrb[0].mxu0 %v890
      %v1050 = vpop.f32.mrb[0].mxu0
      %v1051 = vadd.f32 0.0, %v1050
      %v1052 = vpop.f32.mrb[0].mxu0
      %1053 = vdwg.mxu0
      %v1054 = vadd.f32 %v896, %v969
      %v1055 = vadd.f32 %v899, %v975
      %v1056 = vxor.u32 %v1054, 2147483648
      %v1057 = vxor.u32 %v1055, 2147483648
      %v1058 = vmul.f32 %v1056, 1.442695
      %v1059 = vpow.pop %v1058
      %v1060 = vmul.f32 %v1057, 1.442695
      %v1061 = vpow.pop %v1060
      %v1062 = vadd.f32 %v1059, 1.0
      %v1063 = vadd.f32 %v1061, 1.0
      %v1064 = vrcp.pop %v1062
      %v1065 = vmul.f32 1.0, %v1064
      %v1066 = vrcp.pop %v1063
      %v1067 = vmul.f32 1.0, %v1066
      %v1068 = vadd.f32 %v897, %v971
      %v1069 = vadd.f32 %v900, %v977
      %v1070 = vxor.u32 %v1068, 2147483648
      %v1071 = vxor.u32 %v1069, 2147483648
      %v1072 = vmul.f32 %v1070, 1.442695
      %v1073 = vpow.pop %v1072
      %v1074 = vmul.f32 %v1071, 1.442695
      %v1075 = vpow.pop %v1074
      %v1076 = vadd.f32 %v1073, 1.0
      %v1077 = vadd.f32 %v1075, 1.0
      %v1078 = vrcp.pop %v1076
      %v1079 = vmul.f32 1.0, %v1078
      %v1080 = vrcp.pop %v1077
      %v1081 = vmul.f32 1.0, %v1080
      %v1082 = vadd.f32 %v1046, %v459
      %v1083 = vadd.f32 %v1051, %v459
      %v1084 = vmul.f32 %v1065, %v1082
      %v1085 = vmul.f32 %v1067, %v1083
      %v1086 = vadd.f32 %v898, %v1084
      %v1087 = vadd.f32 %v901, %v1085
      %v1088 = vtanh.pop %v1086
      %v1089 = vtanh.pop %v1087
      %v1090 = vsub.f32 1.0, %v1079
      %v1091 = vsub.f32 1.0, %v1081
      %v1092 = vmul.f32 %v1090, %v1088
      %v1093 = vmul.f32 %v1091, %v1089
      %v1094 = vmul.f32 %v1079, %v889
      %v1095 = vmul.f32 %v1081, %v890
      %v1096 = vadd.f32 %v1092, %v1094
      %v1097 = vadd.f32 %v1093, %v1095
      %s1098 = scalar_lea.vmem %s199, 96
      %v1099 = vld [vmem:[%s1098] sm:$0xff]
      %v1100 = vld [vmem:[%s1098 + $0x8] sm:$0xf]
      %v1101 = vld [vmem:[%s1098 + $0xc] sm:$0xff]
      %v1102 = vld [vmem:[%s1098 + $0x14] sm:$0xf]
      %v1103 = vunpack.c.l.bf16 %v1099
      %v1104 = vunpack.c.h.bf16 %v1099
      %v1105 = vunpack.c.l.bf16 %v1100
      %v1106 = vunpack.c.l.bf16 %v1101
      %v1107 = vunpack.c.h.bf16 %v1101
      %v1108 = vunpack.c.l.bf16 %v1102
      %1109 = vmatprep.subr.mxu0 %v227
      %1110 = vmatpush1.msra.mxu0 %v226
      %1111 = vmatprep.subr.mxu0 %v230
      %1112 = vmatpush1.msra.mxu0 %v229
      %1113 = vmatprep.subr.mxu0 %v233
      %1114 = vmatpush1.msra.mxu0 %v232
      %1115 = vmatprep.subr.mxu0 %v236
      %1116 = vmatpush1.msra.mxu0 %v235
      %1117 = vmatprep.subr.mxu0 %v239
      %1118 = vmatpush1.msra.mxu0 %v238
      %1119 = vmatprep.subr.mxu0 %v242
      %1120 = vmatpush1.msra.mxu0 %v241
      %1121 = vmatprep.subr.mxu0 %v245
      %1122 = vmatpush1.msra.mxu0 %v244
      %1123 = vmatprep.subr.mxu0 %v248
      %1124 = vmatpush1.msra.mxu0 %v247
      %1125 = vmatprep.subr.mxu0 %v251
      %1126 = vmatpush1.msra.mxu0 %v250
      %1127 = vmatprep.subr.mxu0 %v254
      %1128 = vmatpush1.msra.mxu0 %v253
      %1129 = vmatprep.subr.mxu0 %v257
      %1130 = vmatpush1.msra.mxu0 %v256
      %1131 = vmatprep.subr.mxu0 %v260
      %1132 = vmatpush1.msra.mxu0 %v259
      %1133 = vmatprep.subr.mxu0 %v263
      %1134 = vmatpush1.msra.mxu0 %v262
      %1135 = vmatprep.subr.mxu0 %v266
      %1136 = vmatpush1.msra.mxu0 %v265
      %1137 = vmatprep.subr.mxu0 %v269
      %1138 = vmatpush1.msra.mxu0 %v268
      %1139 = vmatprep.subr.mxu0 %v272
      %1140 = vmatpush1.msra.mxu0 %v271
      %1141 = vmatprep.subr.mxu0 0.0
      %1142 = vmatpush1.msra.mxu0 0.0
      %1143 = vmatprep.subr.mxu0 0.0
      %1144 = vmatpush1.msra.mxu0 0.0
      %1145 = vmatprep.subr.mxu0 0.0
      %1146 = vmatpush1.msra.mxu0 0.0
      %1147 = vmatprep.subr.mxu0 0.0
      %1148 = vmatpush1.msra.mxu0 0.0
      %1149 = vmatprep.subr.mxu0 0.0
      %1150 = vmatpush1.msra.mxu0 0.0
      %1151 = vmatprep.subr.mxu0 0.0
      %1152 = vmatpush1.msra.mxu0 0.0
      %1153 = vmatprep.subr.mxu0 0.0
      %1154 = vmatpush1.msra.mxu0 0.0
      %1155 = vmatprep.subr.mxu0 0.0
      %1156 = vmatpush1.msra.mxu0 0.0
      %1157 = vmatprep.subr.mxu0 0.0
      %1158 = vmatpush1.msra.mxu0 0.0
      %1159 = vmatprep.subr.mxu0 0.0
      %1160 = vmatpush1.msra.mxu0 0.0
      %1161 = vmatprep.subr.mxu0 0.0
      %1162 = vmatpush1.msra.mxu0 0.0
      %1163 = vmatprep.subr.mxu0 0.0
      %1164 = vmatpush1.msra.mxu0 0.0
      %1165 = vmatprep.subr.mxu0 0.0
      %1166 = vmatpush1.msra.mxu0 0.0
      %1167 = vmatprep.subr.mxu0 0.0
      %1168 = vmatpush1.msra.mxu0 0.0
      %1169 = vmatprep.subr.mxu0 0.0
      %1170 = vmatpush1.msra.mxu0 0.0
      %1171 = vmatprep.subr.mxu0 0.0
      %1172 = vmatpush1.msra.mxu0 0.0
      %1173 = vmatprep.mubr.f32.mxu0 0.0
      %1174 = vmatmul.mubr.f32.gmra.mrb[0].mxu0 %v1096
      %v1175 = vpop.f32.mrb[0].mxu0
      %v1176 = vadd.f32 0.0, %v1175
      %v1177 = vpop.f32.mrb[0].mxu0
      %v1178 = vadd.f32 0.0, %v1177
      %1179 = vmatprep.mubr.f32.mxu0 0.0
      %1180 = vmatmul.mubr.f32.gmra.mrb[0].mxu0 %v1097
      %v1181 = vpop.f32.mrb[0].mxu0
      %v1182 = vadd.f32 0.0, %v1181
      %v1183 = vpop.f32.mrb[0].mxu0
      %v1184 = vadd.f32 0.0, %v1183
      %1185 = vdwg.mxu0
      %1186 = vmatprep.subr.mxu0 0.0
      %1187 = vmatpush1.msra.mxu0 %v228
      %1188 = vmatprep.subr.mxu0 0.0
      %1189 = vmatpush1.msra.mxu0 %v231
      %1190 = vmatprep.subr.mxu0 0.0
      %1191 = vmatpush1.msra.mxu0 %v234
      %1192 = vmatprep.subr.mxu0 0.0
      %1193 = vmatpush1.msra.mxu0 %v237
      %1194 = vmatprep.subr.mxu0 0.0
      %1195 = vmatpush1.msra.mxu0 %v240
      %1196 = vmatprep.subr.mxu0 0.0
      %1197 = vmatpush1.msra.mxu0 %v243
      %1198 = vmatprep.subr.mxu0 0.0
      %1199 = vmatpush1.msra.mxu0 %v246
      %1200 = vmatprep.subr.mxu0 0.0
      %1201 = vmatpush1.msra.mxu0 %v249
      %1202 = vmatprep.subr.mxu0 0.0
      %1203 = vmatpush1.msra.mxu0 %v252
      %1204 = vmatprep.subr.mxu0 0.0
      %1205 = vmatpush1.msra.mxu0 %v255
      %1206 = vmatprep.subr.mxu0 0.0
      %1207 = vmatpush1.msra.mxu0 %v258
      %1208 = vmatprep.subr.mxu0 0.0
      %1209 = vmatpush1.msra.mxu0 %v261
      %1210 = vmatprep.subr.mxu0 0.0
      %1211 = vmatpush1.msra.mxu0 %v264
      %1212 = vmatprep.subr.mxu0 0.0
      %1213 = vmatpush1.msra.mxu0 %v267
      %1214 = vmatprep.subr.mxu0 0.0
      %1215 = vmatpush1.msra.mxu0 %v270
      %1216 = vmatprep.subr.mxu0 0.0
      %1217 = vmatpush1.msra.mxu0 %v273
      %1218 = vmatprep.subr.mxu0 0.0
      %1219 = vmatpush1.msra.mxu0 0.0
      %1220 = vmatprep.subr.mxu0 0.0
      %1221 = vmatpush1.msra.mxu0 0.0
      %1222 = vmatprep.subr.mxu0 0.0
      %1223 = vmatpush1.msra.mxu0 0.0
      %1224 = vmatprep.subr.mxu0 0.0
      %1225 = vmatpush1.msra.mxu0 0.0
      %1226 = vmatprep.subr.mxu0 0.0
      %1227 = vmatpush1.msra.mxu0 0.0
      %1228 = vmatprep.subr.mxu0 0.0
      %1229 = vmatpush1.msra.mxu0 0.0
      %1230 = vmatprep.subr.mxu0 0.0
      %1231 = vmatpush1.msra.mxu0 0.0
      %1232 = vmatprep.subr.mxu0 0.0
      %1233 = vmatpush1.msra.mxu0 0.0
      %1234 = vmatprep.subr.mxu0 0.0
      %1235 = vmatpush1.msra.mxu0 0.0
      %1236 = vmatprep.subr.mxu0 0.0
      %1237 = vmatpush1.msra.mxu0 0.0
      %1238 = vmatprep.subr.mxu0 0.0
      %1239 = vmatpush1.msra.mxu0 0.0
      %1240 = vmatprep.subr.mxu0 0.0
      %1241 = vmatpush1.msra.mxu0 0.0
      %1242 = vmatprep.subr.mxu0 0.0
      %1243 = vmatpush1.msra.mxu0 0.0
      %1244 = vmatprep.subr.mxu0 0.0
      %1245 = vmatpush1.msra.mxu0 0.0
      %1246 = vmatprep.subr.mxu0 0.0
      %1247 = vmatpush1.msra.mxu0 0.0
      %1248 = vmatprep.subr.mxu0 0.0
      %1249 = vmatpush1.msra.mxu0 0.0
      %1250 = vmatprep.mubr.f32.mxu0 0.0
      %1251 = vmatmul.mubr.f32.gmra.mrb[0].mxu0 %v1096
      %v1252 = vpop.f32.mrb[0].mxu0
      %v1253 = vadd.f32 0.0, %v1252
      %v1254 = vpop.f32.mrb[0].mxu0
      %1255 = vmatprep.mubr.f32.mxu0 0.0
      %1256 = vmatmul.mubr.f32.gmra.mrb[0].mxu0 %v1097
      %v1257 = vpop.f32.mrb[0].mxu0
      %v1258 = vadd.f32 0.0, %v1257
      %v1259 = vpop.f32.mrb[0].mxu0
      %1260 = vdwg.mxu0
      %v1261 = vadd.f32 %v1103, %v1176
      %v1262 = vadd.f32 %v1106, %v1182
      %v1263 = vxor.u32 %v1261, 2147483648
      %v1264 = vxor.u32 %v1262, 2147483648
      %v1265 = vmul.f32 %v1263, 1.442695
      %v1266 = vpow.pop %v1265
      %v1267 = vmul.f32 %v1264, 1.442695
      %v1268 = vpow.pop %v1267
      %v1269 = vadd.f32 %v1266, 1.0
      %v1270 = vadd.f32 %v1268, 1.0
      %v1271 = vrcp.pop %v1269
      %v1272 = vmul.f32 1.0, %v1271
      %v1273 = vrcp.pop %v1270
      %v1274 = vmul.f32 1.0, %v1273
      %v1275 = vadd.f32 %v1104, %v1178
      %v1276 = vadd.f32 %v1107, %v1184
      %v1277 = vxor.u32 %v1275, 2147483648
      %v1278 = vxor.u32 %v1276, 2147483648
      %v1279 = vmul.f32 %v1277, 1.442695
      %v1280 = vpow.pop %v1279
      %v1281 = vmul.f32 %v1278, 1.442695
      %v1282 = vpow.pop %v1281
      %v1283 = vadd.f32 %v1280, 1.0
      %v1284 = vadd.f32 %v1282, 1.0
      %v1285 = vrcp.pop %v1283
      %v1286 = vmul.f32 1.0, %v1285
      %v1287 = vrcp.pop %v1284
      %v1288 = vmul.f32 1.0, %v1287
      %v1289 = vadd.f32 %v1253, %v459
      %v1290 = vadd.f32 %v1258, %v459
      %v1291 = vmul.f32 %v1272, %v1289
      %v1292 = vmul.f32 %v1274, %v1290
      %v1293 = vadd.f32 %v1105, %v1291
      %v1294 = vadd.f32 %v1108, %v1292
      %v1295 = vtanh.pop %v1293
      %v1296 = vtanh.pop %v1294
      %v1297 = vsub.f32 1.0, %v1286
      %v1298 = vsub.f32 1.0, %v1288
      %v1299 = vmul.f32 %v1297, %v1295
      %v1300 = vmul.f32 %v1298, %v1296
      %v1301 = vmul.f32 %v1286, %v1096
      %v1302 = vmul.f32 %v1288, %v1097
      %v1303 = vadd.f32 %v1299, %v1301
      %v1304 = vadd.f32 %v1300, %v1302
      %s1305 = scalar_lea.vmem %s199, 120
      %v1306 = vld [vmem:[%s1305] sm:$0xff]
      %v1307 = vld [vmem:[%s1305 + $0x8] sm:$0xf]
      %v1308 = vld [vmem:[%s1305 + $0xc] sm:$0xff]
      %v1309 = vld [vmem:[%s1305 + $0x14] sm:$0xf]
      %v1310 = vunpack.c.l.bf16 %v1306
      %v1311 = vunpack.c.h.bf16 %v1306
      %v1312 = vunpack.c.l.bf16 %v1307
      %v1313 = vunpack.c.l.bf16 %v1308
      %v1314 = vunpack.c.h.bf16 %v1308
      %v1315 = vunpack.c.l.bf16 %v1309
      %1316 = vmatprep.subr.mxu0 %v227
      %1317 = vmatpush1.msra.mxu0 %v226
      %1318 = vmatprep.subr.mxu0 %v230
      %1319 = vmatpush1.msra.mxu0 %v229
      %1320 = vmatprep.subr.mxu0 %v233
      %1321 = vmatpush1.msra.mxu0 %v232
      %1322 = vmatprep.subr.mxu0 %v236
      %1323 = vmatpush1.msra.mxu0 %v235
      %1324 = vmatprep.subr.mxu0 %v239
      %1325 = vmatpush1.msra.mxu0 %v238
      %1326 = vmatprep.subr.mxu0 %v242
      %1327 = vmatpush1.msra.mxu0 %v241
      %1328 = vmatprep.subr.mxu0 %v245
      %1329 = vmatpush1.msra.mxu0 %v244
      %1330 = vmatprep.subr.mxu0 %v248
      %1331 = vmatpush1.msra.mxu0 %v247
      %1332 = vmatprep.subr.mxu0 %v251
      %1333 = vmatpush1.msra.mxu0 %v250
      %1334 = vmatprep.subr.mxu0 %v254
      %1335 = vmatpush1.msra.mxu0 %v253
      %1336 = vmatprep.subr.mxu0 %v257
      %1337 = vmatpush1.msra.mxu0 %v256
      %1338 = vmatprep.subr.mxu0 %v260
      %1339 = vmatpush1.msra.mxu0 %v259
      %1340 = vmatprep.subr.mxu0 %v263
      %1341 = vmatpush1.msra.mxu0 %v262
      %1342 = vmatprep.subr.mxu0 %v266
      %1343 = vmatpush1.msra.mxu0 %v265
      %1344 = vmatprep.subr.mxu0 %v269
      %1345 = vmatpush1.msra.mxu0 %v268
      %1346 = vmatprep.subr.mxu0 %v272
      %1347 = vmatpush1.msra.mxu0 %v271
      %1348 = vmatprep.subr.mxu0 0.0
      %1349 = vmatpush1.msra.mxu0 0.0
      %1350 = vmatprep.subr.mxu0 0.0
      %1351 = vmatpush1.msra.mxu0 0.0
      %1352 = vmatprep.subr.mxu0 0.0
      %1353 = vmatpush1.msra.mxu0 0.0
      %1354 = vmatprep.subr.mxu0 0.0
      %1355 = vmatpush1.msra.mxu0 0.0
      %1356 = vmatprep.subr.mxu0 0.0
      %1357 = vmatpush1.msra.mxu0 0.0
      %1358 = vmatprep.subr.mxu0 0.0
      %1359 = vmatpush1.msra.mxu0 0.0
      %1360 = vmatprep.subr.mxu0 0.0
      %1361 = vmatpush1.msra.mxu0 0.0
      %1362 = vmatprep.subr.mxu0 0.0
      %1363 = vmatpush1.msra.mxu0 0.0
      %1364 = vmatprep.subr.mxu0 0.0
      %1365 = vmatpush1.msra.mxu0 0.0
      %1366 = vmatprep.subr.mxu0 0.0
      %1367 = vmatpush1.msra.mxu0 0.0
      %1368 = vmatprep.subr.mxu0 0.0
      %1369 = vmatpush1.msra.mxu0 0.0
      %1370 = vmatprep.subr.mxu0 0.0
      %1371 = vmatpush1.msra.mxu0 0.0
      %1372 = vmatprep.subr.mxu0 0.0
      %1373 = vmatpush1.msra.mxu0 0.0
      %1374 = vmatprep.subr.mxu0 0.0
      %1375 = vmatpush1.msra.mxu0 0.0
      %1376 = vmatprep.subr.mxu0 0.0
      %1377 = vmatpush1.msra.mxu0 0.0
      %1378 = vmatprep.subr.mxu0 0.0
      %1379 = vmatpush1.msra.mxu0 0.0
      %1380 = vmatprep.mubr.f32.mxu0 0.0
      %1381 = vmatmul.mubr.f32.gmra.mrb[0].mxu0 %v1303
      %v1382 = vpop.f32.mrb[0].mxu0
      %v1383 = vadd.f32 0.0, %v1382
      %v1384 = vpop.f32.mrb[0].mxu0
      %v1385 = vadd.f32 0.0, %v1384
      %1386 = vmatprep.mubr.f32.mxu0 0.0
      %1387 = vmatmul.mubr.f32.gmra.mrb[0].mxu0 %v1304
      %v1388 = vpop.f32.mrb[0].mxu0
      %v1389 = vadd.f32 0.0, %v1388
      %v1390 = vpop.f32.mrb[0].mxu0
      %v1391 = vadd.f32 0.0, %v1390
      %1392 = vdwg.mxu0
      %1393 = vmatprep.subr.mxu0 0.0
      %1394 = vmatpush1.msra.mxu0 %v228
      %1395 = vmatprep.subr.mxu0 0.0
      %1396 = vmatpush1.msra.mxu0 %v231
      %1397 = vmatprep.subr.mxu0 0.0
      %1398 = vmatpush1.msra.mxu0 %v234
      %1399 = vmatprep.subr.mxu0 0.0
      %1400 = vmatpush1.msra.mxu0 %v237
      %1401 = vmatprep.subr.mxu0 0.0
      %1402 = vmatpush1.msra.mxu0 %v240
      %1403 = vmatprep.subr.mxu0 0.0
      %1404 = vmatpush1.msra.mxu0 %v243
      %1405 = vmatprep.subr.mxu0 0.0
      %1406 = vmatpush1.msra.mxu0 %v246
      %1407 = vmatprep.subr.mxu0 0.0
      %1408 = vmatpush1.msra.mxu0 %v249
      %1409 = vmatprep.subr.mxu0 0.0
      %1410 = vmatpush1.msra.mxu0 %v252
      %1411 = vmatprep.subr.mxu0 0.0
      %1412 = vmatpush1.msra.mxu0 %v255
      %1413 = vmatprep.subr.mxu0 0.0
      %1414 = vmatpush1.msra.mxu0 %v258
      %1415 = vmatprep.subr.mxu0 0.0
      %1416 = vmatpush1.msra.mxu0 %v261
      %1417 = vmatprep.subr.mxu0 0.0
      %1418 = vmatpush1.msra.mxu0 %v264
      %1419 = vmatprep.subr.mxu0 0.0
      %1420 = vmatpush1.msra.mxu0 %v267
      %1421 = vmatprep.subr.mxu0 0.0
      %1422 = vmatpush1.msra.mxu0 %v270
      %1423 = vmatprep.subr.mxu0 0.0
      %1424 = vmatpush1.msra.mxu0 %v273
      %1425 = vmatprep.subr.mxu0 0.0
      %1426 = vmatpush1.msra.mxu0 0.0
      %1427 = vmatprep.subr.mxu0 0.0
      %1428 = vmatpush1.msra.mxu0 0.0
      %1429 = vmatprep.subr.mxu0 0.0
      %1430 = vmatpush1.msra.mxu0 0.0
      %1431 = vmatprep.subr.mxu0 0.0
      %1432 = vmatpush1.msra.mxu0 0.0
      %1433 = vmatprep.subr.mxu0 0.0
      %1434 = vmatpush1.msra.mxu0 0.0
      %1435 = vmatprep.subr.mxu0 0.0
      %1436 = vmatpush1.msra.mxu0 0.0
      %1437 = vmatprep.subr.mxu0 0.0
      %1438 = vmatpush1.msra.mxu0 0.0
      %1439 = vmatprep.subr.mxu0 0.0
      %1440 = vmatpush1.msra.mxu0 0.0
      %1441 = vmatprep.subr.mxu0 0.0
      %1442 = vmatpush1.msra.mxu0 0.0
      %1443 = vmatprep.subr.mxu0 0.0
      %1444 = vmatpush1.msra.mxu0 0.0
      %1445 = vmatprep.subr.mxu0 0.0
      %1446 = vmatpush1.msra.mxu0 0.0
      %1447 = vmatprep.subr.mxu0 0.0
      %1448 = vmatpush1.msra.mxu0 0.0
      %1449 = vmatprep.subr.mxu0 0.0
      %1450 = vmatpush1.msra.mxu0 0.0
      %1451 = vmatprep.subr.mxu0 0.0
      %1452 = vmatpush1.msra.mxu0 0.0
      %1453 = vmatprep.subr.mxu0 0.0
      %1454 = vmatpush1.msra.mxu0 0.0
      %1455 = vmatprep.subr.mxu0 0.0
      %1456 = vmatpush1.msra.mxu0 0.0
      %1457 = vmatprep.mubr.f32.mxu0 0.0
      %1458 = vmatmul.mubr.f32.gmra.mrb[0].mxu0 %v1303
      %v1459 = vpop.f32.mrb[0].mxu0
      %v1460 = vadd.f32 0.0, %v1459
      %v1461 = vpop.f32.mrb[0].mxu0
      %1462 = vmatprep.mubr.f32.mxu0 0.0
      %1463 = vmatmul.mubr.f32.gmra.mrb[0].mxu0 %v1304
      %v1464 = vpop.f32.mrb[0].mxu0
      %v1465 = vadd.f32 0.0, %v1464
      %v1466 = vpop.f32.mrb[0].mxu0
      %1467 = vdwg.mxu0
      %v1468 = vadd.f32 %v1310, %v1383
      %v1469 = vadd.f32 %v1313, %v1389
      %v1470 = vxor.u32 %v1468, 2147483648
      %v1471 = vxor.u32 %v1469, 2147483648
      %v1472 = vmul.f32 %v1470, 1.442695
      %v1473 = vpow.pop %v1472
      %v1474 = vmul.f32 %v1471, 1.442695
      %v1475 = vpow.pop %v1474
      %v1476 = vadd.f32 %v1473, 1.0
      %v1477 = vadd.f32 %v1475, 1.0
      %v1478 = vrcp.pop %v1476
      %v1479 = vmul.f32 1.0, %v1478
      %v1480 = vrcp.pop %v1477
      %v1481 = vmul.f32 1.0, %v1480
      %v1482 = vadd.f32 %v1311, %v1385
      %v1483 = vadd.f32 %v1314, %v1391
      %v1484 = vxor.u32 %v1482, 2147483648
      %v1485 = vxor.u32 %v1483, 2147483648
      %v1486 = vmul.f32 %v1484, 1.442695
      %v1487 = vpow.pop %v1486
      %v1488 = vmul.f32 %v1485, 1.442695
      %v1489 = vpow.pop %v1488
      %v1490 = vadd.f32 %v1487, 1.0
      %v1491 = vadd.f32 %v1489, 1.0
      %v1492 = vrcp.pop %v1490
      %v1493 = vmul.f32 1.0, %v1492
      %v1494 = vrcp.pop %v1491
      %v1495 = vmul.f32 1.0, %v1494
      %v1496 = vadd.f32 %v1460, %v459
      %v1497 = vadd.f32 %v1465, %v459
      %v1498 = vmul.f32 %v1479, %v1496
      %v1499 = vmul.f32 %v1481, %v1497
      %v1500 = vadd.f32 %v1312, %v1498
      %v1501 = vadd.f32 %v1315, %v1499
      %v1502 = vtanh.pop %v1500
      %v1503 = vtanh.pop %v1501
      %v1504 = vsub.f32 1.0, %v1493
      %v1505 = vsub.f32 1.0, %v1495
      %v1506 = vmul.f32 %v1504, %v1502
      %v1507 = vmul.f32 %v1505, %v1503
      %v1508 = vmul.f32 %v1493, %v1303
      %v1509 = vmul.f32 %v1495, %v1304
      %v1510 = vadd.f32 %v1506, %v1508
      %v1511 = vadd.f32 %v1507, %v1509
      %s1512 = scalar_lea.vmem %s199, 144
      %v1513 = vld [vmem:[%s1512] sm:$0xff]
      %v1514 = vld [vmem:[%s1512 + $0x8] sm:$0xf]
      %v1515 = vld [vmem:[%s1512 + $0xc] sm:$0xff]
      %v1516 = vld [vmem:[%s1512 + $0x14] sm:$0xf]
      %v1517 = vunpack.c.l.bf16 %v1513
      %v1518 = vunpack.c.h.bf16 %v1513
      %v1519 = vunpack.c.l.bf16 %v1514
      %v1520 = vunpack.c.l.bf16 %v1515
      %v1521 = vunpack.c.h.bf16 %v1515
      %v1522 = vunpack.c.l.bf16 %v1516
      %1523 = vmatprep.subr.mxu0 %v227
      %1524 = vmatpush1.msra.mxu0 %v226
      %1525 = vmatprep.subr.mxu0 %v230
      %1526 = vmatpush1.msra.mxu0 %v229
      %1527 = vmatprep.subr.mxu0 %v233
      %1528 = vmatpush1.msra.mxu0 %v232
      %1529 = vmatprep.subr.mxu0 %v236
      %1530 = vmatpush1.msra.mxu0 %v235
      %1531 = vmatprep.subr.mxu0 %v239
      %1532 = vmatpush1.msra.mxu0 %v238
      %1533 = vmatprep.subr.mxu0 %v242
      %1534 = vmatpush1.msra.mxu0 %v241
      %1535 = vmatprep.subr.mxu0 %v245
      %1536 = vmatpush1.msra.mxu0 %v244
      %1537 = vmatprep.subr.mxu0 %v248
      %1538 = vmatpush1.msra.mxu0 %v247
      %1539 = vmatprep.subr.mxu0 %v251
      %1540 = vmatpush1.msra.mxu0 %v250
      %1541 = vmatprep.subr.mxu0 %v254
      %1542 = vmatpush1.msra.mxu0 %v253
      %1543 = vmatprep.subr.mxu0 %v257
      %1544 = vmatpush1.msra.mxu0 %v256
      %1545 = vmatprep.subr.mxu0 %v260
      %1546 = vmatpush1.msra.mxu0 %v259
      %1547 = vmatprep.subr.mxu0 %v263
      %1548 = vmatpush1.msra.mxu0 %v262
      %1549 = vmatprep.subr.mxu0 %v266
      %1550 = vmatpush1.msra.mxu0 %v265
      %1551 = vmatprep.subr.mxu0 %v269
      %1552 = vmatpush1.msra.mxu0 %v268
      %1553 = vmatprep.subr.mxu0 %v272
      %1554 = vmatpush1.msra.mxu0 %v271
      %1555 = vmatprep.subr.mxu0 0.0
      %1556 = vmatpush1.msra.mxu0 0.0
      %1557 = vmatprep.subr.mxu0 0.0
      %1558 = vmatpush1.msra.mxu0 0.0
      %1559 = vmatprep.subr.mxu0 0.0
      %1560 = vmatpush1.msra.mxu0 0.0
      %1561 = vmatprep.subr.mxu0 0.0
      %1562 = vmatpush1.msra.mxu0 0.0
      %1563 = vmatprep.subr.mxu0 0.0
      %1564 = vmatpush1.msra.mxu0 0.0
      %1565 = vmatprep.subr.mxu0 0.0
      %1566 = vmatpush1.msra.mxu0 0.0
      %1567 = vmatprep.subr.mxu0 0.0
      %1568 = vmatpush1.msra.mxu0 0.0
      %1569 = vmatprep.subr.mxu0 0.0
      %1570 = vmatpush1.msra.mxu0 0.0
      %1571 = vmatprep.subr.mxu0 0.0
      %1572 = vmatpush1.msra.mxu0 0.0
      %1573 = vmatprep.subr.mxu0 0.0
      %1574 = vmatpush1.msra.mxu0 0.0
      %1575 = vmatprep.subr.mxu0 0.0
      %1576 = vmatpush1.msra.mxu0 0.0
      %1577 = vmatprep.subr.mxu0 0.0
      %1578 = vmatpush1.msra.mxu0 0.0
      %1579 = vmatprep.subr.mxu0 0.0
      %1580 = vmatpush1.msra.mxu0 0.0
      %1581 = vmatprep.subr.mxu0 0.0
      %1582 = vmatpush1.msra.mxu0 0.0
      %1583 = vmatprep.subr.mxu0 0.0
      %1584 = vmatpush1.msra.mxu0 0.0
      %1585 = vmatprep.subr.mxu0 0.0
      %1586 = vmatpush1.msra.mxu0 0.0
      %1587 = vmatprep.mubr.f32.mxu0 0.0
      %1588 = vmatmul.mubr.f32.gmra.mrb[0].mxu0 %v1510
      %v1589 = vpop.f32.mrb[0].mxu0
      %v1590 = vadd.f32 0.0, %v1589
      %v1591 = vpop.f32.mrb[0].mxu0
      %v1592 = vadd.f32 0.0, %v1591
      %1593 = vmatprep.mubr.f32.mxu0 0.0
      %1594 = vmatmul.mubr.f32.gmra.mrb[0].mxu0 %v1511
      %v1595 = vpop.f32.mrb[0].mxu0
      %v1596 = vadd.f32 0.0, %v1595
      %v1597 = vpop.f32.mrb[0].mxu0
      %v1598 = vadd.f32 0.0, %v1597
      %1599 = vdwg.mxu0
      %1600 = vmatprep.subr.mxu0 0.0
      %1601 = vmatpush1.msra.mxu0 %v228
      %1602 = vmatprep.subr.mxu0 0.0
      %1603 = vmatpush1.msra.mxu0 %v231
      %1604 = vmatprep.subr.mxu0 0.0
      %1605 = vmatpush1.msra.mxu0 %v234
      %1606 = vmatprep.subr.mxu0 0.0
      %1607 = vmatpush1.msra.mxu0 %v237
      %1608 = vmatprep.subr.mxu0 0.0
      %1609 = vmatpush1.msra.mxu0 %v240
      %1610 = vmatprep.subr.mxu0 0.0
      %1611 = vmatpush1.msra.mxu0 %v243
      %1612 = vmatprep.subr.mxu0 0.0
      %1613 = vmatpush1.msra.mxu0 %v246
      %1614 = vmatprep.subr.mxu0 0.0
      %1615 = vmatpush1.msra.mxu0 %v249
      %1616 = vmatprep.subr.mxu0 0.0
      %1617 = vmatpush1.msra.mxu0 %v252
      %1618 = vmatprep.subr.mxu0 0.0
      %1619 = vmatpush1.msra.mxu0 %v255
      %1620 = vmatprep.subr.mxu0 0.0
      %1621 = vmatpush1.msra.mxu0 %v258
      %1622 = vmatprep.subr.mxu0 0.0
      %1623 = vmatpush1.msra.mxu0 %v261
      %1624 = vmatprep.subr.mxu0 0.0
      %1625 = vmatpush1.msra.mxu0 %v264
      %1626 = vmatprep.subr.mxu0 0.0
      %1627 = vmatpush1.msra.mxu0 %v267
      %1628 = vmatprep.subr.mxu0 0.0
      %1629 = vmatpush1.msra.mxu0 %v270
      %1630 = vmatprep.subr.mxu0 0.0
      %1631 = vmatpush1.msra.mxu0 %v273
      %1632 = vmatprep.subr.mxu0 0.0
      %1633 = vmatpush1.msra.mxu0 0.0
      %1634 = vmatprep.subr.mxu0 0.0
      %1635 = vmatpush1.msra.mxu0 0.0
      %1636 = vmatprep.subr.mxu0 0.0
      %1637 = vmatpush1.msra.mxu0 0.0
      %1638 = vmatprep.subr.mxu0 0.0
      %1639 = vmatpush1.msra.mxu0 0.0
      %1640 = vmatprep.subr.mxu0 0.0
      %1641 = vmatpush1.msra.mxu0 0.0
      %1642 = vmatprep.subr.mxu0 0.0
      %1643 = vmatpush1.msra.mxu0 0.0
      %1644 = vmatprep.subr.mxu0 0.0
      %1645 = vmatpush1.msra.mxu0 0.0
      %1646 = vmatprep.subr.mxu0 0.0
      %1647 = vmatpush1.msra.mxu0 0.0
      %1648 = vmatprep.subr.mxu0 0.0
      %1649 = vmatpush1.msra.mxu0 0.0
      %1650 = vmatprep.subr.mxu0 0.0
      %1651 = vmatpush1.msra.mxu0 0.0
      %1652 = vmatprep.subr.mxu0 0.0
      %1653 = vmatpush1.msra.mxu0 0.0
      %1654 = vmatprep.subr.mxu0 0.0
      %1655 = vmatpush1.msra.mxu0 0.0
      %1656 = vmatprep.subr.mxu0 0.0
      %1657 = vmatpush1.msra.mxu0 0.0
      %1658 = vmatprep.subr.mxu0 0.0
      %1659 = vmatpush1.msra.mxu0 0.0
      %1660 = vmatprep.subr.mxu0 0.0
      %1661 = vmatpush1.msra.mxu0 0.0
      %1662 = vmatprep.subr.mxu0 0.0
      %1663 = vmatpush1.msra.mxu0 0.0
      %1664 = vmatprep.mubr.f32.mxu0 0.0
      %1665 = vmatmul.mubr.f32.gmra.mrb[0].mxu0 %v1510
      %v1666 = vpop.f32.mrb[0].mxu0
      %v1667 = vadd.f32 0.0, %v1666
      %v1668 = vpop.f32.mrb[0].mxu0
      %1669 = vmatprep.mubr.f32.mxu0 0.0
      %1670 = vmatmul.mubr.f32.gmra.mrb[0].mxu0 %v1511
      %v1671 = vpop.f32.mrb[0].mxu0
      %v1672 = vadd.f32 0.0, %v1671
      %v1673 = vpop.f32.mrb[0].mxu0
      %1674 = vdwg.mxu0
      %v1675 = vadd.f32 %v1517, %v1590
      %v1676 = vadd.f32 %v1520, %v1596
      %v1677 = vxor.u32 %v1675, 2147483648
      %v1678 = vxor.u32 %v1676, 2147483648
      %v1679 = vmul.f32 %v1677, 1.442695
      %v1680 = vpow.pop %v1679
      %v1681 = vmul.f32 %v1678, 1.442695
      %v1682 = vpow.pop %v1681
      %v1683 = vadd.f32 %v1680, 1.0
      %v1684 = vadd.f32 %v1682, 1.0
      %v1685 = vrcp.pop %v1683
      %v1686 = vmul.f32 1.0, %v1685
      %v1687 = vrcp.pop %v1684
      %v1688 = vmul.f32 1.0, %v1687
      %v1689 = vadd.f32 %v1518, %v1592
      %v1690 = vadd.f32 %v1521, %v1598
      %v1691 = vxor.u32 %v1689, 2147483648
      %v1692 = vxor.u32 %v1690, 2147483648
      %v1693 = vmul.f32 %v1691, 1.442695
      %v1694 = vpow.pop %v1693
      %v1695 = vmul.f32 %v1692, 1.442695
      %v1696 = vpow.pop %v1695
      %v1697 = vadd.f32 %v1694, 1.0
      %v1698 = vadd.f32 %v1696, 1.0
      %v1699 = vrcp.pop %v1697
      %v1700 = vmul.f32 1.0, %v1699
      %v1701 = vrcp.pop %v1698
      %v1702 = vmul.f32 1.0, %v1701
      %v1703 = vadd.f32 %v1667, %v459
      %v1704 = vadd.f32 %v1672, %v459
      %v1705 = vmul.f32 %v1686, %v1703
      %v1706 = vmul.f32 %v1688, %v1704
      %v1707 = vadd.f32 %v1519, %v1705
      %v1708 = vadd.f32 %v1522, %v1706
      %v1709 = vtanh.pop %v1707
      %v1710 = vtanh.pop %v1708
      %v1711 = vsub.f32 1.0, %v1700
      %v1712 = vsub.f32 1.0, %v1702
      %v1713 = vmul.f32 %v1711, %v1709
      %v1714 = vmul.f32 %v1712, %v1710
      %v1715 = vmul.f32 %v1700, %v1510
      %v1716 = vmul.f32 %v1702, %v1511
      %v1717 = vadd.f32 %v1713, %v1715
      %v1718 = vadd.f32 %v1714, %v1716
      %s1719 = scalar_lea.vmem %s199, 168
      %v1720 = vld [vmem:[%s1719] sm:$0xff]
      %v1721 = vld [vmem:[%s1719 + $0x8] sm:$0xf]
      %v1722 = vld [vmem:[%s1719 + $0xc] sm:$0xff]
      %v1723 = vld [vmem:[%s1719 + $0x14] sm:$0xf]
      %v1724 = vunpack.c.l.bf16 %v1720
      %v1725 = vunpack.c.h.bf16 %v1720
      %v1726 = vunpack.c.l.bf16 %v1721
      %v1727 = vunpack.c.l.bf16 %v1722
      %v1728 = vunpack.c.h.bf16 %v1722
      %v1729 = vunpack.c.l.bf16 %v1723
      %1730 = vmatprep.subr.mxu0 %v227
      %1731 = vmatpush1.msra.mxu0 %v226
      %1732 = vmatprep.subr.mxu0 %v230
      %1733 = vmatpush1.msra.mxu0 %v229
      %1734 = vmatprep.subr.mxu0 %v233
      %1735 = vmatpush1.msra.mxu0 %v232
      %1736 = vmatprep.subr.mxu0 %v236
      %1737 = vmatpush1.msra.mxu0 %v235
      %1738 = vmatprep.subr.mxu0 %v239
      %1739 = vmatpush1.msra.mxu0 %v238
      %1740 = vmatprep.subr.mxu0 %v242
      %1741 = vmatpush1.msra.mxu0 %v241
      %1742 = vmatprep.subr.mxu0 %v245
      %1743 = vmatpush1.msra.mxu0 %v244
      %1744 = vmatprep.subr.mxu0 %v248
      %1745 = vmatpush1.msra.mxu0 %v247
      %1746 = vmatprep.subr.mxu0 %v251
      %1747 = vmatpush1.msra.mxu0 %v250
      %1748 = vmatprep.subr.mxu0 %v254
      %1749 = vmatpush1.msra.mxu0 %v253
      %1750 = vmatprep.subr.mxu0 %v257
      %1751 = vmatpush1.msra.mxu0 %v256
      %1752 = vmatprep.subr.mxu0 %v260
      %1753 = vmatpush1.msra.mxu0 %v259
      %1754 = vmatprep.subr.mxu0 %v263
      %1755 = vmatpush1.msra.mxu0 %v262
      %1756 = vmatprep.subr.mxu0 %v266
      %1757 = vmatpush1.msra.mxu0 %v265
      %1758 = vmatprep.subr.mxu0 %v269
      %1759 = vmatpush1.msra.mxu0 %v268
      %1760 = vmatprep.subr.mxu0 %v272
      %1761 = vmatpush1.msra.mxu0 %v271
      %1762 = vmatprep.subr.mxu0 0.0
      %1763 = vmatpush1.msra.mxu0 0.0
      %1764 = vmatprep.subr.mxu0 0.0
      %1765 = vmatpush1.msra.mxu0 0.0
      %1766 = vmatprep.subr.mxu0 0.0
      %1767 = vmatpush1.msra.mxu0 0.0
      %1768 = vmatprep.subr.mxu0 0.0
      %1769 = vmatpush1.msra.mxu0 0.0
      %1770 = vmatprep.subr.mxu0 0.0
      %1771 = vmatpush1.msra.mxu0 0.0
      %1772 = vmatprep.subr.mxu0 0.0
      %1773 = vmatpush1.msra.mxu0 0.0
      %1774 = vmatprep.subr.mxu0 0.0
      %1775 = vmatpush1.msra.mxu0 0.0
      %1776 = vmatprep.subr.mxu0 0.0
      %1777 = vmatpush1.msra.mxu0 0.0
      %1778 = vmatprep.subr.mxu0 0.0
      %1779 = vmatpush1.msra.mxu0 0.0
      %1780 = vmatprep.subr.mxu0 0.0
      %1781 = vmatpush1.msra.mxu0 0.0
      %1782 = vmatprep.subr.mxu0 0.0
      %1783 = vmatpush1.msra.mxu0 0.0
      %1784 = vmatprep.subr.mxu0 0.0
      %1785 = vmatpush1.msra.mxu0 0.0
      %1786 = vmatprep.subr.mxu0 0.0
      %1787 = vmatpush1.msra.mxu0 0.0
      %1788 = vmatprep.subr.mxu0 0.0
      %1789 = vmatpush1.msra.mxu0 0.0
      %1790 = vmatprep.subr.mxu0 0.0
      %1791 = vmatpush1.msra.mxu0 0.0
      %1792 = vmatprep.subr.mxu0 0.0
      %1793 = vmatpush1.msra.mxu0 0.0
      %1794 = vmatprep.mubr.f32.mxu0 0.0
      %1795 = vmatmul.mubr.f32.gmra.mrb[0].mxu0 %v1717
      %v1796 = vpop.f32.mrb[0].mxu0
      %v1797 = vadd.f32 0.0, %v1796
      %v1798 = vpop.f32.mrb[0].mxu0
      %v1799 = vadd.f32 0.0, %v1798
      %1800 = vmatprep.mubr.f32.mxu0 0.0
      %1801 = vmatmul.mubr.f32.gmra.mrb[0].mxu0 %v1718
      %v1802 = vpop.f32.mrb[0].mxu0
      %v1803 = vadd.f32 0.0, %v1802
      %v1804 = vpop.f32.mrb[0].mxu0
      %v1805 = vadd.f32 0.0, %v1804
      %1806 = vdwg.mxu0
      %1807 = vmatprep.subr.mxu0 0.0
      %1808 = vmatpush1.msra.mxu0 %v228
      %1809 = vmatprep.subr.mxu0 0.0
      %1810 = vmatpush1.msra.mxu0 %v231
      %1811 = vmatprep.subr.mxu0 0.0
      %1812 = vmatpush1.msra.mxu0 %v234
      %1813 = vmatprep.subr.mxu0 0.0
      %1814 = vmatpush1.msra.mxu0 %v237
      %1815 = vmatprep.subr.mxu0 0.0
      %1816 = vmatpush1.msra.mxu0 %v240
      %1817 = vmatprep.subr.mxu0 0.0
      %1818 = vmatpush1.msra.mxu0 %v243
      %1819 = vmatprep.subr.mxu0 0.0
      %1820 = vmatpush1.msra.mxu0 %v246
      %1821 = vmatprep.subr.mxu0 0.0
      %1822 = vmatpush1.msra.mxu0 %v249
      %1823 = vmatprep.subr.mxu0 0.0
      %1824 = vmatpush1.msra.mxu0 %v252
      %1825 = vmatprep.subr.mxu0 0.0
      %1826 = vmatpush1.msra.mxu0 %v255
      %1827 = vmatprep.subr.mxu0 0.0
      %1828 = vmatpush1.msra.mxu0 %v258
      %1829 = vmatprep.subr.mxu0 0.0
      %1830 = vmatpush1.msra.mxu0 %v261
      %1831 = vmatprep.subr.mxu0 0.0
      %1832 = vmatpush1.msra.mxu0 %v264
      %1833 = vmatprep.subr.mxu0 0.0
      %1834 = vmatpush1.msra.mxu0 %v267
      %1835 = vmatprep.subr.mxu0 0.0
      %1836 = vmatpush1.msra.mxu0 %v270
      %1837 = vmatprep.subr.mxu0 0.0
      %1838 = vmatpush1.msra.mxu0 %v273
      %1839 = vmatprep.subr.mxu0 0.0
      %1840 = vmatpush1.msra.mxu0 0.0
      %1841 = vmatprep.subr.mxu0 0.0
      %1842 = vmatpush1.msra.mxu0 0.0
      %1843 = vmatprep.subr.mxu0 0.0
      %1844 = vmatpush1.msra.mxu0 0.0
      %1845 = vmatprep.subr.mxu0 0.0
      %1846 = vmatpush1.msra.mxu0 0.0
      %1847 = vmatprep.subr.mxu0 0.0
      %1848 = vmatpush1.msra.mxu0 0.0
      %1849 = vmatprep.subr.mxu0 0.0
      %1850 = vmatpush1.msra.mxu0 0.0
      %1851 = vmatprep.subr.mxu0 0.0
      %1852 = vmatpush1.msra.mxu0 0.0
      %1853 = vmatprep.subr.mxu0 0.0
      %1854 = vmatpush1.msra.mxu0 0.0
      %1855 = vmatprep.subr.mxu0 0.0
      %1856 = vmatpush1.msra.mxu0 0.0
      %1857 = vmatprep.subr.mxu0 0.0
      %1858 = vmatpush1.msra.mxu0 0.0
      %1859 = vmatprep.subr.mxu0 0.0
      %1860 = vmatpush1.msra.mxu0 0.0
      %1861 = vmatprep.subr.mxu0 0.0
      %1862 = vmatpush1.msra.mxu0 0.0
      %1863 = vmatprep.subr.mxu0 0.0
      %1864 = vmatpush1.msra.mxu0 0.0
      %1865 = vmatprep.subr.mxu0 0.0
      %1866 = vmatpush1.msra.mxu0 0.0
      %1867 = vmatprep.subr.mxu0 0.0
      %1868 = vmatpush1.msra.mxu0 0.0
      %1869 = vmatprep.subr.mxu0 0.0
      %1870 = vmatpush1.msra.mxu0 0.0
      %1871 = vmatprep.mubr.f32.mxu0 0.0
      %1872 = vmatmul.mubr.f32.gmra.mrb[0].mxu0 %v1717
      %v1873 = vpop.f32.mrb[0].mxu0
      %v1874 = vadd.f32 0.0, %v1873
      %v1875 = vpop.f32.mrb[0].mxu0
      %1876 = vmatprep.mubr.f32.mxu0 0.0
      %1877 = vmatmul.mubr.f32.gmra.mrb[0].mxu0 %v1718
      %v1878 = vpop.f32.mrb[0].mxu0
      %v1879 = vadd.f32 0.0, %v1878
      %v1880 = vpop.f32.mrb[0].mxu0
      %1881 = vdwg.mxu0
      %v1882 = vadd.f32 %v1724, %v1797
      %v1883 = vadd.f32 %v1727, %v1803
      %v1884 = vxor.u32 %v1882, 2147483648
      %v1885 = vxor.u32 %v1883, 2147483648
      %v1886 = vmul.f32 %v1884, 1.442695
      %v1887 = vpow.pop %v1886
      %v1888 = vmul.f32 %v1885, 1.442695
      %v1889 = vpow.pop %v1888
      %v1890 = vadd.f32 %v1887, 1.0
      %v1891 = vadd.f32 %v1889, 1.0
      %v1892 = vrcp.pop %v1890
      %v1893 = vmul.f32 1.0, %v1892
      %v1894 = vrcp.pop %v1891
      %v1895 = vmul.f32 1.0, %v1894
      %v1896 = vadd.f32 %v1725, %v1799
      %v1897 = vadd.f32 %v1728, %v1805
      %v1898 = vxor.u32 %v1896, 2147483648
      %v1899 = vxor.u32 %v1897, 2147483648
      %v1900 = vmul.f32 %v1898, 1.442695
      %v1901 = vpow.pop %v1900
      %v1902 = vmul.f32 %v1899, 1.442695
      %v1903 = vpow.pop %v1902
      %v1904 = vadd.f32 %v1901, 1.0
      %v1905 = vadd.f32 %v1903, 1.0
      %v1906 = vrcp.pop %v1904
      %v1907 = vmul.f32 1.0, %v1906
      %v1908 = vrcp.pop %v1905
      %v1909 = vmul.f32 1.0, %v1908
      %v1910 = vadd.f32 %v1874, %v459
      %v1911 = vadd.f32 %v1879, %v459
      %v1912 = vmul.f32 %v1893, %v1910
      %v1913 = vmul.f32 %v1895, %v1911
      %v1914 = vadd.f32 %v1726, %v1912
      %v1915 = vadd.f32 %v1729, %v1913
      %v1916 = vtanh.pop %v1914
      %v1917 = vtanh.pop %v1915
      %v1918 = vsub.f32 1.0, %v1907
      %v1919 = vsub.f32 1.0, %v1909
      %v1920 = vmul.f32 %v1918, %v1916
      %v1921 = vmul.f32 %v1919, %v1917
      %v1922 = vmul.f32 %v1907, %v1717
      %v1923 = vmul.f32 %v1909, %v1718
      %v1924 = vadd.f32 %v1920, %v1922
      %v1925 = vadd.f32 %v1921, %v1923
      %s1926 = scalar_lea.vmem %s199, 192
      %v1927 = vld [vmem:[%s1926] sm:$0xff]
      %v1928 = vld [vmem:[%s1926 + $0x8] sm:$0xf]
      %v1929 = vld [vmem:[%s1926 + $0xc] sm:$0xff]
      %v1930 = vld [vmem:[%s1926 + $0x14] sm:$0xf]
      %v1931 = vunpack.c.l.bf16 %v1927
      %v1932 = vunpack.c.h.bf16 %v1927
      %v1933 = vunpack.c.l.bf16 %v1928
      %v1934 = vunpack.c.l.bf16 %v1929
      %v1935 = vunpack.c.h.bf16 %v1929
      %v1936 = vunpack.c.l.bf16 %v1930
      %1937 = vmatprep.subr.mxu0 %v227
      %1938 = vmatpush1.msra.mxu0 %v226
      %1939 = vmatprep.subr.mxu0 %v230
      %1940 = vmatpush1.msra.mxu0 %v229
      %1941 = vmatprep.subr.mxu0 %v233
      %1942 = vmatpush1.msra.mxu0 %v232
      %1943 = vmatprep.subr.mxu0 %v236
      %1944 = vmatpush1.msra.mxu0 %v235
      %1945 = vmatprep.subr.mxu0 %v239
      %1946 = vmatpush1.msra.mxu0 %v238
      %1947 = vmatprep.subr.mxu0 %v242
      %1948 = vmatpush1.msra.mxu0 %v241
      %1949 = vmatprep.subr.mxu0 %v245
      %1950 = vmatpush1.msra.mxu0 %v244
      %1951 = vmatprep.subr.mxu0 %v248
      %1952 = vmatpush1.msra.mxu0 %v247
      %1953 = vmatprep.subr.mxu0 %v251
      %1954 = vmatpush1.msra.mxu0 %v250
      %1955 = vmatprep.subr.mxu0 %v254
      %1956 = vmatpush1.msra.mxu0 %v253
      %1957 = vmatprep.subr.mxu0 %v257
      %1958 = vmatpush1.msra.mxu0 %v256
      %1959 = vmatprep.subr.mxu0 %v260
      %1960 = vmatpush1.msra.mxu0 %v259
      %1961 = vmatprep.subr.mxu0 %v263
      %1962 = vmatpush1.msra.mxu0 %v262
      %1963 = vmatprep.subr.mxu0 %v266
      %1964 = vmatpush1.msra.mxu0 %v265
      %1965 = vmatprep.subr.mxu0 %v269
      %1966 = vmatpush1.msra.mxu0 %v268
      %1967 = vmatprep.subr.mxu0 %v272
      %1968 = vmatpush1.msra.mxu0 %v271
      %1969 = vmatprep.subr.mxu0 0.0
      %1970 = vmatpush1.msra.mxu0 0.0
      %1971 = vmatprep.subr.mxu0 0.0
      %1972 = vmatpush1.msra.mxu0 0.0
      %1973 = vmatprep.subr.mxu0 0.0
      %1974 = vmatpush1.msra.mxu0 0.0
      %1975 = vmatprep.subr.mxu0 0.0
      %1976 = vmatpush1.msra.mxu0 0.0
      %1977 = vmatprep.subr.mxu0 0.0
      %1978 = vmatpush1.msra.mxu0 0.0
      %1979 = vmatprep.subr.mxu0 0.0
      %1980 = vmatpush1.msra.mxu0 0.0
      %1981 = vmatprep.subr.mxu0 0.0
      %1982 = vmatpush1.msra.mxu0 0.0
      %1983 = vmatprep.subr.mxu0 0.0
      %1984 = vmatpush1.msra.mxu0 0.0
      %1985 = vmatprep.subr.mxu0 0.0
      %1986 = vmatpush1.msra.mxu0 0.0
      %1987 = vmatprep.subr.mxu0 0.0
      %1988 = vmatpush1.msra.mxu0 0.0
      %1989 = vmatprep.subr.mxu0 0.0
      %1990 = vmatpush1.msra.mxu0 0.0
      %1991 = vmatprep.subr.mxu0 0.0
      %1992 = vmatpush1.msra.mxu0 0.0
      %1993 = vmatprep.subr.mxu0 0.0
      %1994 = vmatpush1.msra.mxu0 0.0
      %1995 = vmatprep.subr.mxu0 0.0
      %1996 = vmatpush1.msra.mxu0 0.0
      %1997 = vmatprep.subr.mxu0 0.0
      %1998 = vmatpush1.msra.mxu0 0.0
      %1999 = vmatprep.subr.mxu0 0.0
      %2000 = vmatpush1.msra.mxu0 0.0
      %2001 = vmatprep.mubr.f32.mxu0 0.0
      %2002 = vmatmul.mubr.f32.gmra.mrb[0].mxu0 %v1924
      %v2003 = vpop.f32.mrb[0].mxu0
      %v2004 = vadd.f32 0.0, %v2003
      %v2005 = vpop.f32.mrb[0].mxu0
      %v2006 = vadd.f32 0.0, %v2005
      %2007 = vmatprep.mubr.f32.mxu0 0.0
      %2008 = vmatmul.mubr.f32.gmra.mrb[0].mxu0 %v1925
      %v2009 = vpop.f32.mrb[0].mxu0
      %v2010 = vadd.f32 0.0, %v2009
      %v2011 = vpop.f32.mrb[0].mxu0
      %v2012 = vadd.f32 0.0, %v2011
      %2013 = vdwg.mxu0
      %2014 = vmatprep.subr.mxu0 0.0
      %2015 = vmatpush1.msra.mxu0 %v228
      %2016 = vmatprep.subr.mxu0 0.0
      %2017 = vmatpush1.msra.mxu0 %v231
      %2018 = vmatprep.subr.mxu0 0.0
      %2019 = vmatpush1.msra.mxu0 %v234
      %2020 = vmatprep.subr.mxu0 0.0
      %2021 = vmatpush1.msra.mxu0 %v237
      %2022 = vmatprep.subr.mxu0 0.0
      %2023 = vmatpush1.msra.mxu0 %v240
      %2024 = vmatprep.subr.mxu0 0.0
      %2025 = vmatpush1.msra.mxu0 %v243
      %2026 = vmatprep.subr.mxu0 0.0
      %2027 = vmatpush1.msra.mxu0 %v246
      %2028 = vmatprep.subr.mxu0 0.0
      %2029 = vmatpush1.msra.mxu0 %v249
      %2030 = vmatprep.subr.mxu0 0.0
      %2031 = vmatpush1.msra.mxu0 %v252
      %2032 = vmatprep.subr.mxu0 0.0
      %2033 = vmatpush1.msra.mxu0 %v255
      %2034 = vmatprep.subr.mxu0 0.0
      %2035 = vmatpush1.msra.mxu0 %v258
      %2036 = vmatprep.subr.mxu0 0.0
      %2037 = vmatpush1.msra.mxu0 %v261
      %2038 = vmatprep.subr.mxu0 0.0
      %2039 = vmatpush1.msra.mxu0 %v264
      %2040 = vmatprep.subr.mxu0 0.0
      %2041 = vmatpush1.msra.mxu0 %v267
      %2042 = vmatprep.subr.mxu0 0.0
      %2043 = vmatpush1.msra.mxu0 %v270
      %2044 = vmatprep.subr.mxu0 0.0
      %2045 = vmatpush1.msra.mxu0 %v273
      %2046 = vmatprep.subr.mxu0 0.0
      %2047 = vmatpush1.msra.mxu0 0.0
      %2048 = vmatprep.subr.mxu0 0.0
      %2049 = vmatpush1.msra.mxu0 0.0
      %2050 = vmatprep.subr.mxu0 0.0
      %2051 = vmatpush1.msra.mxu0 0.0
      %2052 = vmatprep.subr.mxu0 0.0
      %2053 = vmatpush1.msra.mxu0 0.0
      %2054 = vmatprep.subr.mxu0 0.0
      %2055 = vmatpush1.msra.mxu0 0.0
      %2056 = vmatprep.subr.mxu0 0.0
      %2057 = vmatpush1.msra.mxu0 0.0
      %2058 = vmatprep.subr.mxu0 0.0
      %2059 = vmatpush1.msra.mxu0 0.0
      %2060 = vmatprep.subr.mxu0 0.0
      %2061 = vmatpush1.msra.mxu0 0.0
      %2062 = vmatprep.subr.mxu0 0.0
      %2063 = vmatpush1.msra.mxu0 0.0
      %2064 = vmatprep.subr.mxu0 0.0
      %2065 = vmatpush1.msra.mxu0 0.0
      %2066 = vmatprep.subr.mxu0 0.0
      %2067 = vmatpush1.msra.mxu0 0.0
      %2068 = vmatprep.subr.mxu0 0.0
      %2069 = vmatpush1.msra.mxu0 0.0
      %2070 = vmatprep.subr.mxu0 0.0
      %2071 = vmatpush1.msra.mxu0 0.0
      %2072 = vmatprep.subr.mxu0 0.0
      %2073 = vmatpush1.msra.mxu0 0.0
      %2074 = vmatprep.subr.mxu0 0.0
      %2075 = vmatpush1.msra.mxu0 0.0
      %2076 = vmatprep.subr.mxu0 0.0
      %2077 = vmatpush1.msra.mxu0 0.0
      %2078 = vmatprep.mubr.f32.mxu0 0.0
      %2079 = vmatmul.mubr.f32.gmra.mrb[0].mxu0 %v1924
      %v2080 = vpop.f32.mrb[0].mxu0
      %v2081 = vadd.f32 0.0, %v2080
      %v2082 = vpop.f32.mrb[0].mxu0
      %2083 = vmatprep.mubr.f32.mxu0 0.0
      %2084 = vmatmul.mubr.f32.gmra.mrb[0].mxu0 %v1925
      %v2085 = vpop.f32.mrb[0].mxu0
      %v2086 = vadd.f32 0.0, %v2085
      %v2087 = vpop.f32.mrb[0].mxu0
      %2088 = vdwg.mxu0
      %v2089 = vadd.f32 %v1931, %v2004
      %v2090 = vadd.f32 %v1934, %v2010
      %v2091 = vxor.u32 %v2089, 2147483648
      %v2092 = vxor.u32 %v2090, 2147483648
      %v2093 = vmul.f32 %v2091, 1.442695
      %v2094 = vpow.pop %v2093
      %v2095 = vmul.f32 %v2092, 1.442695
      %v2096 = vpow.pop %v2095
      %v2097 = vadd.f32 %v2094, 1.0
      %v2098 = vadd.f32 %v2096, 1.0
      %v2099 = vrcp.pop %v2097
      %v2100 = vmul.f32 1.0, %v2099
      %v2101 = vrcp.pop %v2098
      %v2102 = vmul.f32 1.0, %v2101
      %v2103 = vadd.f32 %v1932, %v2006
      %v2104 = vadd.f32 %v1935, %v2012
      %v2105 = vxor.u32 %v2103, 2147483648
      %v2106 = vxor.u32 %v2104, 2147483648
      %v2107 = vmul.f32 %v2105, 1.442695
      %v2108 = vpow.pop %v2107
      %v2109 = vmul.f32 %v2106, 1.442695
      %v2110 = vpow.pop %v2109
      %v2111 = vadd.f32 %v2108, 1.0
      %v2112 = vadd.f32 %v2110, 1.0
      %v2113 = vrcp.pop %v2111
      %v2114 = vmul.f32 1.0, %v2113
      %v2115 = vrcp.pop %v2112
      %v2116 = vmul.f32 1.0, %v2115
      %v2117 = vadd.f32 %v2081, %v459
      %v2118 = vadd.f32 %v2086, %v459
      %v2119 = vmul.f32 %v2100, %v2117
      %v2120 = vmul.f32 %v2102, %v2118
      %v2121 = vadd.f32 %v1933, %v2119
      %v2122 = vadd.f32 %v1936, %v2120
      %v2123 = vtanh.pop %v2121
      %v2124 = vtanh.pop %v2122
      %v2125 = vsub.f32 1.0, %v2114
      %v2126 = vsub.f32 1.0, %v2116
      %v2127 = vmul.f32 %v2125, %v2123
      %v2128 = vmul.f32 %v2126, %v2124
      %v2129 = vmul.f32 %v2114, %v1924
      %v2130 = vmul.f32 %v2116, %v1925
      %v2131 = vadd.f32 %v2127, %v2129
      %v2132 = vadd.f32 %v2128, %v2130
      %s2133 = scalar_lea.vmem %s199, 216
      %v2134 = vld [vmem:[%s2133] sm:$0xff]
      %v2135 = vld [vmem:[%s2133 + $0x8] sm:$0xf]
      %v2136 = vld [vmem:[%s2133 + $0xc] sm:$0xff]
      %v2137 = vld [vmem:[%s2133 + $0x14] sm:$0xf]
      %v2138 = vunpack.c.l.bf16 %v2134
      %v2139 = vunpack.c.h.bf16 %v2134
      %v2140 = vunpack.c.l.bf16 %v2135
      %v2141 = vunpack.c.l.bf16 %v2136
      %v2142 = vunpack.c.h.bf16 %v2136
      %v2143 = vunpack.c.l.bf16 %v2137
      %2144 = vmatprep.subr.mxu0 %v227
      %2145 = vmatpush1.msra.mxu0 %v226
      %2146 = vmatprep.subr.mxu0 %v230
      %2147 = vmatpush1.msra.mxu0 %v229
      %2148 = vmatprep.subr.mxu0 %v233
      %2149 = vmatpush1.msra.mxu0 %v232
      %2150 = vmatprep.subr.mxu0 %v236
      %2151 = vmatpush1.msra.mxu0 %v235
      %2152 = vmatprep.subr.mxu0 %v239
      %2153 = vmatpush1.msra.mxu0 %v238
      %2154 = vmatprep.subr.mxu0 %v242
      %2155 = vmatpush1.msra.mxu0 %v241
      %2156 = vmatprep.subr.mxu0 %v245
      %2157 = vmatpush1.msra.mxu0 %v244
      %2158 = vmatprep.subr.mxu0 %v248
      %2159 = vmatpush1.msra.mxu0 %v247
      %2160 = vmatprep.subr.mxu0 %v251
      %2161 = vmatpush1.msra.mxu0 %v250
      %2162 = vmatprep.subr.mxu0 %v254
      %2163 = vmatpush1.msra.mxu0 %v253
      %2164 = vmatprep.subr.mxu0 %v257
      %2165 = vmatpush1.msra.mxu0 %v256
      %2166 = vmatprep.subr.mxu0 %v260
      %2167 = vmatpush1.msra.mxu0 %v259
      %2168 = vmatprep.subr.mxu0 %v263
      %2169 = vmatpush1.msra.mxu0 %v262
      %2170 = vmatprep.subr.mxu0 %v266
      %2171 = vmatpush1.msra.mxu0 %v265
      %2172 = vmatprep.subr.mxu0 %v269
      %2173 = vmatpush1.msra.mxu0 %v268
      %2174 = vmatprep.subr.mxu0 %v272
      %2175 = vmatpush1.msra.mxu0 %v271
      %2176 = vmatprep.subr.mxu0 0.0
      %2177 = vmatpush1.msra.mxu0 0.0
      %2178 = vmatprep.subr.mxu0 0.0
      %2179 = vmatpush1.msra.mxu0 0.0
      %2180 = vmatprep.subr.mxu0 0.0
      %2181 = vmatpush1.msra.mxu0 0.0
      %2182 = vmatprep.subr.mxu0 0.0
      %2183 = vmatpush1.msra.mxu0 0.0
      %2184 = vmatprep.subr.mxu0 0.0
      %2185 = vmatpush1.msra.mxu0 0.0
      %2186 = vmatprep.subr.mxu0 0.0
      %2187 = vmatpush1.msra.mxu0 0.0
      %2188 = vmatprep.subr.mxu0 0.0
      %2189 = vmatpush1.msra.mxu0 0.0
      %2190 = vmatprep.subr.mxu0 0.0
      %2191 = vmatpush1.msra.mxu0 0.0
      %2192 = vmatprep.subr.mxu0 0.0
      %2193 = vmatpush1.msra.mxu0 0.0
      %2194 = vmatprep.subr.mxu0 0.0
      %2195 = vmatpush1.msra.mxu0 0.0
      %2196 = vmatprep.subr.mxu0 0.0
      %2197 = vmatpush1.msra.mxu0 0.0
      %2198 = vmatprep.subr.mxu0 0.0
      %2199 = vmatpush1.msra.mxu0 0.0
      %2200 = vmatprep.subr.mxu0 0.0
      %2201 = vmatpush1.msra.mxu0 0.0
      %2202 = vmatprep.subr.mxu0 0.0
      %2203 = vmatpush1.msra.mxu0 0.0
      %2204 = vmatprep.subr.mxu0 0.0
      %2205 = vmatpush1.msra.mxu0 0.0
      %2206 = vmatprep.subr.mxu0 0.0
      %2207 = vmatpush1.msra.mxu0 0.0
      %2208 = vmatprep.mubr.f32.mxu0 0.0
      %2209 = vmatmul.mubr.f32.gmra.mrb[0].mxu0 %v2131
      %v2210 = vpop.f32.mrb[0].mxu0
      %v2211 = vadd.f32 0.0, %v2210
      %v2212 = vpop.f32.mrb[0].mxu0
      %v2213 = vadd.f32 0.0, %v2212
      %2214 = vmatprep.mubr.f32.mxu0 0.0
      %2215 = vmatmul.mubr.f32.gmra.mrb[0].mxu0 %v2132
      %v2216 = vpop.f32.mrb[0].mxu0
      %v2217 = vadd.f32 0.0, %v2216
      %v2218 = vpop.f32.mrb[0].mxu0
      %v2219 = vadd.f32 0.0, %v2218
      %2220 = vdwg.mxu0
      %2221 = vmatprep.subr.mxu0 0.0
      %2222 = vmatpush1.msra.mxu0 %v228
      %2223 = vmatprep.subr.mxu0 0.0
      %2224 = vmatpush1.msra.mxu0 %v231
      %2225 = vmatprep.subr.mxu0 0.0
      %2226 = vmatpush1.msra.mxu0 %v234
      %2227 = vmatprep.subr.mxu0 0.0
      %2228 = vmatpush1.msra.mxu0 %v237
      %2229 = vmatprep.subr.mxu0 0.0
      %2230 = vmatpush1.msra.mxu0 %v240
      %2231 = vmatprep.subr.mxu0 0.0
      %2232 = vmatpush1.msra.mxu0 %v243
      %2233 = vmatprep.subr.mxu0 0.0
      %2234 = vmatpush1.msra.mxu0 %v246
      %2235 = vmatprep.subr.mxu0 0.0
      %2236 = vmatpush1.msra.mxu0 %v249
      %2237 = vmatprep.subr.mxu0 0.0
      %2238 = vmatpush1.msra.mxu0 %v252
      %2239 = vmatprep.subr.mxu0 0.0
      %2240 = vmatpush1.msra.mxu0 %v255
      %2241 = vmatprep.subr.mxu0 0.0
      %2242 = vmatpush1.msra.mxu0 %v258
      %2243 = vmatprep.subr.mxu0 0.0
      %2244 = vmatpush1.msra.mxu0 %v261
      %2245 = vmatprep.subr.mxu0 0.0
      %2246 = vmatpush1.msra.mxu0 %v264
      %2247 = vmatprep.subr.mxu0 0.0
      %2248 = vmatpush1.msra.mxu0 %v267
      %2249 = vmatprep.subr.mxu0 0.0
      %2250 = vmatpush1.msra.mxu0 %v270
      %2251 = vmatprep.subr.mxu0 0.0
      %2252 = vmatpush1.msra.mxu0 %v273
      %2253 = vmatprep.subr.mxu0 0.0
      %2254 = vmatpush1.msra.mxu0 0.0
      %2255 = vmatprep.subr.mxu0 0.0
      %2256 = vmatpush1.msra.mxu0 0.0
      %2257 = vmatprep.subr.mxu0 0.0
      %2258 = vmatpush1.msra.mxu0 0.0
      %2259 = vmatprep.subr.mxu0 0.0
      %2260 = vmatpush1.msra.mxu0 0.0
      %2261 = vmatprep.subr.mxu0 0.0
      %2262 = vmatpush1.msra.mxu0 0.0
      %2263 = vmatprep.subr.mxu0 0.0
      %2264 = vmatpush1.msra.mxu0 0.0
      %2265 = vmatprep.subr.mxu0 0.0
      %2266 = vmatpush1.msra.mxu0 0.0
      %2267 = vmatprep.subr.mxu0 0.0
      %2268 = vmatpush1.msra.mxu0 0.0
      %2269 = vmatprep.subr.mxu0 0.0
      %2270 = vmatpush1.msra.mxu0 0.0
      %2271 = vmatprep.subr.mxu0 0.0
      %2272 = vmatpush1.msra.mxu0 0.0
      %2273 = vmatprep.subr.mxu0 0.0
      %2274 = vmatpush1.msra.mxu0 0.0
      %2275 = vmatprep.subr.mxu0 0.0
      %2276 = vmatpush1.msra.mxu0 0.0
      %2277 = vmatprep.subr.mxu0 0.0
      %2278 = vmatpush1.msra.mxu0 0.0
      %2279 = vmatprep.subr.mxu0 0.0
      %2280 = vmatpush1.msra.mxu0 0.0
      %2281 = vmatprep.subr.mxu0 0.0
      %2282 = vmatpush1.msra.mxu0 0.0
      %2283 = vmatprep.subr.mxu0 0.0
      %2284 = vmatpush1.msra.mxu0 0.0
      %2285 = vmatprep.mubr.f32.mxu0 0.0
      %2286 = vmatmul.mubr.f32.gmra.mrb[0].mxu0 %v2131
      %v2287 = vpop.f32.mrb[0].mxu0
      %v2288 = vadd.f32 0.0, %v2287
      %v2289 = vpop.f32.mrb[0].mxu0
      %2290 = vmatprep.mubr.f32.mxu0 0.0
      %2291 = vmatmul.mubr.f32.gmra.mrb[0].mxu0 %v2132
      %v2292 = vpop.f32.mrb[0].mxu0
      %v2293 = vadd.f32 0.0, %v2292
      %v2294 = vpop.f32.mrb[0].mxu0
      %2295 = vdwg.mxu0
      %v2296 = vadd.f32 %v2138, %v2211
      %v2297 = vadd.f32 %v2141, %v2217
      %v2298 = vxor.u32 %v2296, 2147483648
      %v2299 = vxor.u32 %v2297, 2147483648
      %v2300 = vmul.f32 %v2298, 1.442695
      %v2301 = vpow.pop %v2300
      %v2302 = vmul.f32 %v2299, 1.442695
      %v2303 = vpow.pop %v2302
      %v2304 = vadd.f32 %v2301, 1.0
      %v2305 = vadd.f32 %v2303, 1.0
      %v2306 = vrcp.pop %v2304
      %v2307 = vmul.f32 1.0, %v2306
      %v2308 = vrcp.pop %v2305
      %v2309 = vmul.f32 1.0, %v2308
      %v2310 = vadd.f32 %v2139, %v2213
      %v2311 = vadd.f32 %v2142, %v2219
      %v2312 = vxor.u32 %v2310, 2147483648
      %v2313 = vxor.u32 %v2311, 2147483648
      %v2314 = vmul.f32 %v2312, 1.442695
      %v2315 = vpow.pop %v2314
      %v2316 = vmul.f32 %v2313, 1.442695
      %v2317 = vpow.pop %v2316
      %v2318 = vadd.f32 %v2315, 1.0
      %v2319 = vadd.f32 %v2317, 1.0
      %v2320 = vrcp.pop %v2318
      %v2321 = vmul.f32 1.0, %v2320
      %v2322 = vrcp.pop %v2319
      %v2323 = vmul.f32 1.0, %v2322
      %v2324 = vadd.f32 %v2288, %v459
      %v2325 = vadd.f32 %v2293, %v459
      %v2326 = vmul.f32 %v2307, %v2324
      %v2327 = vmul.f32 %v2309, %v2325
      %v2328 = vadd.f32 %v2140, %v2326
      %v2329 = vadd.f32 %v2143, %v2327
      %v2330 = vtanh.pop %v2328
      %v2331 = vtanh.pop %v2329
      %v2332 = vsub.f32 1.0, %v2321
      %v2333 = vsub.f32 1.0, %v2323
      %v2334 = vmul.f32 %v2332, %v2330
      %v2335 = vmul.f32 %v2333, %v2331
      %v2336 = vmul.f32 %v2321, %v2131
      %v2337 = vmul.f32 %v2323, %v2132
      %v2338 = vadd.f32 %v2334, %v2336
      %v2339 = vadd.f32 %v2335, %v2337
      %s2340 = scalar_lea.vmem %s199, 240
      %v2341 = vld [vmem:[%s2340] sm:$0xff]
      %v2342 = vld [vmem:[%s2340 + $0x8] sm:$0xf]
      %v2343 = vld [vmem:[%s2340 + $0xc] sm:$0xff]
      %v2344 = vld [vmem:[%s2340 + $0x14] sm:$0xf]
      %v2345 = vunpack.c.l.bf16 %v2341
      %v2346 = vunpack.c.h.bf16 %v2341
      %v2347 = vunpack.c.l.bf16 %v2342
      %v2348 = vunpack.c.l.bf16 %v2343
      %v2349 = vunpack.c.h.bf16 %v2343
      %v2350 = vunpack.c.l.bf16 %v2344
      %2351 = vmatprep.subr.mxu0 %v227
      %2352 = vmatpush1.msra.mxu0 %v226
      %2353 = vmatprep.subr.mxu0 %v230
      %2354 = vmatpush1.msra.mxu0 %v229
      %2355 = vmatprep.subr.mxu0 %v233
      %2356 = vmatpush1.msra.mxu0 %v232
      %2357 = vmatprep.subr.mxu0 %v236
      %2358 = vmatpush1.msra.mxu0 %v235
      %2359 = vmatprep.subr.mxu0 %v239
      %2360 = vmatpush1.msra.mxu0 %v238
      %2361 = vmatprep.subr.mxu0 %v242
      %2362 = vmatpush1.msra.mxu0 %v241
      %2363 = vmatprep.subr.mxu0 %v245
      %2364 = vmatpush1.msra.mxu0 %v244
      %2365 = vmatprep.subr.mxu0 %v248
      %2366 = vmatpush1.msra.mxu0 %v247
      %2367 = vmatprep.subr.mxu0 %v251
      %2368 = vmatpush1.msra.mxu0 %v250
      %2369 = vmatprep.subr.mxu0 %v254
      %2370 = vmatpush1.msra.mxu0 %v253
      %2371 = vmatprep.subr.mxu0 %v257
      %2372 = vmatpush1.msra.mxu0 %v256
      %2373 = vmatprep.subr.mxu0 %v260
      %2374 = vmatpush1.msra.mxu0 %v259
      %2375 = vmatprep.subr.mxu0 %v263
      %2376 = vmatpush1.msra.mxu0 %v262
      %2377 = vmatprep.subr.mxu0 %v266
      %2378 = vmatpush1.msra.mxu0 %v265
      %2379 = vmatprep.subr.mxu0 %v269
      %2380 = vmatpush1.msra.mxu0 %v268
      %2381 = vmatprep.subr.mxu0 %v272
      %2382 = vmatpush1.msra.mxu0 %v271
      %2383 = vmatprep.subr.mxu0 0.0
      %2384 = vmatpush1.msra.mxu0 0.0
      %2385 = vmatprep.subr.mxu0 0.0
      %2386 = vmatpush1.msra.mxu0 0.0
      %2387 = vmatprep.subr.mxu0 0.0
      %2388 = vmatpush1.msra.mxu0 0.0
      %2389 = vmatprep.subr.mxu0 0.0
      %2390 = vmatpush1.msra.mxu0 0.0
      %2391 = vmatprep.subr.mxu0 0.0
      %2392 = vmatpush1.msra.mxu0 0.0
      %2393 = vmatprep.subr.mxu0 0.0
      %2394 = vmatpush1.msra.mxu0 0.0
      %2395 = vmatprep.subr.mxu0 0.0
      %2396 = vmatpush1.msra.mxu0 0.0
      %2397 = vmatprep.subr.mxu0 0.0
      %2398 = vmatpush1.msra.mxu0 0.0
      %2399 = vmatprep.subr.mxu0 0.0
      %2400 = vmatpush1.msra.mxu0 0.0
      %2401 = vmatprep.subr.mxu0 0.0
      %2402 = vmatpush1.msra.mxu0 0.0
      %2403 = vmatprep.subr.mxu0 0.0
      %2404 = vmatpush1.msra.mxu0 0.0
      %2405 = vmatprep.subr.mxu0 0.0
      %2406 = vmatpush1.msra.mxu0 0.0
      %2407 = vmatprep.subr.mxu0 0.0
      %2408 = vmatpush1.msra.mxu0 0.0
      %2409 = vmatprep.subr.mxu0 0.0
      %2410 = vmatpush1.msra.mxu0 0.0
      %2411 = vmatprep.subr.mxu0 0.0
      %2412 = vmatpush1.msra.mxu0 0.0
      %2413 = vmatprep.subr.mxu0 0.0
      %2414 = vmatpush1.msra.mxu0 0.0
      %2415 = vmatprep.mubr.f32.mxu0 0.0
      %2416 = vmatmul.mubr.f32.gmra.mrb[0].mxu0 %v2338
      %v2417 = vpop.f32.mrb[0].mxu0
      %v2418 = vadd.f32 0.0, %v2417
      %v2419 = vpop.f32.mrb[0].mxu0
      %v2420 = vadd.f32 0.0, %v2419
      %2421 = vmatprep.mubr.f32.mxu0 0.0
      %2422 = vmatmul.mubr.f32.gmra.mrb[0].mxu0 %v2339
      %v2423 = vpop.f32.mrb[0].mxu0
      %v2424 = vadd.f32 0.0, %v2423
      %v2425 = vpop.f32.mrb[0].mxu0
      %v2426 = vadd.f32 0.0, %v2425
      %2427 = vdwg.mxu0
      %2428 = vmatprep.subr.mxu0 0.0
      %2429 = vmatpush1.msra.mxu0 %v228
      %2430 = vmatprep.subr.mxu0 0.0
      %2431 = vmatpush1.msra.mxu0 %v231
      %2432 = vmatprep.subr.mxu0 0.0
      %2433 = vmatpush1.msra.mxu0 %v234
      %2434 = vmatprep.subr.mxu0 0.0
      %2435 = vmatpush1.msra.mxu0 %v237
      %2436 = vmatprep.subr.mxu0 0.0
      %2437 = vmatpush1.msra.mxu0 %v240
      %2438 = vmatprep.subr.mxu0 0.0
      %2439 = vmatpush1.msra.mxu0 %v243
      %2440 = vmatprep.subr.mxu0 0.0
      %2441 = vmatpush1.msra.mxu0 %v246
      %2442 = vmatprep.subr.mxu0 0.0
      %2443 = vmatpush1.msra.mxu0 %v249
      %2444 = vmatprep.subr.mxu0 0.0
      %2445 = vmatpush1.msra.mxu0 %v252
      %2446 = vmatprep.subr.mxu0 0.0
      %2447 = vmatpush1.msra.mxu0 %v255
      %2448 = vmatprep.subr.mxu0 0.0
      %2449 = vmatpush1.msra.mxu0 %v258
      %2450 = vmatprep.subr.mxu0 0.0
      %2451 = vmatpush1.msra.mxu0 %v261
      %2452 = vmatprep.subr.mxu0 0.0
      %2453 = vmatpush1.msra.mxu0 %v264
      %2454 = vmatprep.subr.mxu0 0.0
      %2455 = vmatpush1.msra.mxu0 %v267
      %2456 = vmatprep.subr.mxu0 0.0
      %2457 = vmatpush1.msra.mxu0 %v270
      %2458 = vmatprep.subr.mxu0 0.0
      %2459 = vmatpush1.msra.mxu0 %v273
      %2460 = vmatprep.subr.mxu0 0.0
      %2461 = vmatpush1.msra.mxu0 0.0
      %2462 = vmatprep.subr.mxu0 0.0
      %2463 = vmatpush1.msra.mxu0 0.0
      %2464 = vmatprep.subr.mxu0 0.0
      %2465 = vmatpush1.msra.mxu0 0.0
      %2466 = vmatprep.subr.mxu0 0.0
      %2467 = vmatpush1.msra.mxu0 0.0
      %2468 = vmatprep.subr.mxu0 0.0
      %2469 = vmatpush1.msra.mxu0 0.0
      %2470 = vmatprep.subr.mxu0 0.0
      %2471 = vmatpush1.msra.mxu0 0.0
      %2472 = vmatprep.subr.mxu0 0.0
      %2473 = vmatpush1.msra.mxu0 0.0
      %2474 = vmatprep.subr.mxu0 0.0
      %2475 = vmatpush1.msra.mxu0 0.0
      %2476 = vmatprep.subr.mxu0 0.0
      %2477 = vmatpush1.msra.mxu0 0.0
      %2478 = vmatprep.subr.mxu0 0.0
      %2479 = vmatpush1.msra.mxu0 0.0
      %2480 = vmatprep.subr.mxu0 0.0
      %2481 = vmatpush1.msra.mxu0 0.0
      %2482 = vmatprep.subr.mxu0 0.0
      %2483 = vmatpush1.msra.mxu0 0.0
      %2484 = vmatprep.subr.mxu0 0.0
      %2485 = vmatpush1.msra.mxu0 0.0
      %2486 = vmatprep.subr.mxu0 0.0
      %2487 = vmatpush1.msra.mxu0 0.0
      %2488 = vmatprep.subr.mxu0 0.0
      %2489 = vmatpush1.msra.mxu0 0.0
      %2490 = vmatprep.subr.mxu0 0.0
      %2491 = vmatpush1.msra.mxu0 0.0
      %2492 = vmatprep.mubr.f32.mxu0 0.0
      %2493 = vmatmul.mubr.f32.gmra.mrb[0].mxu0 %v2338
      %v2494 = vpop.f32.mrb[0].mxu0
      %v2495 = vadd.f32 0.0, %v2494
      %v2496 = vpop.f32.mrb[0].mxu0
      %2497 = vmatprep.mubr.f32.mxu0 0.0
      %2498 = vmatmul.mubr.f32.gmra.mrb[0].mxu0 %v2339
      %v2499 = vpop.f32.mrb[0].mxu0
      %v2500 = vadd.f32 0.0, %v2499
      %v2501 = vpop.f32.mrb[0].mxu0
      %2502 = vdwg.mxu0
      %v2503 = vadd.f32 %v2345, %v2418
      %v2504 = vadd.f32 %v2348, %v2424
      %v2505 = vxor.u32 %v2503, 2147483648
      %v2506 = vxor.u32 %v2504, 2147483648
      %v2507 = vmul.f32 %v2505, 1.442695
      %v2508 = vpow.pop %v2507
      %v2509 = vmul.f32 %v2506, 1.442695
      %v2510 = vpow.pop %v2509
      %v2511 = vadd.f32 %v2508, 1.0
      %v2512 = vadd.f32 %v2510, 1.0
      %v2513 = vrcp.pop %v2511
      %v2514 = vmul.f32 1.0, %v2513
      %v2515 = vrcp.pop %v2512
      %v2516 = vmul.f32 1.0, %v2515
      %v2517 = vadd.f32 %v2346, %v2420
      %v2518 = vadd.f32 %v2349, %v2426
      %v2519 = vxor.u32 %v2517, 2147483648
      %v2520 = vxor.u32 %v2518, 2147483648
      %v2521 = vmul.f32 %v2519, 1.442695
      %v2522 = vpow.pop %v2521
      %v2523 = vmul.f32 %v2520, 1.442695
      %v2524 = vpow.pop %v2523
      %v2525 = vadd.f32 %v2522, 1.0
      %v2526 = vadd.f32 %v2524, 1.0
      %v2527 = vrcp.pop %v2525
      %v2528 = vmul.f32 1.0, %v2527
      %v2529 = vrcp.pop %v2526
      %v2530 = vmul.f32 1.0, %v2529
      %v2531 = vadd.f32 %v2495, %v459
      %v2532 = vadd.f32 %v2500, %v459
      %v2533 = vmul.f32 %v2514, %v2531
      %v2534 = vmul.f32 %v2516, %v2532
      %v2535 = vadd.f32 %v2347, %v2533
      %v2536 = vadd.f32 %v2350, %v2534
      %v2537 = vtanh.pop %v2535
      %v2538 = vtanh.pop %v2536
      %v2539 = vsub.f32 1.0, %v2528
      %v2540 = vsub.f32 1.0, %v2530
      %v2541 = vmul.f32 %v2539, %v2537
      %v2542 = vmul.f32 %v2540, %v2538
      %v2543 = vmul.f32 %v2528, %v2338
      %v2544 = vmul.f32 %v2530, %v2339
      %v2545 = vadd.f32 %v2541, %v2543
      %v2546 = vadd.f32 %v2542, %v2544
      %s2547 = scalar_lea.vmem %s199, 264
      %v2548 = vld [vmem:[%s2547] sm:$0xff]
      %v2549 = vld [vmem:[%s2547 + $0x8] sm:$0xf]
      %v2550 = vld [vmem:[%s2547 + $0xc] sm:$0xff]
      %v2551 = vld [vmem:[%s2547 + $0x14] sm:$0xf]
      %v2552 = vunpack.c.l.bf16 %v2548
      %v2553 = vunpack.c.h.bf16 %v2548
      %v2554 = vunpack.c.l.bf16 %v2549
      %v2555 = vunpack.c.l.bf16 %v2550
      %v2556 = vunpack.c.h.bf16 %v2550
      %v2557 = vunpack.c.l.bf16 %v2551
      %2558 = vmatprep.subr.mxu0 %v227
      %2559 = vmatpush1.msra.mxu0 %v226
      %2560 = vmatprep.subr.mxu0 %v230
      %2561 = vmatpush1.msra.mxu0 %v229
      %2562 = vmatprep.subr.mxu0 %v233
      %2563 = vmatpush1.msra.mxu0 %v232
      %2564 = vmatprep.subr.mxu0 %v236
      %2565 = vmatpush1.msra.mxu0 %v235
      %2566 = vmatprep.subr.mxu0 %v239
      %2567 = vmatpush1.msra.mxu0 %v238
      %2568 = vmatprep.subr.mxu0 %v242
      %2569 = vmatpush1.msra.mxu0 %v241
      %2570 = vmatprep.subr.mxu0 %v245
      %2571 = vmatpush1.msra.mxu0 %v244
      %2572 = vmatprep.subr.mxu0 %v248
      %2573 = vmatpush1.msra.mxu0 %v247
      %2574 = vmatprep.subr.mxu0 %v251
      %2575 = vmatpush1.msra.mxu0 %v250
      %2576 = vmatprep.subr.mxu0 %v254
      %2577 = vmatpush1.msra.mxu0 %v253
      %2578 = vmatprep.subr.mxu0 %v257
      %2579 = vmatpush1.msra.mxu0 %v256
      %2580 = vmatprep.subr.mxu0 %v260
      %2581 = vmatpush1.msra.mxu0 %v259
      %2582 = vmatprep.subr.mxu0 %v263
      %2583 = vmatpush1.msra.mxu0 %v262
      %2584 = vmatprep.subr.mxu0 %v266
      %2585 = vmatpush1.msra.mxu0 %v265
      %2586 = vmatprep.subr.mxu0 %v269
      %2587 = vmatpush1.msra.mxu0 %v268
      %2588 = vmatprep.subr.mxu0 %v272
      %2589 = vmatpush1.msra.mxu0 %v271
      %2590 = vmatprep.subr.mxu0 0.0
      %2591 = vmatpush1.msra.mxu0 0.0
      %2592 = vmatprep.subr.mxu0 0.0
      %2593 = vmatpush1.msra.mxu0 0.0
      %2594 = vmatprep.subr.mxu0 0.0
      %2595 = vmatpush1.msra.mxu0 0.0
      %2596 = vmatprep.subr.mxu0 0.0
      %2597 = vmatpush1.msra.mxu0 0.0
      %2598 = vmatprep.subr.mxu0 0.0
      %2599 = vmatpush1.msra.mxu0 0.0
      %2600 = vmatprep.subr.mxu0 0.0
      %2601 = vmatpush1.msra.mxu0 0.0
      %2602 = vmatprep.subr.mxu0 0.0
      %2603 = vmatpush1.msra.mxu0 0.0
      %2604 = vmatprep.subr.mxu0 0.0
      %2605 = vmatpush1.msra.mxu0 0.0
      %2606 = vmatprep.subr.mxu0 0.0
      %2607 = vmatpush1.msra.mxu0 0.0
      %2608 = vmatprep.subr.mxu0 0.0
      %2609 = vmatpush1.msra.mxu0 0.0
      %2610 = vmatprep.subr.mxu0 0.0
      %2611 = vmatpush1.msra.mxu0 0.0
      %2612 = vmatprep.subr.mxu0 0.0
      %2613 = vmatpush1.msra.mxu0 0.0
      %2614 = vmatprep.subr.mxu0 0.0
      %2615 = vmatpush1.msra.mxu0 0.0
      %2616 = vmatprep.subr.mxu0 0.0
      %2617 = vmatpush1.msra.mxu0 0.0
      %2618 = vmatprep.subr.mxu0 0.0
      %2619 = vmatpush1.msra.mxu0 0.0
      %2620 = vmatprep.subr.mxu0 0.0
      %2621 = vmatpush1.msra.mxu0 0.0
      %2622 = vmatprep.mubr.f32.mxu0 0.0
      %2623 = vmatmul.mubr.f32.gmra.mrb[0].mxu0 %v2545
      %v2624 = vpop.f32.mrb[0].mxu0
      %v2625 = vadd.f32 0.0, %v2624
      %v2626 = vpop.f32.mrb[0].mxu0
      %v2627 = vadd.f32 0.0, %v2626
      %2628 = vmatprep.mubr.f32.mxu0 0.0
      %2629 = vmatmul.mubr.f32.gmra.mrb[0].mxu0 %v2546
      %v2630 = vpop.f32.mrb[0].mxu0
      %v2631 = vadd.f32 0.0, %v2630
      %v2632 = vpop.f32.mrb[0].mxu0
      %v2633 = vadd.f32 0.0, %v2632
      %2634 = vdwg.mxu0
      %2635 = vmatprep.subr.mxu0 0.0
      %2636 = vmatpush1.msra.mxu0 %v228
      %2637 = vmatprep.subr.mxu0 0.0
      %2638 = vmatpush1.msra.mxu0 %v231
      %2639 = vmatprep.subr.mxu0 0.0
      %2640 = vmatpush1.msra.mxu0 %v234
      %2641 = vmatprep.subr.mxu0 0.0
      %2642 = vmatpush1.msra.mxu0 %v237
      %2643 = vmatprep.subr.mxu0 0.0
      %2644 = vmatpush1.msra.mxu0 %v240
      %2645 = vmatprep.subr.mxu0 0.0
      %2646 = vmatpush1.msra.mxu0 %v243
      %2647 = vmatprep.subr.mxu0 0.0
      %2648 = vmatpush1.msra.mxu0 %v246
      %2649 = vmatprep.subr.mxu0 0.0
      %2650 = vmatpush1.msra.mxu0 %v249
      %2651 = vmatprep.subr.mxu0 0.0
      %2652 = vmatpush1.msra.mxu0 %v252
      %2653 = vmatprep.subr.mxu0 0.0
      %2654 = vmatpush1.msra.mxu0 %v255
      %2655 = vmatprep.subr.mxu0 0.0
      %2656 = vmatpush1.msra.mxu0 %v258
      %2657 = vmatprep.subr.mxu0 0.0
      %2658 = vmatpush1.msra.mxu0 %v261
      %2659 = vmatprep.subr.mxu0 0.0
      %2660 = vmatpush1.msra.mxu0 %v264
      %2661 = vmatprep.subr.mxu0 0.0
      %2662 = vmatpush1.msra.mxu0 %v267
      %2663 = vmatprep.subr.mxu0 0.0
      %2664 = vmatpush1.msra.mxu0 %v270
      %2665 = vmatprep.subr.mxu0 0.0
      %2666 = vmatpush1.msra.mxu0 %v273
      %2667 = vmatprep.subr.mxu0 0.0
      %2668 = vmatpush1.msra.mxu0 0.0
      %2669 = vmatprep.subr.mxu0 0.0
      %2670 = vmatpush1.msra.mxu0 0.0
      %2671 = vmatprep.subr.mxu0 0.0
      %2672 = vmatpush1.msra.mxu0 0.0
      %2673 = vmatprep.subr.mxu0 0.0
      %2674 = vmatpush1.msra.mxu0 0.0
      %2675 = vmatprep.subr.mxu0 0.0
      %2676 = vmatpush1.msra.mxu0 0.0
      %2677 = vmatprep.subr.mxu0 0.0
      %2678 = vmatpush1.msra.mxu0 0.0
      %2679 = vmatprep.subr.mxu0 0.0
      %2680 = vmatpush1.msra.mxu0 0.0
      %2681 = vmatprep.subr.mxu0 0.0
      %2682 = vmatpush1.msra.mxu0 0.0
      %2683 = vmatprep.subr.mxu0 0.0
      %2684 = vmatpush1.msra.mxu0 0.0
      %2685 = vmatprep.subr.mxu0 0.0
      %2686 = vmatpush1.msra.mxu0 0.0
      %2687 = vmatprep.subr.mxu0 0.0
      %2688 = vmatpush1.msra.mxu0 0.0
      %2689 = vmatprep.subr.mxu0 0.0
      %2690 = vmatpush1.msra.mxu0 0.0
      %2691 = vmatprep.subr.mxu0 0.0
      %2692 = vmatpush1.msra.mxu0 0.0
      %2693 = vmatprep.subr.mxu0 0.0
      %2694 = vmatpush1.msra.mxu0 0.0
      %2695 = vmatprep.subr.mxu0 0.0
      %2696 = vmatpush1.msra.mxu0 0.0
      %2697 = vmatprep.subr.mxu0 0.0
      %2698 = vmatpush1.msra.mxu0 0.0
      %2699 = vmatprep.mubr.f32.mxu0 0.0
      %2700 = vmatmul.mubr.f32.gmra.mrb[0].mxu0 %v2545
      %v2701 = vpop.f32.mrb[0].mxu0
      %v2702 = vadd.f32 0.0, %v2701
      %v2703 = vpop.f32.mrb[0].mxu0
      %2704 = vmatprep.mubr.f32.mxu0 0.0
      %2705 = vmatmul.mubr.f32.gmra.mrb[0].mxu0 %v2546
      %v2706 = vpop.f32.mrb[0].mxu0
      %v2707 = vadd.f32 0.0, %v2706
      %v2708 = vpop.f32.mrb[0].mxu0
      %2709 = vdwg.mxu0
      %v2710 = vadd.f32 %v2552, %v2625
      %v2711 = vadd.f32 %v2555, %v2631
      %v2712 = vxor.u32 %v2710, 2147483648
      %v2713 = vxor.u32 %v2711, 2147483648
      %v2714 = vmul.f32 %v2712, 1.442695
      %v2715 = vpow.pop %v2714
      %v2716 = vmul.f32 %v2713, 1.442695
      %v2717 = vpow.pop %v2716
      %v2718 = vadd.f32 %v2715, 1.0
      %v2719 = vadd.f32 %v2717, 1.0
      %v2720 = vrcp.pop %v2718
      %v2721 = vmul.f32 1.0, %v2720
      %v2722 = vrcp.pop %v2719
      %v2723 = vmul.f32 1.0, %v2722
      %v2724 = vadd.f32 %v2553, %v2627
      %v2725 = vadd.f32 %v2556, %v2633
      %v2726 = vxor.u32 %v2724, 2147483648
      %v2727 = vxor.u32 %v2725, 2147483648
      %v2728 = vmul.f32 %v2726, 1.442695
      %v2729 = vpow.pop %v2728
      %v2730 = vmul.f32 %v2727, 1.442695
      %v2731 = vpow.pop %v2730
      %v2732 = vadd.f32 %v2729, 1.0
      %v2733 = vadd.f32 %v2731, 1.0
      %v2734 = vrcp.pop %v2732
      %v2735 = vmul.f32 1.0, %v2734
      %v2736 = vrcp.pop %v2733
      %v2737 = vmul.f32 1.0, %v2736
      %v2738 = vadd.f32 %v2702, %v459
      %v2739 = vadd.f32 %v2707, %v459
      %v2740 = vmul.f32 %v2721, %v2738
      %v2741 = vmul.f32 %v2723, %v2739
      %v2742 = vadd.f32 %v2554, %v2740
      %v2743 = vadd.f32 %v2557, %v2741
      %v2744 = vtanh.pop %v2742
      %v2745 = vtanh.pop %v2743
      %v2746 = vsub.f32 1.0, %v2735
      %v2747 = vsub.f32 1.0, %v2737
      %v2748 = vmul.f32 %v2746, %v2744
      %v2749 = vmul.f32 %v2747, %v2745
      %v2750 = vmul.f32 %v2735, %v2545
      %v2751 = vmul.f32 %v2737, %v2546
      %v2752 = vadd.f32 %v2748, %v2750
      %v2753 = vadd.f32 %v2749, %v2751
      %s2754 = scalar_lea.vmem %s199, 288
      %v2755 = vld [vmem:[%s2754] sm:$0xff]
      %v2756 = vld [vmem:[%s2754 + $0x8] sm:$0xf]
      %v2757 = vld [vmem:[%s2754 + $0xc] sm:$0xff]
      %v2758 = vld [vmem:[%s2754 + $0x14] sm:$0xf]
      %v2759 = vunpack.c.l.bf16 %v2755
      %v2760 = vunpack.c.h.bf16 %v2755
      %v2761 = vunpack.c.l.bf16 %v2756
      %v2762 = vunpack.c.l.bf16 %v2757
      %v2763 = vunpack.c.h.bf16 %v2757
      %v2764 = vunpack.c.l.bf16 %v2758
      %2765 = vmatprep.subr.mxu0 %v227
      %2766 = vmatpush1.msra.mxu0 %v226
      %2767 = vmatprep.subr.mxu0 %v230
      %2768 = vmatpush1.msra.mxu0 %v229
      %2769 = vmatprep.subr.mxu0 %v233
      %2770 = vmatpush1.msra.mxu0 %v232
      %2771 = vmatprep.subr.mxu0 %v236
      %2772 = vmatpush1.msra.mxu0 %v235
      %2773 = vmatprep.subr.mxu0 %v239
      %2774 = vmatpush1.msra.mxu0 %v238
      %2775 = vmatprep.subr.mxu0 %v242
      %2776 = vmatpush1.msra.mxu0 %v241
      %2777 = vmatprep.subr.mxu0 %v245
      %2778 = vmatpush1.msra.mxu0 %v244
      %2779 = vmatprep.subr.mxu0 %v248
      %2780 = vmatpush1.msra.mxu0 %v247
      %2781 = vmatprep.subr.mxu0 %v251
      %2782 = vmatpush1.msra.mxu0 %v250
      %2783 = vmatprep.subr.mxu0 %v254
      %2784 = vmatpush1.msra.mxu0 %v253
      %2785 = vmatprep.subr.mxu0 %v257
      %2786 = vmatpush1.msra.mxu0 %v256
      %2787 = vmatprep.subr.mxu0 %v260
      %2788 = vmatpush1.msra.mxu0 %v259
      %2789 = vmatprep.subr.mxu0 %v263
      %2790 = vmatpush1.msra.mxu0 %v262
      %2791 = vmatprep.subr.mxu0 %v266
      %2792 = vmatpush1.msra.mxu0 %v265
      %2793 = vmatprep.subr.mxu0 %v269
      %2794 = vmatpush1.msra.mxu0 %v268
      %2795 = vmatprep.subr.mxu0 %v272
      %2796 = vmatpush1.msra.mxu0 %v271
      %2797 = vmatprep.subr.mxu0 0.0
      %2798 = vmatpush1.msra.mxu0 0.0
      %2799 = vmatprep.subr.mxu0 0.0
      %2800 = vmatpush1.msra.mxu0 0.0
      %2801 = vmatprep.subr.mxu0 0.0
      %2802 = vmatpush1.msra.mxu0 0.0
      %2803 = vmatprep.subr.mxu0 0.0
      %2804 = vmatpush1.msra.mxu0 0.0
      %2805 = vmatprep.subr.mxu0 0.0
      %2806 = vmatpush1.msra.mxu0 0.0
      %2807 = vmatprep.subr.mxu0 0.0
      %2808 = vmatpush1.msra.mxu0 0.0
      %2809 = vmatprep.subr.mxu0 0.0
      %2810 = vmatpush1.msra.mxu0 0.0
      %2811 = vmatprep.subr.mxu0 0.0
      %2812 = vmatpush1.msra.mxu0 0.0
      %2813 = vmatprep.subr.mxu0 0.0
      %2814 = vmatpush1.msra.mxu0 0.0
      %2815 = vmatprep.subr.mxu0 0.0
      %2816 = vmatpush1.msra.mxu0 0.0
      %2817 = vmatprep.subr.mxu0 0.0
      %2818 = vmatpush1.msra.mxu0 0.0
      %2819 = vmatprep.subr.mxu0 0.0
      %2820 = vmatpush1.msra.mxu0 0.0
      %2821 = vmatprep.subr.mxu0 0.0
      %2822 = vmatpush1.msra.mxu0 0.0
      %2823 = vmatprep.subr.mxu0 0.0
      %2824 = vmatpush1.msra.mxu0 0.0
      %2825 = vmatprep.subr.mxu0 0.0
      %2826 = vmatpush1.msra.mxu0 0.0
      %2827 = vmatprep.subr.mxu0 0.0
      %2828 = vmatpush1.msra.mxu0 0.0
      %2829 = vmatprep.mubr.f32.mxu0 0.0
      %2830 = vmatmul.mubr.f32.gmra.mrb[0].mxu0 %v2752
      %v2831 = vpop.f32.mrb[0].mxu0
      %v2832 = vadd.f32 0.0, %v2831
      %v2833 = vpop.f32.mrb[0].mxu0
      %v2834 = vadd.f32 0.0, %v2833
      %2835 = vmatprep.mubr.f32.mxu0 0.0
      %2836 = vmatmul.mubr.f32.gmra.mrb[0].mxu0 %v2753
      %v2837 = vpop.f32.mrb[0].mxu0
      %v2838 = vadd.f32 0.0, %v2837
      %v2839 = vpop.f32.mrb[0].mxu0
      %v2840 = vadd.f32 0.0, %v2839
      %2841 = vdwg.mxu0
      %2842 = vmatprep.subr.mxu0 0.0
      %2843 = vmatpush1.msra.mxu0 %v228
      %2844 = vmatprep.subr.mxu0 0.0
      %2845 = vmatpush1.msra.mxu0 %v231
      %2846 = vmatprep.subr.mxu0 0.0
      %2847 = vmatpush1.msra.mxu0 %v234
      %2848 = vmatprep.subr.mxu0 0.0
      %2849 = vmatpush1.msra.mxu0 %v237
      %2850 = vmatprep.subr.mxu0 0.0
      %2851 = vmatpush1.msra.mxu0 %v240
      %2852 = vmatprep.subr.mxu0 0.0
      %2853 = vmatpush1.msra.mxu0 %v243
      %2854 = vmatprep.subr.mxu0 0.0
      %2855 = vmatpush1.msra.mxu0 %v246
      %2856 = vmatprep.subr.mxu0 0.0
      %2857 = vmatpush1.msra.mxu0 %v249
      %2858 = vmatprep.subr.mxu0 0.0
      %2859 = vmatpush1.msra.mxu0 %v252
      %2860 = vmatprep.subr.mxu0 0.0
      %2861 = vmatpush1.msra.mxu0 %v255
      %2862 = vmatprep.subr.mxu0 0.0
      %2863 = vmatpush1.msra.mxu0 %v258
      %2864 = vmatprep.subr.mxu0 0.0
      %2865 = vmatpush1.msra.mxu0 %v261
      %2866 = vmatprep.subr.mxu0 0.0
      %2867 = vmatpush1.msra.mxu0 %v264
      %2868 = vmatprep.subr.mxu0 0.0
      %2869 = vmatpush1.msra.mxu0 %v267
      %2870 = vmatprep.subr.mxu0 0.0
      %2871 = vmatpush1.msra.mxu0 %v270
      %2872 = vmatprep.subr.mxu0 0.0
      %2873 = vmatpush1.msra.mxu0 %v273
      %2874 = vmatprep.subr.mxu0 0.0
      %2875 = vmatpush1.msra.mxu0 0.0
      %2876 = vmatprep.subr.mxu0 0.0
      %2877 = vmatpush1.msra.mxu0 0.0
      %2878 = vmatprep.subr.mxu0 0.0
      %2879 = vmatpush1.msra.mxu0 0.0
      %2880 = vmatprep.subr.mxu0 0.0
      %2881 = vmatpush1.msra.mxu0 0.0
      %2882 = vmatprep.subr.mxu0 0.0
      %2883 = vmatpush1.msra.mxu0 0.0
      %2884 = vmatprep.subr.mxu0 0.0
      %2885 = vmatpush1.msra.mxu0 0.0
      %2886 = vmatprep.subr.mxu0 0.0
      %2887 = vmatpush1.msra.mxu0 0.0
      %2888 = vmatprep.subr.mxu0 0.0
      %2889 = vmatpush1.msra.mxu0 0.0
      %2890 = vmatprep.subr.mxu0 0.0
      %2891 = vmatpush1.msra.mxu0 0.0
      %2892 = vmatprep.subr.mxu0 0.0
      %2893 = vmatpush1.msra.mxu0 0.0
      %2894 = vmatprep.subr.mxu0 0.0
      %2895 = vmatpush1.msra.mxu0 0.0
      %2896 = vmatprep.subr.mxu0 0.0
      %2897 = vmatpush1.msra.mxu0 0.0
      %2898 = vmatprep.subr.mxu0 0.0
      %2899 = vmatpush1.msra.mxu0 0.0
      %2900 = vmatprep.subr.mxu0 0.0
      %2901 = vmatpush1.msra.mxu0 0.0
      %2902 = vmatprep.subr.mxu0 0.0
      %2903 = vmatpush1.msra.mxu0 0.0
      %2904 = vmatprep.subr.mxu0 0.0
      %2905 = vmatpush1.msra.mxu0 0.0
      %2906 = vmatprep.mubr.f32.mxu0 0.0
      %2907 = vmatmul.mubr.f32.gmra.mrb[0].mxu0 %v2752
      %v2908 = vpop.f32.mrb[0].mxu0
      %v2909 = vadd.f32 0.0, %v2908
      %v2910 = vpop.f32.mrb[0].mxu0
      %2911 = vmatprep.mubr.f32.mxu0 0.0
      %2912 = vmatmul.mubr.f32.gmra.mrb[0].mxu0 %v2753
      %v2913 = vpop.f32.mrb[0].mxu0
      %v2914 = vadd.f32 0.0, %v2913
      %v2915 = vpop.f32.mrb[0].mxu0
      %2916 = vdwg.mxu0
      %v2917 = vadd.f32 %v2759, %v2832
      %v2918 = vadd.f32 %v2762, %v2838
      %v2919 = vxor.u32 %v2917, 2147483648
      %v2920 = vxor.u32 %v2918, 2147483648
      %v2921 = vmul.f32 %v2919, 1.442695
      %v2922 = vpow.pop %v2921
      %v2923 = vmul.f32 %v2920, 1.442695
      %v2924 = vpow.pop %v2923
      %v2925 = vadd.f32 %v2922, 1.0
      %v2926 = vadd.f32 %v2924, 1.0
      %v2927 = vrcp.pop %v2925
      %v2928 = vmul.f32 1.0, %v2927
      %v2929 = vrcp.pop %v2926
      %v2930 = vmul.f32 1.0, %v2929
      %v2931 = vadd.f32 %v2760, %v2834
      %v2932 = vadd.f32 %v2763, %v2840
      %v2933 = vxor.u32 %v2931, 2147483648
      %v2934 = vxor.u32 %v2932, 2147483648
      %v2935 = vmul.f32 %v2933, 1.442695
      %v2936 = vpow.pop %v2935
      %v2937 = vmul.f32 %v2934, 1.442695
      %v2938 = vpow.pop %v2937
      %v2939 = vadd.f32 %v2936, 1.0
      %v2940 = vadd.f32 %v2938, 1.0
      %v2941 = vrcp.pop %v2939
      %v2942 = vmul.f32 1.0, %v2941
      %v2943 = vrcp.pop %v2940
      %v2944 = vmul.f32 1.0, %v2943
      %v2945 = vadd.f32 %v2909, %v459
      %v2946 = vadd.f32 %v2914, %v459
      %v2947 = vmul.f32 %v2928, %v2945
      %v2948 = vmul.f32 %v2930, %v2946
      %v2949 = vadd.f32 %v2761, %v2947
      %v2950 = vadd.f32 %v2764, %v2948
      %v2951 = vtanh.pop %v2949
      %v2952 = vtanh.pop %v2950
      %v2953 = vsub.f32 1.0, %v2942
      %v2954 = vsub.f32 1.0, %v2944
      %v2955 = vmul.f32 %v2953, %v2951
      %v2956 = vmul.f32 %v2954, %v2952
      %v2957 = vmul.f32 %v2942, %v2752
      %v2958 = vmul.f32 %v2944, %v2753
      %v2959 = vadd.f32 %v2955, %v2957
      %v2960 = vadd.f32 %v2956, %v2958
      %s2961 = scalar_lea.vmem %s199, 312
      %v2962 = vld [vmem:[%s2961] sm:$0xff]
      %v2963 = vld [vmem:[%s2961 + $0x8] sm:$0xf]
      %v2964 = vld [vmem:[%s2961 + $0xc] sm:$0xff]
      %v2965 = vld [vmem:[%s2961 + $0x14] sm:$0xf]
      %v2966 = vunpack.c.l.bf16 %v2962
      %v2967 = vunpack.c.h.bf16 %v2962
      %v2968 = vunpack.c.l.bf16 %v2963
      %v2969 = vunpack.c.l.bf16 %v2964
      %v2970 = vunpack.c.h.bf16 %v2964
      %v2971 = vunpack.c.l.bf16 %v2965
      %2972 = vmatprep.subr.mxu0 %v227
      %2973 = vmatpush1.msra.mxu0 %v226
      %2974 = vmatprep.subr.mxu0 %v230
      %2975 = vmatpush1.msra.mxu0 %v229
      %2976 = vmatprep.subr.mxu0 %v233
      %2977 = vmatpush1.msra.mxu0 %v232
      %2978 = vmatprep.subr.mxu0 %v236
      %2979 = vmatpush1.msra.mxu0 %v235
      %2980 = vmatprep.subr.mxu0 %v239
      %2981 = vmatpush1.msra.mxu0 %v238
      %2982 = vmatprep.subr.mxu0 %v242
      %2983 = vmatpush1.msra.mxu0 %v241
      %2984 = vmatprep.subr.mxu0 %v245
      %2985 = vmatpush1.msra.mxu0 %v244
      %2986 = vmatprep.subr.mxu0 %v248
      %2987 = vmatpush1.msra.mxu0 %v247
      %2988 = vmatprep.subr.mxu0 %v251
      %2989 = vmatpush1.msra.mxu0 %v250
      %2990 = vmatprep.subr.mxu0 %v254
      %2991 = vmatpush1.msra.mxu0 %v253
      %2992 = vmatprep.subr.mxu0 %v257
      %2993 = vmatpush1.msra.mxu0 %v256
      %2994 = vmatprep.subr.mxu0 %v260
      %2995 = vmatpush1.msra.mxu0 %v259
      %2996 = vmatprep.subr.mxu0 %v263
      %2997 = vmatpush1.msra.mxu0 %v262
      %2998 = vmatprep.subr.mxu0 %v266
      %2999 = vmatpush1.msra.mxu0 %v265
      %3000 = vmatprep.subr.mxu0 %v269
      %3001 = vmatpush1.msra.mxu0 %v268
      %3002 = vmatprep.subr.mxu0 %v272
      %3003 = vmatpush1.msra.mxu0 %v271
      %3004 = vmatprep.subr.mxu0 0.0
      %3005 = vmatpush1.msra.mxu0 0.0
      %3006 = vmatprep.subr.mxu0 0.0
      %3007 = vmatpush1.msra.mxu0 0.0
      %3008 = vmatprep.subr.mxu0 0.0
      %3009 = vmatpush1.msra.mxu0 0.0
      %3010 = vmatprep.subr.mxu0 0.0
      %3011 = vmatpush1.msra.mxu0 0.0
      %3012 = vmatprep.subr.mxu0 0.0
      %3013 = vmatpush1.msra.mxu0 0.0
      %3014 = vmatprep.subr.mxu0 0.0
      %3015 = vmatpush1.msra.mxu0 0.0
      %3016 = vmatprep.subr.mxu0 0.0
      %3017 = vmatpush1.msra.mxu0 0.0
      %3018 = vmatprep.subr.mxu0 0.0
      %3019 = vmatpush1.msra.mxu0 0.0
      %3020 = vmatprep.subr.mxu0 0.0
      %3021 = vmatpush1.msra.mxu0 0.0
      %3022 = vmatprep.subr.mxu0 0.0
      %3023 = vmatpush1.msra.mxu0 0.0
      %3024 = vmatprep.subr.mxu0 0.0
      %3025 = vmatpush1.msra.mxu0 0.0
      %3026 = vmatprep.subr.mxu0 0.0
      %3027 = vmatpush1.msra.mxu0 0.0
      %3028 = vmatprep.subr.mxu0 0.0
      %3029 = vmatpush1.msra.mxu0 0.0
      %3030 = vmatprep.subr.mxu0 0.0
      %3031 = vmatpush1.msra.mxu0 0.0
      %3032 = vmatprep.subr.mxu0 0.0
      %3033 = vmatpush1.msra.mxu0 0.0
      %3034 = vmatprep.subr.mxu0 0.0
      %3035 = vmatpush1.msra.mxu0 0.0
      %3036 = vmatprep.mubr.f32.mxu0 0.0
      %3037 = vmatmul.mubr.f32.gmra.mrb[0].mxu0 %v2959
      %v3038 = vpop.f32.mrb[0].mxu0
      %v3039 = vadd.f32 0.0, %v3038
      %v3040 = vpop.f32.mrb[0].mxu0
      %v3041 = vadd.f32 0.0, %v3040
      %3042 = vmatprep.mubr.f32.mxu0 0.0
      %3043 = vmatmul.mubr.f32.gmra.mrb[0].mxu0 %v2960
      %v3044 = vpop.f32.mrb[0].mxu0
      %v3045 = vadd.f32 0.0, %v3044
      %v3046 = vpop.f32.mrb[0].mxu0
      %v3047 = vadd.f32 0.0, %v3046
      %3048 = vdwg.mxu0
      %3049 = vmatprep.subr.mxu0 0.0
      %3050 = vmatpush1.msra.mxu0 %v228
      %3051 = vmatprep.subr.mxu0 0.0
      %3052 = vmatpush1.msra.mxu0 %v231
      %3053 = vmatprep.subr.mxu0 0.0
      %3054 = vmatpush1.msra.mxu0 %v234
      %3055 = vmatprep.subr.mxu0 0.0
      %3056 = vmatpush1.msra.mxu0 %v237
      %3057 = vmatprep.subr.mxu0 0.0
      %3058 = vmatpush1.msra.mxu0 %v240
      %3059 = vmatprep.subr.mxu0 0.0
      %3060 = vmatpush1.msra.mxu0 %v243
      %3061 = vmatprep.subr.mxu0 0.0
      %3062 = vmatpush1.msra.mxu0 %v246
      %3063 = vmatprep.subr.mxu0 0.0
      %3064 = vmatpush1.msra.mxu0 %v249
      %3065 = vmatprep.subr.mxu0 0.0
      %3066 = vmatpush1.msra.mxu0 %v252
      %3067 = vmatprep.subr.mxu0 0.0
      %3068 = vmatpush1.msra.mxu0 %v255
      %3069 = vmatprep.subr.mxu0 0.0
      %3070 = vmatpush1.msra.mxu0 %v258
      %3071 = vmatprep.subr.mxu0 0.0
      %3072 = vmatpush1.msra.mxu0 %v261
      %3073 = vmatprep.subr.mxu0 0.0
      %3074 = vmatpush1.msra.mxu0 %v264
      %3075 = vmatprep.subr.mxu0 0.0
      %3076 = vmatpush1.msra.mxu0 %v267
      %3077 = vmatprep.subr.mxu0 0.0
      %3078 = vmatpush1.msra.mxu0 %v270
      %3079 = vmatprep.subr.mxu0 0.0
      %3080 = vmatpush1.msra.mxu0 %v273
      %3081 = vmatprep.subr.mxu0 0.0
      %3082 = vmatpush1.msra.mxu0 0.0
      %3083 = vmatprep.subr.mxu0 0.0
      %3084 = vmatpush1.msra.mxu0 0.0
      %3085 = vmatprep.subr.mxu0 0.0
      %3086 = vmatpush1.msra.mxu0 0.0
      %3087 = vmatprep.subr.mxu0 0.0
      %3088 = vmatpush1.msra.mxu0 0.0
      %3089 = vmatprep.subr.mxu0 0.0
      %3090 = vmatpush1.msra.mxu0 0.0
      %3091 = vmatprep.subr.mxu0 0.0
      %3092 = vmatpush1.msra.mxu0 0.0
      %3093 = vmatprep.subr.mxu0 0.0
      %3094 = vmatpush1.msra.mxu0 0.0
      %3095 = vmatprep.subr.mxu0 0.0
      %3096 = vmatpush1.msra.mxu0 0.0
      %3097 = vmatprep.subr.mxu0 0.0
      %3098 = vmatpush1.msra.mxu0 0.0
      %3099 = vmatprep.subr.mxu0 0.0
      %3100 = vmatpush1.msra.mxu0 0.0
      %3101 = vmatprep.subr.mxu0 0.0
      %3102 = vmatpush1.msra.mxu0 0.0
      %3103 = vmatprep.subr.mxu0 0.0
      %3104 = vmatpush1.msra.mxu0 0.0
      %3105 = vmatprep.subr.mxu0 0.0
      %3106 = vmatpush1.msra.mxu0 0.0
      %3107 = vmatprep.subr.mxu0 0.0
      %3108 = vmatpush1.msra.mxu0 0.0
      %3109 = vmatprep.subr.mxu0 0.0
      %3110 = vmatpush1.msra.mxu0 0.0
      %3111 = vmatprep.subr.mxu0 0.0
      %3112 = vmatpush1.msra.mxu0 0.0
      %3113 = vmatprep.mubr.f32.mxu0 0.0
      %3114 = vmatmul.mubr.f32.gmra.mrb[0].mxu0 %v2959
      %v3115 = vpop.f32.mrb[0].mxu0
      %v3116 = vadd.f32 0.0, %v3115
      %v3117 = vpop.f32.mrb[0].mxu0
      %3118 = vmatprep.mubr.f32.mxu0 0.0
      %3119 = vmatmul.mubr.f32.gmra.mrb[0].mxu0 %v2960
      %v3120 = vpop.f32.mrb[0].mxu0
      %v3121 = vadd.f32 0.0, %v3120
      %v3122 = vpop.f32.mrb[0].mxu0
      %3123 = vdwg.mxu0
      %v3124 = vadd.f32 %v2966, %v3039
      %v3125 = vadd.f32 %v2969, %v3045
      %v3126 = vxor.u32 %v3124, 2147483648
      %v3127 = vxor.u32 %v3125, 2147483648
      %v3128 = vmul.f32 %v3126, 1.442695
      %v3129 = vpow.pop %v3128
      %v3130 = vmul.f32 %v3127, 1.442695
      %v3131 = vpow.pop %v3130
      %v3132 = vadd.f32 %v3129, 1.0
      %v3133 = vadd.f32 %v3131, 1.0
      %v3134 = vrcp.pop %v3132
      %v3135 = vmul.f32 1.0, %v3134
      %v3136 = vrcp.pop %v3133
      %v3137 = vmul.f32 1.0, %v3136
      %v3138 = vadd.f32 %v2967, %v3041
      %v3139 = vadd.f32 %v2970, %v3047
      %v3140 = vxor.u32 %v3138, 2147483648
      %v3141 = vxor.u32 %v3139, 2147483648
      %v3142 = vmul.f32 %v3140, 1.442695
      %v3143 = vpow.pop %v3142
      %v3144 = vmul.f32 %v3141, 1.442695
      %v3145 = vpow.pop %v3144
      %v3146 = vadd.f32 %v3143, 1.0
      %v3147 = vadd.f32 %v3145, 1.0
      %v3148 = vrcp.pop %v3146
      %v3149 = vmul.f32 1.0, %v3148
      %v3150 = vrcp.pop %v3147
      %v3151 = vmul.f32 1.0, %v3150
      %v3152 = vadd.f32 %v3116, %v459
      %v3153 = vadd.f32 %v3121, %v459
      %v3154 = vmul.f32 %v3135, %v3152
      %v3155 = vmul.f32 %v3137, %v3153
      %v3156 = vadd.f32 %v2968, %v3154
      %v3157 = vadd.f32 %v2971, %v3155
      %v3158 = vtanh.pop %v3156
      %v3159 = vtanh.pop %v3157
      %v3160 = vsub.f32 1.0, %v3149
      %v3161 = vsub.f32 1.0, %v3151
      %v3162 = vmul.f32 %v3160, %v3158
      %v3163 = vmul.f32 %v3161, %v3159
      %v3164 = vmul.f32 %v3149, %v2959
      %v3165 = vmul.f32 %v3151, %v2960
      %v3166 = vadd.f32 %v3162, %v3164
      %v3167 = vadd.f32 %v3163, %v3165
      %s3168 = scalar_lea.vmem %s199, 336
      %v3169 = vld [vmem:[%s3168] sm:$0xff]
      %v3170 = vld [vmem:[%s3168 + $0x8] sm:$0xf]
      %v3171 = vld [vmem:[%s3168 + $0xc] sm:$0xff]
      %v3172 = vld [vmem:[%s3168 + $0x14] sm:$0xf]
      %v3173 = vunpack.c.l.bf16 %v3169
      %v3174 = vunpack.c.h.bf16 %v3169
      %v3175 = vunpack.c.l.bf16 %v3170
      %v3176 = vunpack.c.l.bf16 %v3171
      %v3177 = vunpack.c.h.bf16 %v3171
      %v3178 = vunpack.c.l.bf16 %v3172
      %3179 = vmatprep.subr.mxu0 %v227
      %3180 = vmatpush1.msra.mxu0 %v226
      %3181 = vmatprep.subr.mxu0 %v230
      %3182 = vmatpush1.msra.mxu0 %v229
      %3183 = vmatprep.subr.mxu0 %v233
      %3184 = vmatpush1.msra.mxu0 %v232
      %3185 = vmatprep.subr.mxu0 %v236
      %3186 = vmatpush1.msra.mxu0 %v235
      %3187 = vmatprep.subr.mxu0 %v239
      %3188 = vmatpush1.msra.mxu0 %v238
      %3189 = vmatprep.subr.mxu0 %v242
      %3190 = vmatpush1.msra.mxu0 %v241
      %3191 = vmatprep.subr.mxu0 %v245
      %3192 = vmatpush1.msra.mxu0 %v244
      %3193 = vmatprep.subr.mxu0 %v248
      %3194 = vmatpush1.msra.mxu0 %v247
      %3195 = vmatprep.subr.mxu0 %v251
      %3196 = vmatpush1.msra.mxu0 %v250
      %3197 = vmatprep.subr.mxu0 %v254
      %3198 = vmatpush1.msra.mxu0 %v253
      %3199 = vmatprep.subr.mxu0 %v257
      %3200 = vmatpush1.msra.mxu0 %v256
      %3201 = vmatprep.subr.mxu0 %v260
      %3202 = vmatpush1.msra.mxu0 %v259
      %3203 = vmatprep.subr.mxu0 %v263
      %3204 = vmatpush1.msra.mxu0 %v262
      %3205 = vmatprep.subr.mxu0 %v266
      %3206 = vmatpush1.msra.mxu0 %v265
      %3207 = vmatprep.subr.mxu0 %v269
      %3208 = vmatpush1.msra.mxu0 %v268
      %3209 = vmatprep.subr.mxu0 %v272
      %3210 = vmatpush1.msra.mxu0 %v271
      %3211 = vmatprep.subr.mxu0 0.0
      %3212 = vmatpush1.msra.mxu0 0.0
      %3213 = vmatprep.subr.mxu0 0.0
      %3214 = vmatpush1.msra.mxu0 0.0
      %3215 = vmatprep.subr.mxu0 0.0
      %3216 = vmatpush1.msra.mxu0 0.0
      %3217 = vmatprep.subr.mxu0 0.0
      %3218 = vmatpush1.msra.mxu0 0.0
      %3219 = vmatprep.subr.mxu0 0.0
      %3220 = vmatpush1.msra.mxu0 0.0
      %3221 = vmatprep.subr.mxu0 0.0
      %3222 = vmatpush1.msra.mxu0 0.0
      %3223 = vmatprep.subr.mxu0 0.0
      %3224 = vmatpush1.msra.mxu0 0.0
      %3225 = vmatprep.subr.mxu0 0.0
      %3226 = vmatpush1.msra.mxu0 0.0
      %3227 = vmatprep.subr.mxu0 0.0
      %3228 = vmatpush1.msra.mxu0 0.0
      %3229 = vmatprep.subr.mxu0 0.0
      %3230 = vmatpush1.msra.mxu0 0.0
      %3231 = vmatprep.subr.mxu0 0.0
      %3232 = vmatpush1.msra.mxu0 0.0
      %3233 = vmatprep.subr.mxu0 0.0
      %3234 = vmatpush1.msra.mxu0 0.0
      %3235 = vmatprep.subr.mxu0 0.0
      %3236 = vmatpush1.msra.mxu0 0.0
      %3237 = vmatprep.subr.mxu0 0.0
      %3238 = vmatpush1.msra.mxu0 0.0
      %3239 = vmatprep.subr.mxu0 0.0
      %3240 = vmatpush1.msra.mxu0 0.0
      %3241 = vmatprep.subr.mxu0 0.0
      %3242 = vmatpush1.msra.mxu0 0.0
      %3243 = vmatprep.mubr.f32.mxu0 0.0
      %3244 = vmatmul.mubr.f32.gmra.mrb[0].mxu0 %v3166
      %v3245 = vpop.f32.mrb[0].mxu0
      %v3246 = vadd.f32 0.0, %v3245
      %v3247 = vpop.f32.mrb[0].mxu0
      %v3248 = vadd.f32 0.0, %v3247
      %3249 = vmatprep.mubr.f32.mxu0 0.0
      %3250 = vmatmul.mubr.f32.gmra.mrb[0].mxu0 %v3167
      %v3251 = vpop.f32.mrb[0].mxu0
      %v3252 = vadd.f32 0.0, %v3251
      %v3253 = vpop.f32.mrb[0].mxu0
      %v3254 = vadd.f32 0.0, %v3253
      %3255 = vdwg.mxu0
      %3256 = vmatprep.subr.mxu0 0.0
      %3257 = vmatpush1.msra.mxu0 %v228
      %3258 = vmatprep.subr.mxu0 0.0
      %3259 = vmatpush1.msra.mxu0 %v231
      %3260 = vmatprep.subr.mxu0 0.0
      %3261 = vmatpush1.msra.mxu0 %v234
      %3262 = vmatprep.subr.mxu0 0.0
      %3263 = vmatpush1.msra.mxu0 %v237
      %3264 = vmatprep.subr.mxu0 0.0
      %3265 = vmatpush1.msra.mxu0 %v240
      %3266 = vmatprep.subr.mxu0 0.0
      %3267 = vmatpush1.msra.mxu0 %v243
      %3268 = vmatprep.subr.mxu0 0.0
      %3269 = vmatpush1.msra.mxu0 %v246
      %3270 = vmatprep.subr.mxu0 0.0
      %3271 = vmatpush1.msra.mxu0 %v249
      %3272 = vmatprep.subr.mxu0 0.0
      %3273 = vmatpush1.msra.mxu0 %v252
      %3274 = vmatprep.subr.mxu0 0.0
      %3275 = vmatpush1.msra.mxu0 %v255
      %3276 = vmatprep.subr.mxu0 0.0
      %3277 = vmatpush1.msra.mxu0 %v258
      %3278 = vmatprep.subr.mxu0 0.0
      %3279 = vmatpush1.msra.mxu0 %v261
      %3280 = vmatprep.subr.mxu0 0.0
      %3281 = vmatpush1.msra.mxu0 %v264
      %3282 = vmatprep.subr.mxu0 0.0
      %3283 = vmatpush1.msra.mxu0 %v267
      %3284 = vmatprep.subr.mxu0 0.0
      %3285 = vmatpush1.msra.mxu0 %v270
      %3286 = vmatprep.subr.mxu0 0.0
      %3287 = vmatpush1.msra.mxu0 %v273
      %3288 = vmatprep.subr.mxu0 0.0
      %3289 = vmatpush1.msra.mxu0 0.0
      %3290 = vmatprep.subr.mxu0 0.0
      %3291 = vmatpush1.msra.mxu0 0.0
      %3292 = vmatprep.subr.mxu0 0.0
      %3293 = vmatpush1.msra.mxu0 0.0
      %3294 = vmatprep.subr.mxu0 0.0
      %3295 = vmatpush1.msra.mxu0 0.0
      %3296 = vmatprep.subr.mxu0 0.0
      %3297 = vmatpush1.msra.mxu0 0.0
      %3298 = vmatprep.subr.mxu0 0.0
      %3299 = vmatpush1.msra.mxu0 0.0
      %3300 = vmatprep.subr.mxu0 0.0
      %3301 = vmatpush1.msra.mxu0 0.0
      %3302 = vmatprep.subr.mxu0 0.0
      %3303 = vmatpush1.msra.mxu0 0.0
      %3304 = vmatprep.subr.mxu0 0.0
      %3305 = vmatpush1.msra.mxu0 0.0
      %3306 = vmatprep.subr.mxu0 0.0
      %3307 = vmatpush1.msra.mxu0 0.0
      %3308 = vmatprep.subr.mxu0 0.0
      %3309 = vmatpush1.msra.mxu0 0.0
      %3310 = vmatprep.subr.mxu0 0.0
      %3311 = vmatpush1.msra.mxu0 0.0
      %3312 = vmatprep.subr.mxu0 0.0
      %3313 = vmatpush1.msra.mxu0 0.0
      %3314 = vmatprep.subr.mxu0 0.0
      %3315 = vmatpush1.msra.mxu0 0.0
      %3316 = vmatprep.subr.mxu0 0.0
      %3317 = vmatpush1.msra.mxu0 0.0
      %3318 = vmatprep.subr.mxu0 0.0
      %3319 = vmatpush1.msra.mxu0 0.0
      %3320 = vmatprep.mubr.f32.mxu0 0.0
      %3321 = vmatmul.mubr.f32.gmra.mrb[0].mxu0 %v3166
      %v3322 = vpop.f32.mrb[0].mxu0
      %v3323 = vadd.f32 0.0, %v3322
      %v3324 = vpop.f32.mrb[0].mxu0
      %3325 = vmatprep.mubr.f32.mxu0 0.0
      %3326 = vmatmul.mubr.f32.gmra.mrb[0].mxu0 %v3167
      %v3327 = vpop.f32.mrb[0].mxu0
      %v3328 = vadd.f32 0.0, %v3327
      %v3329 = vpop.f32.mrb[0].mxu0
      %3330 = vdwg.mxu0
      %v3331 = vadd.f32 %v3173, %v3246
      %v3332 = vadd.f32 %v3176, %v3252
      %v3333 = vxor.u32 %v3331, 2147483648
      %v3334 = vxor.u32 %v3332, 2147483648
      %v3335 = vmul.f32 %v3333, 1.442695
      %v3336 = vpow.pop %v3335
      %v3337 = vmul.f32 %v3334, 1.442695
      %v3338 = vpow.pop %v3337
      %v3339 = vadd.f32 %v3336, 1.0
      %v3340 = vadd.f32 %v3338, 1.0
      %v3341 = vrcp.pop %v3339
      %v3342 = vmul.f32 1.0, %v3341
      %v3343 = vrcp.pop %v3340
      %v3344 = vmul.f32 1.0, %v3343
      %v3345 = vadd.f32 %v3174, %v3248
      %v3346 = vadd.f32 %v3177, %v3254
      %v3347 = vxor.u32 %v3345, 2147483648
      %v3348 = vxor.u32 %v3346, 2147483648
      %v3349 = vmul.f32 %v3347, 1.442695
      %v3350 = vpow.pop %v3349
      %v3351 = vmul.f32 %v3348, 1.442695
      %v3352 = vpow.pop %v3351
      %v3353 = vadd.f32 %v3350, 1.0
      %v3354 = vadd.f32 %v3352, 1.0
      %v3355 = vrcp.pop %v3353
      %v3356 = vmul.f32 1.0, %v3355
      %v3357 = vrcp.pop %v3354
      %v3358 = vmul.f32 1.0, %v3357
      %v3359 = vadd.f32 %v3323, %v459
      %v3360 = vadd.f32 %v3328, %v459
      %v3361 = vmul.f32 %v3342, %v3359
      %v3362 = vmul.f32 %v3344, %v3360
      %v3363 = vadd.f32 %v3175, %v3361
      %v3364 = vadd.f32 %v3178, %v3362
      %v3365 = vtanh.pop %v3363
      %v3366 = vtanh.pop %v3364
      %v3367 = vsub.f32 1.0, %v3356
      %v3368 = vsub.f32 1.0, %v3358
      %v3369 = vmul.f32 %v3367, %v3365
      %v3370 = vmul.f32 %v3368, %v3366
      %v3371 = vmul.f32 %v3356, %v3166
      %v3372 = vmul.f32 %v3358, %v3167
      %v3373 = vadd.f32 %v3369, %v3371
      %v3374 = vadd.f32 %v3370, %v3372
      %s3375 = scalar_lea.vmem %s199, 360
      %v3376 = vld [vmem:[%s3375] sm:$0xff]
      %v3377 = vld [vmem:[%s3375 + $0x8] sm:$0xf]
      %v3378 = vld [vmem:[%s3375 + $0xc] sm:$0xff]
      %v3379 = vld [vmem:[%s3375 + $0x14] sm:$0xf]
      %v3380 = vunpack.c.l.bf16 %v3376
      %v3381 = vunpack.c.h.bf16 %v3376
      %v3382 = vunpack.c.l.bf16 %v3377
      %v3383 = vunpack.c.l.bf16 %v3378
      %v3384 = vunpack.c.h.bf16 %v3378
      %v3385 = vunpack.c.l.bf16 %v3379
      %3386 = vmatprep.subr.mxu0 %v227
      %3387 = vmatpush1.msra.mxu0 %v226
      %3388 = vmatprep.subr.mxu0 %v230
      %3389 = vmatpush1.msra.mxu0 %v229
      %3390 = vmatprep.subr.mxu0 %v233
      %3391 = vmatpush1.msra.mxu0 %v232
      %3392 = vmatprep.subr.mxu0 %v236
      %3393 = vmatpush1.msra.mxu0 %v235
      %3394 = vmatprep.subr.mxu0 %v239
      %3395 = vmatpush1.msra.mxu0 %v238
      %3396 = vmatprep.subr.mxu0 %v242
      %3397 = vmatpush1.msra.mxu0 %v241
      %3398 = vmatprep.subr.mxu0 %v245
      %3399 = vmatpush1.msra.mxu0 %v244
      %3400 = vmatprep.subr.mxu0 %v248
      %3401 = vmatpush1.msra.mxu0 %v247
      %3402 = vmatprep.subr.mxu0 %v251
      %3403 = vmatpush1.msra.mxu0 %v250
      %3404 = vmatprep.subr.mxu0 %v254
      %3405 = vmatpush1.msra.mxu0 %v253
      %3406 = vmatprep.subr.mxu0 %v257
      %3407 = vmatpush1.msra.mxu0 %v256
      %3408 = vmatprep.subr.mxu0 %v260
      %3409 = vmatpush1.msra.mxu0 %v259
      %3410 = vmatprep.subr.mxu0 %v263
      %3411 = vmatpush1.msra.mxu0 %v262
      %3412 = vmatprep.subr.mxu0 %v266
      %3413 = vmatpush1.msra.mxu0 %v265
      %3414 = vmatprep.subr.mxu0 %v269
      %3415 = vmatpush1.msra.mxu0 %v268
      %3416 = vmatprep.subr.mxu0 %v272
      %3417 = vmatpush1.msra.mxu0 %v271
      %3418 = vmatprep.subr.mxu0 0.0
      %3419 = vmatpush1.msra.mxu0 0.0
      %3420 = vmatprep.subr.mxu0 0.0
      %3421 = vmatpush1.msra.mxu0 0.0
      %3422 = vmatprep.subr.mxu0 0.0
      %3423 = vmatpush1.msra.mxu0 0.0
      %3424 = vmatprep.subr.mxu0 0.0
      %3425 = vmatpush1.msra.mxu0 0.0
      %3426 = vmatprep.subr.mxu0 0.0
      %3427 = vmatpush1.msra.mxu0 0.0
      %3428 = vmatprep.subr.mxu0 0.0
      %3429 = vmatpush1.msra.mxu0 0.0
      %3430 = vmatprep.subr.mxu0 0.0
      %3431 = vmatpush1.msra.mxu0 0.0
      %3432 = vmatprep.subr.mxu0 0.0
      %3433 = vmatpush1.msra.mxu0 0.0
      %3434 = vmatprep.subr.mxu0 0.0
      %3435 = vmatpush1.msra.mxu0 0.0
      %3436 = vmatprep.subr.mxu0 0.0
      %3437 = vmatpush1.msra.mxu0 0.0
      %3438 = vmatprep.subr.mxu0 0.0
      %3439 = vmatpush1.msra.mxu0 0.0
      %3440 = vmatprep.subr.mxu0 0.0
      %3441 = vmatpush1.msra.mxu0 0.0
      %3442 = vmatprep.subr.mxu0 0.0
      %3443 = vmatpush1.msra.mxu0 0.0
      %3444 = vmatprep.subr.mxu0 0.0
      %3445 = vmatpush1.msra.mxu0 0.0
      %3446 = vmatprep.subr.mxu0 0.0
      %3447 = vmatpush1.msra.mxu0 0.0
      %3448 = vmatprep.subr.mxu0 0.0
      %3449 = vmatpush1.msra.mxu0 0.0
      %3450 = vmatprep.mubr.f32.mxu0 0.0
      %3451 = vmatmul.mubr.f32.gmra.mrb[0].mxu0 %v3373
      %v3452 = vpop.f32.mrb[0].mxu0
      %v3453 = vadd.f32 0.0, %v3452
      %v3454 = vpop.f32.mrb[0].mxu0
      %v3455 = vadd.f32 0.0, %v3454
      %3456 = vmatprep.mubr.f32.mxu0 0.0
      %3457 = vmatmul.mubr.f32.gmra.mrb[0].mxu0 %v3374
      %v3458 = vpop.f32.mrb[0].mxu0
      %v3459 = vadd.f32 0.0, %v3458
      %v3460 = vpop.f32.mrb[0].mxu0
      %v3461 = vadd.f32 0.0, %v3460
      %3462 = vdwg.mxu0
      %3463 = vmatprep.subr.mxu0 0.0
      %3464 = vmatpush1.msra.mxu0 %v228
      %3465 = vmatprep.subr.mxu0 0.0
      %3466 = vmatpush1.msra.mxu0 %v231
      %3467 = vmatprep.subr.mxu0 0.0
      %3468 = vmatpush1.msra.mxu0 %v234
      %3469 = vmatprep.subr.mxu0 0.0
      %3470 = vmatpush1.msra.mxu0 %v237
      %3471 = vmatprep.subr.mxu0 0.0
      %3472 = vmatpush1.msra.mxu0 %v240
      %3473 = vmatprep.subr.mxu0 0.0
      %3474 = vmatpush1.msra.mxu0 %v243
      %3475 = vmatprep.subr.mxu0 0.0
      %3476 = vmatpush1.msra.mxu0 %v246
      %3477 = vmatprep.subr.mxu0 0.0
      %3478 = vmatpush1.msra.mxu0 %v249
      %3479 = vmatprep.subr.mxu0 0.0
      %3480 = vmatpush1.msra.mxu0 %v252
      %3481 = vmatprep.subr.mxu0 0.0
      %3482 = vmatpush1.msra.mxu0 %v255
      %3483 = vmatprep.subr.mxu0 0.0
      %3484 = vmatpush1.msra.mxu0 %v258
      %3485 = vmatprep.subr.mxu0 0.0
      %3486 = vmatpush1.msra.mxu0 %v261
      %3487 = vmatprep.subr.mxu0 0.0
      %3488 = vmatpush1.msra.mxu0 %v264
      %3489 = vmatprep.subr.mxu0 0.0
      %3490 = vmatpush1.msra.mxu0 %v267
      %3491 = vmatprep.subr.mxu0 0.0
      %3492 = vmatpush1.msra.mxu0 %v270
      %3493 = vmatprep.subr.mxu0 0.0
      %3494 = vmatpush1.msra.mxu0 %v273
      %3495 = vmatprep.subr.mxu0 0.0
      %3496 = vmatpush1.msra.mxu0 0.0
      %3497 = vmatprep.subr.mxu0 0.0
      %3498 = vmatpush1.msra.mxu0 0.0
      %3499 = vmatprep.subr.mxu0 0.0
      %3500 = vmatpush1.msra.mxu0 0.0
      %3501 = vmatprep.subr.mxu0 0.0
      %3502 = vmatpush1.msra.mxu0 0.0
      %3503 = vmatprep.subr.mxu0 0.0
      %3504 = vmatpush1.msra.mxu0 0.0
      %3505 = vmatprep.subr.mxu0 0.0
      %3506 = vmatpush1.msra.mxu0 0.0
      %3507 = vmatprep.subr.mxu0 0.0
      %3508 = vmatpush1.msra.mxu0 0.0
      %3509 = vmatprep.subr.mxu0 0.0
      %3510 = vmatpush1.msra.mxu0 0.0
      %3511 = vmatprep.subr.mxu0 0.0
      %3512 = vmatpush1.msra.mxu0 0.0
      %3513 = vmatprep.subr.mxu0 0.0
      %3514 = vmatpush1.msra.mxu0 0.0
      %3515 = vmatprep.subr.mxu0 0.0
      %3516 = vmatpush1.msra.mxu0 0.0
      %3517 = vmatprep.subr.mxu0 0.0
      %3518 = vmatpush1.msra.mxu0 0.0
      %3519 = vmatprep.subr.mxu0 0.0
      %3520 = vmatpush1.msra.mxu0 0.0
      %3521 = vmatprep.subr.mxu0 0.0
      %3522 = vmatpush1.msra.mxu0 0.0
      %3523 = vmatprep.subr.mxu0 0.0
      %3524 = vmatpush1.msra.mxu0 0.0
      %3525 = vmatprep.subr.mxu0 0.0
      %3526 = vmatpush1.msra.mxu0 0.0
      %3527 = vmatprep.mubr.f32.mxu0 0.0
      %3528 = vmatmul.mubr.f32.gmra.mrb[0].mxu0 %v3373
      %v3529 = vpop.f32.mrb[0].mxu0
      %v3530 = vadd.f32 0.0, %v3529
      %v3531 = vpop.f32.mrb[0].mxu0
      %3532 = vmatprep.mubr.f32.mxu0 0.0
      %3533 = vmatmul.mubr.f32.gmra.mrb[0].mxu0 %v3374
      %v3534 = vpop.f32.mrb[0].mxu0
      %v3535 = vadd.f32 0.0, %v3534
      %v3536 = vpop.f32.mrb[0].mxu0
      %3537 = vdwg.mxu0
      %v3538 = vadd.f32 %v3380, %v3453
      %v3539 = vadd.f32 %v3383, %v3459
      %v3540 = vxor.u32 %v3538, 2147483648
      %v3541 = vxor.u32 %v3539, 2147483648
      %v3542 = vmul.f32 %v3540, 1.442695
      %v3543 = vpow.pop %v3542
      %v3544 = vmul.f32 %v3541, 1.442695
      %v3545 = vpow.pop %v3544
      %v3546 = vadd.f32 %v3543, 1.0
      %v3547 = vadd.f32 %v3545, 1.0
      %v3548 = vrcp.pop %v3546
      %v3549 = vmul.f32 1.0, %v3548
      %v3550 = vrcp.pop %v3547
      %v3551 = vmul.f32 1.0, %v3550
      %v3552 = vadd.f32 %v3381, %v3455
      %v3553 = vadd.f32 %v3384, %v3461
      %v3554 = vxor.u32 %v3552, 2147483648
      %v3555 = vxor.u32 %v3553, 2147483648
      %v3556 = vmul.f32 %v3554, 1.442695
      %v3557 = vpow.pop %v3556
      %v3558 = vmul.f32 %v3555, 1.442695
      %v3559 = vpow.pop %v3558
      %v3560 = vadd.f32 %v3557, 1.0
      %v3561 = vadd.f32 %v3559, 1.0
      %v3562 = vrcp.pop %v3560
      %v3563 = vmul.f32 1.0, %v3562
      %v3564 = vrcp.pop %v3561
      %v3565 = vmul.f32 1.0, %v3564
      %v3566 = vadd.f32 %v3530, %v459
      %v3567 = vadd.f32 %v3535, %v459
      %v3568 = vmul.f32 %v3549, %v3566
      %v3569 = vmul.f32 %v3551, %v3567
      %v3570 = vadd.f32 %v3382, %v3568
      %v3571 = vadd.f32 %v3385, %v3569
      %v3572 = vtanh.pop %v3570
      %v3573 = vtanh.pop %v3571
      %v3574 = vsub.f32 1.0, %v3563
      %v3575 = vsub.f32 1.0, %v3565
      %v3576 = vmul.f32 %v3574, %v3572
      %v3577 = vmul.f32 %v3575, %v3573
      %v3578 = vmul.f32 %v3563, %v3373
      %v3579 = vmul.f32 %v3565, %v3374
      %v3580 = vadd.f32 %v3576, %v3578
      %v3581 = vadd.f32 %v3577, %v3579
      %3582 = vst [vmem:[#allocation2] sm:$0xff] %v3580
      %3583 = vst [vmem:[#allocation2 + $0x8] sm:$0xff] %v3581
      %p3584 = scmp.eq.s32.totalorder %s19, 1
      // Predicated region
      $region37: #{stacked_gru_forward.1} parent=31 // pred_check
        %p3585 = pneg %p3584
      $region38: #{stacked_gru_forward.1} parent=31 // pred_check_branch
        %3587 = sbr.rel (%p3585) target = $region40
      $region39: #{stacked_gru_forward.1} parent=31 // pred_region
        %3588 = vst [vmem:[%s206] sm:$0xff] %v3580
        %3589 = vst [vmem:[%s206 + $0x8] sm:$0xff] %v3581
      $region40: #{stacked_gru_forward.1} parent=31 // pred_fallthru
        _
      %s3590 = smul.u32 2, %s18
      %p3591 = scmp.lt.s32.totalorder %s3590, 1
      %s3592 = scalar_select %p3591, %s3590, 1
      %s3593 = smul.addr %s3592, 8
      %s3594 = scalar_lea.vmem %s3, %s3593
      // Predicated region
      $region41: #{stacked_gru_forward.1} parent=31 // pred_check
        %p3595 = pneg %p114
      $region42: #{stacked_gru_forward.1} parent=31 // pred_check_branch
        %3597 = sbr.rel (%p3595) target = $region44
      $region43: #{stacked_gru_forward.1} parent=31 // pred_region
        %s3598 = smul.u32 2, %s18
      $region44: #{stacked_gru_forward.1} parent=31 // pred_fallthru
        _
      // Predicated region
      $region45: #{stacked_gru_forward.1} parent=31 // pred_check
        %p3599 = pneg %p114
      $region46: #{stacked_gru_forward.1} parent=31 // pred_check_branch
        %3601 = sbr.rel (%p3599) target = $region48
      $region47: #{stacked_gru_forward.1} parent=31 // pred_region
        %s3602 = smul.u32 2, %s18
        %p3603 = scmp.lt.s32.totalorder %s3602, 1
        %s3604 = scalar_select %p3603, %s3602, 1
        %s3605 = smul.addr %s3604, 8
        %s3606 = scalar_lea.vmem %s3, %s3605
      $region48: #{stacked_gru_forward.1} parent=31 // pred_fallthru
        _
    $region32: #{stacked_gru_forward.1} parent=5 // pred_fallthru
      _
    %p3607 = scmp.le.s32.totalorder 2, %s9
    // Predicated region
    $region49: #{stacked_gru_forward.1} parent=5 // pred_check
      %p3608 = pneg %p3607
    $region50: #{stacked_gru_forward.1} parent=5 // pred_check_branch
      %3610 = sbr.rel (%p3608) target = $region52
    $region51: #{stacked_gru_forward.1} parent=5 // pred_region
      %s3611 = ssub.s32 %s9, 2
    $region52: #{stacked_gru_forward.1} parent=5 // pred_fallthru
      _
  $region6: #{stacked_gru_forward.1} parent=0 // loop_footer
    %s13 = sadd.s32 1, %s9
  $region7: #{stacked_gru_forward.1} parent=0 // loop_footer_branch
    %8 = sbr.rel target = $region3
  $region8: #{stacked_gru_forward.1} parent=0 // loop_exit
    _

</llo_original>
